<compile_context>
chip_gen: v6e
topology: v6e:2x2x1
jax: 0.10.0
libtpu: 0.0.40
codegen_flags: <defaults>
</compile_context>

<pallas_src>
import functools

import jax
import jax.numpy as jnp
from jax import lax
from jax.experimental import pallas as pl
from jax.experimental.pallas import tpu as pltpu


def _round_up(x, m):
    return (x + m - 1) // m * m


def _block_spec(shape, index_map, buffers=None):
    """BlockSpec with an optional explicit buffer count via pipeline_mode."""
    if buffers is None or not hasattr(pl, "Buffered"):
        return pl.BlockSpec(shape, index_map)
    try:
        return pl.BlockSpec(shape, index_map, pipeline_mode=pl.Buffered(buffers))
    except TypeError:  # BlockSpec without pipeline_mode kwarg
        return pl.BlockSpec(shape, index_map)


def _lstm_recurrence_kernel(xw_ref, whh_ref, h0_ref, c0_ref,
                            hseq_ref, hn_ref, cn_ref,
                            h_scr, c_scr,
                            *, hidden_pad, t_block, seq_len, mask_tail):
    """One grid step = one (batch block, time block) tile of the recurrence.

    Grid is (n_batch_blocks, n_time_blocks); time is the inner (carry) axis.

    xw_ref  : (t_block, Bb, 4*Hp)  precomputed x@W_ih^T + b_ih + b_hh (gate-padded)
    whh_ref : (Hp, 4*Hp)           recurrent weights (transposed, gate-padded)
    h0/c0   : (Bb, Hp)             initial hidden / cell state for this batch block
    hseq_ref: (t_block, Bb, Hp)    per-timestep hidden output (lane-dense store)
    hn/cn   : (Bb, Hp)             final state (written on last time block)
    h_scr/c_scr : (Bb, Hp) f32     state carried across time blocks
    """
    tb = pl.program_id(1)
    Hp = hidden_pad

    @pl.when(tb == 0)
    def _init():
        h_scr[...] = h0_ref[...]
        c_scr[...] = c0_ref[...]

    whh = whh_ref[...]          # loop-invariant: load once per grid step
    mm_dtype = whh.dtype
    t_base = tb * t_block

    def step(s, carry):
        h, c = carry
        gates = (jnp.dot(h.astype(mm_dtype), whh,
                         preferred_element_type=jnp.float32)
                 + xw_ref[s].astype(jnp.float32))             # (Bb, 4Hp) f32
        # PyTorch LSTM gate order: i, f, g, o.  Elementwise math stays f32
        # (sigmoid/tanh go to the EUP slot -> effectively free).
        i_g = jax.nn.sigmoid(gates[:, 0 * Hp:1 * Hp])
        f_g = jax.nn.sigmoid(gates[:, 1 * Hp:2 * Hp])
        g_g = jnp.tanh(gates[:, 2 * Hp:3 * Hp])
        o_g = jax.nn.sigmoid(gates[:, 3 * Hp:4 * Hp])
        c_new = f_g * c + i_g * g_g
        h_new = o_g * jnp.tanh(c_new)
        if mask_tail:
            # Last time block may contain padded steps: hold state there.
            valid = (t_base + s) < seq_len
            h_new = jnp.where(valid, h_new, h)
            c_new = jnp.where(valid, c_new, c)
        hseq_ref[s] = h_new.astype(hseq_ref.dtype)            # lane-dense store
        return h_new, c_new

    # Short fixed trip count, fully unrolled for LLO visibility while bounding
    # vreg live ranges (vs. a static Python for).
    h, c = lax.fori_loop(0, t_block, step, (h_scr[...], c_scr[...]),
                         unroll=True)

    h_scr[...] = h
    c_scr[...] = c

    @pl.when(tb == pl.num_programs(1) - 1)
    def _finalize():
        hn_ref[...] = h.astype(hn_ref.dtype)
        cn_ref[...] = c.astype(cn_ref.dtype)


def prednet_forward(x, params, hidden=None, *, t_block=16, b_block=None,
                    xw_buffers=2, matmul_dtype=jnp.float32):
    """x: (batch, seq, input_size)  [batch_first, like the PyTorch module].

    Returns (y, (h_n, c_n)) with
        y   : (batch, seq, output_size)
        h_n : (1, batch, hidden_size)
        c_n : (1, batch, hidden_size)

    matmul_dtype=jnp.bfloat16 is the recommended setting on v6e/v7x: it halves
    the streamed xw / hseq HBM traffic and the per-step W_hh VMEM feed while
    keeping carries, gate math and accumulation in float32.  The default stays
    float32 for exact parity with the PyTorch reference (bf16 quantizes the
    gate pre-activations).
    """
    B, T, I = x.shape
    w_ih, w_hh, b_ih, b_hh, w_fc, b_fc = (
        params["w_ih"], params["w_hh"], params["b_ih"],
        params["b_hh"], params["w_fc"], params["b_fc"])
    H = w_hh.shape[1]
    O = w_fc.shape[0]

    f32 = jnp.float32
    md = matmul_dtype
    # Padded sizes: 128 lanes on the hidden/gate axis (gate slices become whole
    # lane tiles), 8 sublanes on batch.  Padded weights/state are zero so the
    # padded columns stay exactly zero through the recurrence.
    Hp = _round_up(H, 128)
    Bp = _round_up(B, 8)
    t_block = max(1, min(int(t_block), T))
    Tp = _round_up(T, t_block)
    n_tblocks = Tp // t_block

    # Batch blocking: only worth splitting for very large batches (megacore /
    # v7x dual-TC); time remains the serial carry axis.
    if b_block is None:
        b_block = Bp if Bp < 512 else _round_up((Bp + 1) // 2, 8)
    Bb = min(_round_up(int(b_block), 8), _round_up(Bp, 8))
    Bp = _round_up(Bp, Bb)
    n_bblocks = Bp // Bb

    def pad_gate_rows(w):                                    # (4H, X) -> (4Hp, X)
        w4 = w.reshape(4, H, -1)
        return jnp.pad(w4, ((0, 0), (0, Hp - H), (0, 0))).reshape(4 * Hp, -1)

    w_ih_p = pad_gate_rows(w_ih.astype(f32))                 # (4Hp, I)
    w_hh_p = pad_gate_rows(w_hh.astype(f32))                 # (4Hp, H)
    w_hh_p = jnp.pad(w_hh_p, ((0, 0), (0, Hp - H)))          # (4Hp, Hp)
    bias_p = jnp.pad((b_ih + b_hh).astype(f32).reshape(4, H),
                     ((0, 0), (0, Hp - H))).reshape(4 * Hp)  # (4Hp,)

    # ---- Hoisted input projection: one big matmul, bias folded in.  Cast to
    # the streaming dtype BEFORE padding (no full f32 intermediate in HBM). ---
    xw = jnp.einsum('bti,gi->tbg', x.astype(md), w_ih_p.astype(md),
                    preferred_element_type=jnp.float32) + bias_p    # (T,B,4Hp) f32
    xw = jnp.pad(xw.astype(md), ((0, Tp - T), (0, Bp - B), (0, 0)))  # (Tp,Bp,4Hp)

    whh_t = jnp.transpose(w_hh_p).astype(md)                         # (Hp, 4Hp)

    if hidden is None:
        h0 = jnp.zeros((Bp, Hp), f32)
        c0 = jnp.zeros((Bp, Hp), f32)
    else:
        h0 = jnp.pad(hidden[0].reshape(B, H).astype(f32),
                     ((0, Bp - B), (0, Hp - H)))
        c0 = jnp.pad(hidden[1].reshape(B, H).astype(f32),
                     ((0, Bp - B), (0, Hp - H)))

    kernel = functools.partial(_lstm_recurrence_kernel,
                               hidden_pad=Hp, t_block=t_block, seq_len=T,
                               mask_tail=(Tp != T))

    md_bytes = jnp.dtype(md).itemsize

    def _vmem_limit(whh_bufs):
        need = (whh_bufs * Hp * 4 * Hp * md_bytes                    # W_hh^T
                + xw_buffers * t_block * Bb * 4 * Hp * md_bytes      # xw block
                + 2 * t_block * Bb * Hp * md_bytes                   # hseq block
                + 10 * Bb * Hp * 4)                                  # h0/c0/hn/cn/scratch
        return int(min(max(2 * need + (2 << 20), 32 << 20), 100 << 20))

    def _call(single_buffer):
        wb = 1 if single_buffer else None
        xb = None if xw_buffers == 2 else xw_buffers
        grid_spec = pltpu.PrefetchScalarGridSpec(
            num_scalar_prefetch=0,
            grid=(n_bblocks, n_tblocks),
            in_specs=[
                _block_spec((t_block, Bb, 4 * Hp),
                            lambda bb, tb: (tb, bb, 0), xb),          # xw
                _block_spec((Hp, 4 * Hp), lambda bb, tb: (0, 0), wb),  # W_hh^T
                _block_spec((Bb, Hp), lambda bb, tb: (bb, 0), wb),     # h0
                _block_spec((Bb, Hp), lambda bb, tb: (bb, 0), wb),     # c0
            ],
            out_specs=[
                pl.BlockSpec((t_block, Bb, Hp), lambda bb, tb: (tb, bb, 0)),  # h_seq
                pl.BlockSpec((Bb, Hp), lambda bb, tb: (bb, 0)),               # h_n
                pl.BlockSpec((Bb, Hp), lambda bb, tb: (bb, 0)),               # c_n
            ],
            scratch_shapes=[
                pltpu.VMEM((Bb, Hp), jnp.float32),                    # h carry
                pltpu.VMEM((Bb, Hp), jnp.float32),                    # c carry
            ],
        )
        return pl.pallas_call(
            kernel,
            out_shape=(
                jax.ShapeDtypeStruct((Tp, Bp, Hp), md),               # bf16 on bf16 path
                jax.ShapeDtypeStruct((Bp, Hp), f32),
                jax.ShapeDtypeStruct((Bp, Hp), f32),
            ),
            grid_spec=grid_spec,
            compiler_params=pltpu.CompilerParams(
                dimension_semantics=("parallel", "arbitrary"),
                vmem_limit_bytes=_vmem_limit(1 if single_buffer else 2)),
        )(xw, whh_t, h0, c0)

    try:
        hseq, h_n, c_n = _call(True)
        jax.block_until_ready(hseq)      # surface Mosaic errors here (eager)
    except Exception:                    # fall back to default double-buffering
        hseq, h_n, c_n = _call(False)

    # ---- Dropout (inference => identity) then hoisted, lane-dense FC.  Both
    # FC operands are in `matmul_dtype` so the bf16 MXU is actually used. -----
    h_seq = hseq[:T, :B, :H]                                          # (T, B, H)
    y = (jnp.einsum('tbh,oh->tbo', h_seq.astype(md), w_fc.astype(md),
                    preferred_element_type=jnp.float32)
         + b_fc.astype(f32))                                          # (T, B, O) f32
    y = jnp.transpose(y, (1, 0, 2))                                   # (B, T, O)

    h_n = h_n[:B, :H][None]
    c_n = c_n[:B, :H][None]
    return y, (h_n, c_n)


def init_prednet_params(key, input_size, hidden_size, output_size):
    """Deterministic init matching PyTorch shapes (uniform(-1/sqrt(H), 1/sqrt(H)))."""
    ks = jax.random.split(key, 6)
    k_lstm = 1.0 / jnp.sqrt(hidden_size)
    k_fc = 1.0 / jnp.sqrt(hidden_size)
    u = lambda k, shape, bound: jax.random.uniform(
        k, shape, jnp.float32, minval=-bound, maxval=bound)
    return {
        "w_ih": u(ks[0], (4 * hidden_size, input_size), k_lstm),
        "w_hh": u(ks[1], (4 * hidden_size, hidden_size), k_lstm),
        "b_ih": u(ks[2], (4 * hidden_size,), k_lstm),
        "b_hh": u(ks[3], (4 * hidden_size,), k_lstm),
        "w_fc": u(ks[4], (output_size, hidden_size), k_fc),
        "b_fc": u(ks[5], (output_size,), k_fc),
    }


def _prednet_ref(x, params, hidden=None):
    """Pure-JAX reference for sanity checking."""
    B, T, I = x.shape
    H = params["w_hh"].shape[1]
    w_ih, w_hh = params["w_ih"], params["w_hh"]
    b = params["b_ih"] + params["b_hh"]
    h = jnp.zeros((B, H), jnp.float32) if hidden is None else hidden[0][0]
    c = jnp.zeros((B, H), jnp.float32) if hidden is None else hidden[1][0]
    ys = []
    for t in range(T):
        g = x[:, t] @ w_ih.T + h @ w_hh.T + b
        i_g = jax.nn.sigmoid(g[:, 0 * H:1 * H])
        f_g = jax.nn.sigmoid(g[:, 1 * H:2 * H])
        g_g = jnp.tanh(g[:, 2 * H:3 * H])
        o_g = jax.nn.sigmoid(g[:, 3 * H:4 * H])
        c = f_g * c + i_g * g_g
        h = o_g * jnp.tanh(c)
        ys.append(h @ params["w_fc"].T + params["b_fc"])
    return jnp.stack(ys, axis=1), (h[None], c[None])


if __name__ == "__main__":
    B, T, I, H, O = 2, 8, 16, 32, 4
    key = jax.random.PRNGKey(0)
    k_x, k_p, k_h, k_c = jax.random.split(key, 4)
    x = jax.random.normal(k_x, (B, T, I), jnp.float32)
    params = init_prednet_params(k_p, I, H, O)

    # 1) Default path: f32, single time block -- exact against the reference.
    y, (h_n, c_n) = prednet_forward(x, params)
    jax.block_until_ready((y, h_n, c_n))
    y_ref, (h_ref, c_ref) = _prednet_ref(x, params)
    assert y.shape == (B, T, O) and h_n.shape == (1, B, H) and c_n.shape == (1, B, H)
    assert jnp.allclose(y, y_ref, atol=1e-5, rtol=1e-5)
    assert jnp.allclose(h_n, h_ref, atol=1e-5, rtol=1e-5)
    assert jnp.allclose(c_n, c_ref, atol=1e-5, rtol=1e-5)

    # 2) Multi-time-block grid with a ragged tail (exercises carry + time
    #    masking) and a caller-provided hidden state.
    hid = (jax.random.normal(k_h, (1, B, H), jnp.float32),
           jax.random.normal(k_c, (1, B, H), jnp.float32))
    y2, (h2, c2) = prednet_forward(x, params, hidden=hid, t_block=3)
    jax.block_until_ready((y2, h2, c2))
    y2_ref, (h2_ref, c2_ref) = _prednet_ref(x, params, hidden=hid)
    assert jnp.allclose(y2, y2_ref, atol=1e-5, rtol=1e-5)
    assert jnp.allclose(h2, h2_ref, atol=1e-5, rtol=1e-5)
    assert jnp.allclose(c2, c2_ref, atol=1e-5, rtol=1e-5)

    # 3) bf16 streaming/matmul path (v6e/v7x lever): runs clean, loose check.
    y3, (h3, c3) = prednet_forward(x, params, matmul_dtype=jnp.bfloat16)
    jax.block_until_ready((y3, h3, c3))
    assert bool(jnp.all(jnp.isfinite(y3)))
    assert float(jnp.max(jnp.abs(y3 - y_ref))) < 0.1

    # 4) Batch-block grid axis ("parallel" over batch, carry over time).
    B4 = 16
    x4 = jax.random.normal(jax.random.PRNGKey(1), (B4, T, I), jnp.float32)
    y4, (h4, c4) = prednet_forward(x4, params, t_block=4, b_block=8)
    jax.block_until_ready((y4, h4, c4))
    y4_ref, (h4_ref, c4_ref) = _prednet_ref(x4, params)
    assert jnp.allclose(y4, y4_ref, atol=1e-5, rtol=1e-5)
    assert jnp.allclose(h4, h4_ref, atol=1e-5, rtol=1e-5)
    assert jnp.allclose(c4, c4_ref, atol=1e-5, rtol=1e-5)

    print("KERNEL_OK")
</pallas_src>

<mosaic_0001>
module attributes {stable_mosaic.version = 11 : i64} {
  func.func @_lstm_recurrence_kernel(%arg0: i32, %arg1: i32, %arg2: memref<8x8x512xf32, #tpu.memory_space<vmem>>, %arg3: memref<128x512xf32, #tpu.memory_space<vmem>>, %arg4: memref<8x128xf32, #tpu.memory_space<vmem>>, %arg5: memref<8x128xf32, #tpu.memory_space<vmem>>, %arg6: memref<8x8x128xf32, #tpu.memory_space<vmem>>, %arg7: memref<8x128xf32, #tpu.memory_space<vmem>>, %arg8: memref<8x128xf32, #tpu.memory_space<vmem>>, %arg9: memref<8x128xf32, #tpu.memory_space<vmem>>, %arg10: memref<8x128xf32, #tpu.memory_space<vmem>>) attributes {dimension_semantics = [#tpu.dimension_semantics<parallel>, #tpu.dimension_semantics<arbitrary>], iteration_bounds = array<i64: 1, 1>, scalar_prefetch = 0 : i64, scratch_operands = 2 : i64, tpu.core_type = #tpu.core_type<tc>, window_params = [{transform_indices = @transform_0, window_bounds = array<i64: 8, 8, 512>}, {pipeline_mode = #tpu.pipeline_mode<synchronous>, transform_indices = @transform_1, window_bounds = array<i64: 128, 512>}, {pipeline_mode = #tpu.pipeline_mode<synchronous>, transform_indices = @transform_2, window_bounds = array<i64: 8, 128>}, {pipeline_mode = #tpu.pipeline_mode<synchronous>, transform_indices = @transform_3, window_bounds = array<i64: 8, 128>}, {transform_indices = @transform_4, window_bounds = array<i64: 8, 8, 128>}, {transform_indices = @transform_5, window_bounds = array<i64: 8, 128>}, {transform_indices = @transform_6, window_bounds = array<i64: 8, 128>}]} {
    %c0_i32 = arith.constant 0 : i32
    %0 = arith.cmpi eq, %arg1, %c0_i32 : i32
    %1 = arith.extui %0 : i1 to i32
    %c0_i32_0 = arith.constant 0 : i32
    %2 = arith.cmpi ne, %1, %c0_i32_0 : i32
    scf.if %2 {
      %c0_76 = arith.constant 0 : index
      %c0_77 = arith.constant 0 : index
      %283 = vector.load %arg4[%c0_76, %c0_77] : memref<8x128xf32, #tpu.memory_space<vmem>>, vector<8x128xf32>
      %c0_78 = arith.constant 0 : index
      %c0_79 = arith.constant 0 : index
      %284 = vector.load %arg9[%c0_78, %c0_79] : memref<8x128xf32, #tpu.memory_space<vmem>>, vector<8x128xf32>
      tpu.vector_store %arg9[%c0_78, %c0_79], %283 {strides = array<i32>} : memref<8x128xf32, #tpu.memory_space<vmem>>, vector<8x128xf32>,
      %c0_80 = arith.constant 0 : index
      %c0_81 = arith.constant 0 : index
      %285 = vector.load %arg5[%c0_80, %c0_81] : memref<8x128xf32, #tpu.memory_space<vmem>>, vector<8x128xf32>
      %c0_82 = arith.constant 0 : index
      %c0_83 = arith.constant 0 : index
      %286 = vector.load %arg10[%c0_82, %c0_83] : memref<8x128xf32, #tpu.memory_space<vmem>>, vector<8x128xf32>
      tpu.vector_store %arg10[%c0_82, %c0_83], %285 {strides = array<i32>} : memref<8x128xf32, #tpu.memory_space<vmem>>, vector<8x128xf32>,
    } else {
    }
    %c0 = arith.constant 0 : index
    %c0_1 = arith.constant 0 : index
    %3 = vector.load %arg3[%c0, %c0_1] : memref<128x512xf32, #tpu.memory_space<vmem>>, vector<128x512xf32>
    %c0_2 = arith.constant 0 : index
    %c0_3 = arith.constant 0 : index
    %4 = vector.load %arg9[%c0_2, %c0_3] : memref<8x128xf32, #tpu.memory_space<vmem>>, vector<8x128xf32>
    %c0_4 = arith.constant 0 : index
    %c0_5 = arith.constant 0 : index
    %5 = vector.load %arg10[%c0_4, %c0_5] : memref<8x128xf32, #tpu.memory_space<vmem>>, vector<8x128xf32>
    %c0_i32_6 = arith.constant 0 : i32
    %cst = arith.constant dense<0.000000e+00> : vector<8x512xf32>
    %6 = tpu.matmul %4, %3, %cst {dimension_numbers = #tpu.dot_dimension_numbers<[1], [0], [0], [1], [0, 0, 1, 1], [], []>} : vector<8x128xf32>, vector<128x512xf32>, vector<8x512xf32> -> vector<8x512xf32>
    %7 = arith.index_cast %c0_i32_6 : i32 to index
    %c0_7 = arith.constant 0 : index
    %c0_8 = arith.constant 0 : index
    %8 = vector.load %arg2[%7, %c0_7, %c0_8] : memref<8x8x512xf32, #tpu.memory_space<vmem>>, vector<1x8x512xf32>
    %9 = vector.shape_cast %8 : vector<1x8x512xf32> to vector<8x512xf32>
    %10 = arith.addf %6, %9 : vector<8x512xf32>
    %11 = vector.extract_strided_slice %10 {offsets = [0, 0], sizes = [8, 128], strides = [1, 1]} : vector<8x512xf32> to vector<8x128xf32>
    %12 = arith.negf %11 : vector<8x128xf32>
    %13 = math.exp %12 : vector<8x128xf32>
    %cst_9 = arith.constant 1.000000e+00 : f32
    %14 = vector.broadcast %cst_9 : f32 to vector<8x128xf32>
    %15 = arith.addf %14, %13 : vector<8x128xf32>
    %16 = arith.divf %14, %15 : vector<8x128xf32>
    %17 = vector.extract_strided_slice %10 {offsets = [0, 128], sizes = [8, 128], strides = [1, 1]} : vector<8x512xf32> to vector<8x128xf32>
    %18 = arith.negf %17 : vector<8x128xf32>
    %19 = math.exp %18 : vector<8x128xf32>
    %cst_10 = arith.constant 1.000000e+00 : f32
    %20 = vector.broadcast %cst_10 : f32 to vector<8x128xf32>
    %21 = arith.addf %20, %19 : vector<8x128xf32>
    %22 = arith.divf %20, %21 : vector<8x128xf32>
    %23 = vector.extract_strided_slice %10 {offsets = [0, 256], sizes = [8, 128], strides = [1, 1]} : vector<8x512xf32> to vector<8x128xf32>
    %24 = math.tanh %23 : vector<8x128xf32>
    %25 = vector.extract_strided_slice %10 {offsets = [0, 384], sizes = [8, 128], strides = [1, 1]} : vector<8x512xf32> to vector<8x128xf32>
    %26 = arith.negf %25 : vector<8x128xf32>
    %27 = math.exp %26 : vector<8x128xf32>
    %cst_11 = arith.constant 1.000000e+00 : f32
    %28 = vector.broadcast %cst_11 : f32 to vector<8x128xf32>
    %29 = arith.addf %28, %27 : vector<8x128xf32>
    %30 = arith.divf %28, %29 : vector<8x128xf32>
    %31 = arith.mulf %22, %5 : vector<8x128xf32>
    %32 = arith.mulf %16, %24 : vector<8x128xf32>
    %33 = arith.addf %31, %32 : vector<8x128xf32>
    %34 = math.tanh %33 : vector<8x128xf32>
    %35 = arith.mulf %30, %34 : vector<8x128xf32>
    %36 = arith.index_cast %c0_i32_6 : i32 to index
    %c0_12 = arith.constant 0 : index
    %c0_13 = arith.constant 0 : index
    %37 = vector.load %arg6[%36, %c0_12, %c0_13] : memref<8x8x128xf32, #tpu.memory_space<vmem>>, vector<1x8x128xf32>
    %38 = vector.shape_cast %37 : vector<1x8x128xf32> to vector<8x128xf32>
    %39 = vector.shape_cast %35 : vector<8x128xf32> to vector<1x8x128xf32>
    tpu.vector_store %arg6[%36, %c0_12, %c0_13], %39 {strides = array<i32>} : memref<8x8x128xf32, #tpu.memory_space<vmem>>, vector<1x8x128xf32>,
    %c1_i32 = arith.constant 1 : i32
    %cst_14 = arith.constant dense<0.000000e+00> : vector<8x512xf32>
    %40 = tpu.matmul %35, %3, %cst_14 {dimension_numbers = #tpu.dot_dimension_numbers<[1], [0], [0], [1], [0, 0, 1, 1], [], []>} : vector<8x128xf32>, vector<128x512xf32>, vector<8x512xf32> -> vector<8x512xf32>
    %41 = arith.index_cast %c1_i32 : i32 to index
    %c0_15 = arith.constant 0 : index
    %c0_16 = arith.constant 0 : index
    %42 = vector.load %arg2[%41, %c0_15, %c0_16] : memref<8x8x512xf32, #tpu.memory_space<vmem>>, vector<1x8x512xf32>
    %43 = vector.shape_cast %42 : vector<1x8x512xf32> to vector<8x512xf32>
    %44 = arith.addf %40, %43 : vector<8x512xf32>
    %45 = vector.extract_strided_slice %44 {offsets = [0, 0], sizes = [8, 128], strides = [1, 1]} : vector<8x512xf32> to vector<8x128xf32>
    %46 = arith.negf %45 : vector<8x128xf32>
    %47 = math.exp %46 : vector<8x128xf32>
    %cst_17 = arith.constant 1.000000e+00 : f32
    %48 = vector.broadcast %cst_17 : f32 to vector<8x128xf32>
    %49 = arith.addf %48, %47 : vector<8x128xf32>
    %50 = arith.divf %48, %49 : vector<8x128xf32>
    %51 = vector.extract_strided_slice %44 {offsets = [0, 128], sizes = [8, 128], strides = [1, 1]} : vector<8x512xf32> to vector<8x128xf32>
    %52 = arith.negf %51 : vector<8x128xf32>
    %53 = math.exp %52 : vector<8x128xf32>
    %cst_18 = arith.constant 1.000000e+00 : f32
    %54 = vector.broadcast %cst_18 : f32 to vector<8x128xf32>
    %55 = arith.addf %54, %53 : vector<8x128xf32>
    %56 = arith.divf %54, %55 : vector<8x128xf32>
    %57 = vector.extract_strided_slice %44 {offsets = [0, 256], sizes = [8, 128], strides = [1, 1]} : vector<8x512xf32> to vector<8x128xf32>
    %58 = math.tanh %57 : vector<8x128xf32>
    %59 = vector.extract_strided_slice %44 {offsets = [0, 384], sizes = [8, 128], strides = [1, 1]} : vector<8x512xf32> to vector<8x128xf32>
    %60 = arith.negf %59 : vector<8x128xf32>
    %61 = math.exp %60 : vector<8x128xf32>
    %cst_19 = arith.constant 1.000000e+00 : f32
    %62 = vector.broadcast %cst_19 : f32 to vector<8x128xf32>
    %63 = arith.addf %62, %61 : vector<8x128xf32>
    %64 = arith.divf %62, %63 : vector<8x128xf32>
    %65 = arith.mulf %56, %33 : vector<8x128xf32>
    %66 = arith.mulf %50, %58 : vector<8x128xf32>
    %67 = arith.addf %65, %66 : vector<8x128xf32>
    %68 = math.tanh %67 : vector<8x128xf32>
    %69 = arith.mulf %64, %68 : vector<8x128xf32>
    %70 = arith.index_cast %c1_i32 : i32 to index
    %c0_20 = arith.constant 0 : index
    %c0_21 = arith.constant 0 : index
    %71 = vector.load %arg6[%70, %c0_20, %c0_21] : memref<8x8x128xf32, #tpu.memory_space<vmem>>, vector<1x8x128xf32>
    %72 = vector.shape_cast %71 : vector<1x8x128xf32> to vector<8x128xf32>
    %73 = vector.shape_cast %69 : vector<8x128xf32> to vector<1x8x128xf32>
    tpu.vector_store %arg6[%70, %c0_20, %c0_21], %73 {strides = array<i32>} : memref<8x8x128xf32, #tpu.memory_space<vmem>>, vector<1x8x128xf32>,
    %c2_i32 = arith.constant 2 : i32
    %cst_22 = arith.constant dense<0.000000e+00> : vector<8x512xf32>
    %74 = tpu.matmul %69, %3, %cst_22 {dimension_numbers = #tpu.dot_dimension_numbers<[1], [0], [0], [1], [0, 0, 1, 1], [], []>} : vector<8x128xf32>, vector<128x512xf32>, vector<8x512xf32> -> vector<8x512xf32>
    %75 = arith.index_cast %c2_i32 : i32 to index
    %c0_23 = arith.constant 0 : index
    %c0_24 = arith.constant 0 : index
    %76 = vector.load %arg2[%75, %c0_23, %c0_24] : memref<8x8x512xf32, #tpu.memory_space<vmem>>, vector<1x8x512xf32>
    %77 = vector.shape_cast %76 : vector<1x8x512xf32> to vector<8x512xf32>
    %78 = arith.addf %74, %77 : vector<8x512xf32>
    %79 = vector.extract_strided_slice %78 {offsets = [0, 0], sizes = [8, 128], strides = [1, 1]} : vector<8x512xf32> to vector<8x128xf32>
    %80 = arith.negf %79 : vector<8x128xf32>
    %81 = math.exp %80 : vector<8x128xf32>
    %cst_25 = arith.constant 1.000000e+00 : f32
    %82 = vector.broadcast %cst_25 : f32 to vector<8x128xf32>
    %83 = arith.addf %82, %81 : vector<8x128xf32>
    %84 = arith.divf %82, %83 : vector<8x128xf32>
    %85 = vector.extract_strided_slice %78 {offsets = [0, 128], sizes = [8, 128], strides = [1, 1]} : vector<8x512xf32> to vector<8x128xf32>
    %86 = arith.negf %85 : vector<8x128xf32>
    %87 = math.exp %86 : vector<8x128xf32>
    %cst_26 = arith.constant 1.000000e+00 : f32
    %88 = vector.broadcast %cst_26 : f32 to vector<8x128xf32>
    %89 = arith.addf %88, %87 : vector<8x128xf32>
    %90 = arith.divf %88, %89 : vector<8x128xf32>
    %91 = vector.extract_strided_slice %78 {offsets = [0, 256], sizes = [8, 128], strides = [1, 1]} : vector<8x512xf32> to vector<8x128xf32>
    %92 = math.tanh %91 : vector<8x128xf32>
    %93 = vector.extract_strided_slice %78 {offsets = [0, 384], sizes = [8, 128], strides = [1, 1]} : vector<8x512xf32> to vector<8x128xf32>
    %94 = arith.negf %93 : vector<8x128xf32>
    %95 = math.exp %94 : vector<8x128xf32>
    %cst_27 = arith.constant 1.000000e+00 : f32
    %96 = vector.broadcast %cst_27 : f32 to vector<8x128xf32>
    %97 = arith.addf %96, %95 : vector<8x128xf32>
    %98 = arith.divf %96, %97 : vector<8x128xf32>
    %99 = arith.mulf %90, %67 : vector<8x128xf32>
    %100 = arith.mulf %84, %92 : vector<8x128xf32>
    %101 = arith.addf %99, %100 : vector<8x128xf32>
    %102 = math.tanh %101 : vector<8x128xf32>
    %103 = arith.mulf %98, %102 : vector<8x128xf32>
    %104 = arith.index_cast %c2_i32 : i32 to index
    %c0_28 = arith.constant 0 : index
    %c0_29 = arith.constant 0 : index
    %105 = vector.load %arg6[%104, %c0_28, %c0_29] : memref<8x8x128xf32, #tpu.memory_space<vmem>>, vector<1x8x128xf32>
    %106 = vector.shape_cast %105 : vector<1x8x128xf32> to vector<8x128xf32>
    %107 = vector.shape_cast %103 : vector<8x128xf32> to vector<1x8x128xf32>
    tpu.vector_store %arg6[%104, %c0_28, %c0_29], %107 {strides = array<i32>} : memref<8x8x128xf32, #tpu.memory_space<vmem>>, vector<1x8x128xf32>,
    %c3_i32 = arith.constant 3 : i32
    %cst_30 = arith.constant dense<0.000000e+00> : vector<8x512xf32>
    %108 = tpu.matmul %103, %3, %cst_30 {dimension_numbers = #tpu.dot_dimension_numbers<[1], [0], [0], [1], [0, 0, 1, 1], [], []>} : vector<8x128xf32>, vector<128x512xf32>, vector<8x512xf32> -> vector<8x512xf32>
    %109 = arith.index_cast %c3_i32 : i32 to index
    %c0_31 = arith.constant 0 : index
    %c0_32 = arith.constant 0 : index
    %110 = vector.load %arg2[%109, %c0_31, %c0_32] : memref<8x8x512xf32, #tpu.memory_space<vmem>>, vector<1x8x512xf32>
    %111 = vector.shape_cast %110 : vector<1x8x512xf32> to vector<8x512xf32>
    %112 = arith.addf %108, %111 : vector<8x512xf32>
    %113 = vector.extract_strided_slice %112 {offsets = [0, 0], sizes = [8, 128], strides = [1, 1]} : vector<8x512xf32> to vector<8x128xf32>
    %114 = arith.negf %113 : vector<8x128xf32>
    %115 = math.exp %114 : vector<8x128xf32>
    %cst_33 = arith.constant 1.000000e+00 : f32
    %116 = vector.broadcast %cst_33 : f32 to vector<8x128xf32>
    %117 = arith.addf %116, %115 : vector<8x128xf32>
    %118 = arith.divf %116, %117 : vector<8x128xf32>
    %119 = vector.extract_strided_slice %112 {offsets = [0, 128], sizes = [8, 128], strides = [1, 1]} : vector<8x512xf32> to vector<8x128xf32>
    %120 = arith.negf %119 : vector<8x128xf32>
    %121 = math.exp %120 : vector<8x128xf32>
    %cst_34 = arith.constant 1.000000e+00 : f32
    %122 = vector.broadcast %cst_34 : f32 to vector<8x128xf32>
    %123 = arith.addf %122, %121 : vector<8x128xf32>
    %124 = arith.divf %122, %123 : vector<8x128xf32>
    %125 = vector.extract_strided_slice %112 {offsets = [0, 256], sizes = [8, 128], strides = [1, 1]} : vector<8x512xf32> to vector<8x128xf32>
    %126 = math.tanh %125 : vector<8x128xf32>
    %127 = vector.extract_strided_slice %112 {offsets = [0, 384], sizes = [8, 128], strides = [1, 1]} : vector<8x512xf32> to vector<8x128xf32>
    %128 = arith.negf %127 : vector<8x128xf32>
    %129 = math.exp %128 : vector<8x128xf32>
    %cst_35 = arith.constant 1.000000e+00 : f32
    %130 = vector.broadcast %cst_35 : f32 to vector<8x128xf32>
    %131 = arith.addf %130, %129 : vector<8x128xf32>
    %132 = arith.divf %130, %131 : vector<8x128xf32>
    %133 = arith.mulf %124, %101 : vector<8x128xf32>
    %134 = arith.mulf %118, %126 : vector<8x128xf32>
    %135 = arith.addf %133, %134 : vector<8x128xf32>
    %136 = math.tanh %135 : vector<8x128xf32>
    %137 = arith.mulf %132, %136 : vector<8x128xf32>
    %138 = arith.index_cast %c3_i32 : i32 to index
    %c0_36 = arith.constant 0 : index
    %c0_37 = arith.constant 0 : index
    %139 = vector.load %arg6[%138, %c0_36, %c0_37] : memref<8x8x128xf32, #tpu.memory_space<vmem>>, vector<1x8x128xf32>
    %140 = vector.shape_cast %139 : vector<1x8x128xf32> to vector<8x128xf32>
    %141 = vector.shape_cast %137 : vector<8x128xf32> to vector<1x8x128xf32>
    tpu.vector_store %arg6[%138, %c0_36, %c0_37], %141 {strides = array<i32>} : memref<8x8x128xf32, #tpu.memory_space<vmem>>, vector<1x8x128xf32>,
    %c4_i32 = arith.constant 4 : i32
    %cst_38 = arith.constant dense<0.000000e+00> : vector<8x512xf32>
    %142 = tpu.matmul %137, %3, %cst_38 {dimension_numbers = #tpu.dot_dimension_numbers<[1], [0], [0], [1], [0, 0, 1, 1], [], []>} : vector<8x128xf32>, vector<128x512xf32>, vector<8x512xf32> -> vector<8x512xf32>
    %143 = arith.index_cast %c4_i32 : i32 to index
    %c0_39 = arith.constant 0 : index
    %c0_40 = arith.constant 0 : index
    %144 = vector.load %arg2[%143, %c0_39, %c0_40] : memref<8x8x512xf32, #tpu.memory_space<vmem>>, vector<1x8x512xf32>
    %145 = vector.shape_cast %144 : vector<1x8x512xf32> to vector<8x512xf32>
    %146 = arith.addf %142, %145 : vector<8x512xf32>
    %147 = vector.extract_strided_slice %146 {offsets = [0, 0], sizes = [8, 128], strides = [1, 1]} : vector<8x512xf32> to vector<8x128xf32>
    %148 = arith.negf %147 : vector<8x128xf32>
    %149 = math.exp %148 : vector<8x128xf32>
    %cst_41 = arith.constant 1.000000e+00 : f32
    %150 = vector.broadcast %cst_41 : f32 to vector<8x128xf32>
    %151 = arith.addf %150, %149 : vector<8x128xf32>
    %152 = arith.divf %150, %151 : vector<8x128xf32>
    %153 = vector.extract_strided_slice %146 {offsets = [0, 128], sizes = [8, 128], strides = [1, 1]} : vector<8x512xf32> to vector<8x128xf32>
    %154 = arith.negf %153 : vector<8x128xf32>
    %155 = math.exp %154 : vector<8x128xf32>
    %cst_42 = arith.constant 1.000000e+00 : f32
    %156 = vector.broadcast %cst_42 : f32 to vector<8x128xf32>
    %157 = arith.addf %156, %155 : vector<8x128xf32>
    %158 = arith.divf %156, %157 : vector<8x128xf32>
    %159 = vector.extract_strided_slice %146 {offsets = [0, 256], sizes = [8, 128], strides = [1, 1]} : vector<8x512xf32> to vector<8x128xf32>
    %160 = math.tanh %159 : vector<8x128xf32>
    %161 = vector.extract_strided_slice %146 {offsets = [0, 384], sizes = [8, 128], strides = [1, 1]} : vector<8x512xf32> to vector<8x128xf32>
    %162 = arith.negf %161 : vector<8x128xf32>
    %163 = math.exp %162 : vector<8x128xf32>
    %cst_43 = arith.constant 1.000000e+00 : f32
    %164 = vector.broadcast %cst_43 : f32 to vector<8x128xf32>
    %165 = arith.addf %164, %163 : vector<8x128xf32>
    %166 = arith.divf %164, %165 : vector<8x128xf32>
    %167 = arith.mulf %158, %135 : vector<8x128xf32>
    %168 = arith.mulf %152, %160 : vector<8x128xf32>
    %169 = arith.addf %167, %168 : vector<8x128xf32>
    %170 = math.tanh %169 : vector<8x128xf32>
    %171 = arith.mulf %166, %170 : vector<8x128xf32>
    %172 = arith.index_cast %c4_i32 : i32 to index
    %c0_44 = arith.constant 0 : index
    %c0_45 = arith.constant 0 : index
    %173 = vector.load %arg6[%172, %c0_44, %c0_45] : memref<8x8x128xf32, #tpu.memory_space<vmem>>, vector<1x8x128xf32>
    %174 = vector.shape_cast %173 : vector<1x8x128xf32> to vector<8x128xf32>
    %175 = vector.shape_cast %171 : vector<8x128xf32> to vector<1x8x128xf32>
    tpu.vector_store %arg6[%172, %c0_44, %c0_45], %175 {strides = array<i32>} : memref<8x8x128xf32, #tpu.memory_space<vmem>>, vector<1x8x128xf32>,
    %c5_i32 = arith.constant 5 : i32
    %cst_46 = arith.constant dense<0.000000e+00> : vector<8x512xf32>
    %176 = tpu.matmul %171, %3, %cst_46 {dimension_numbers = #tpu.dot_dimension_numbers<[1], [0], [0], [1], [0, 0, 1, 1], [], []>} : vector<8x128xf32>, vector<128x512xf32>, vector<8x512xf32> -> vector<8x512xf32>
    %177 = arith.index_cast %c5_i32 : i32 to index
    %c0_47 = arith.constant 0 : index
    %c0_48 = arith.constant 0 : index
    %178 = vector.load %arg2[%177, %c0_47, %c0_48] : memref<8x8x512xf32, #tpu.memory_space<vmem>>, vector<1x8x512xf32>
    %179 = vector.shape_cast %178 : vector<1x8x512xf32> to vector<8x512xf32>
    %180 = arith.addf %176, %179 : vector<8x512xf32>
    %181 = vector.extract_strided_slice %180 {offsets = [0, 0], sizes = [8, 128], strides = [1, 1]} : vector<8x512xf32> to vector<8x128xf32>
    %182 = arith.negf %181 : vector<8x128xf32>
    %183 = math.exp %182 : vector<8x128xf32>
    %cst_49 = arith.constant 1.000000e+00 : f32
    %184 = vector.broadcast %cst_49 : f32 to vector<8x128xf32>
    %185 = arith.addf %184, %183 : vector<8x128xf32>
    %186 = arith.divf %184, %185 : vector<8x128xf32>
    %187 = vector.extract_strided_slice %180 {offsets = [0, 128], sizes = [8, 128], strides = [1, 1]} : vector<8x512xf32> to vector<8x128xf32>
    %188 = arith.negf %187 : vector<8x128xf32>
    %189 = math.exp %188 : vector<8x128xf32>
    %cst_50 = arith.constant 1.000000e+00 : f32
    %190 = vector.broadcast %cst_50 : f32 to vector<8x128xf32>
    %191 = arith.addf %190, %189 : vector<8x128xf32>
    %192 = arith.divf %190, %191 : vector<8x128xf32>
    %193 = vector.extract_strided_slice %180 {offsets = [0, 256], sizes = [8, 128], strides = [1, 1]} : vector<8x512xf32> to vector<8x128xf32>
    %194 = math.tanh %193 : vector<8x128xf32>
    %195 = vector.extract_strided_slice %180 {offsets = [0, 384], sizes = [8, 128], strides = [1, 1]} : vector<8x512xf32> to vector<8x128xf32>
    %196 = arith.negf %195 : vector<8x128xf32>
    %197 = math.exp %196 : vector<8x128xf32>
    %cst_51 = arith.constant 1.000000e+00 : f32
    %198 = vector.broadcast %cst_51 : f32 to vector<8x128xf32>
    %199 = arith.addf %198, %197 : vector<8x128xf32>
    %200 = arith.divf %198, %199 : vector<8x128xf32>
    %201 = arith.mulf %192, %169 : vector<8x128xf32>
    %202 = arith.mulf %186, %194 : vector<8x128xf32>
    %203 = arith.addf %201, %202 : vector<8x128xf32>
    %204 = math.tanh %203 : vector<8x128xf32>
    %205 = arith.mulf %200, %204 : vector<8x128xf32>
    %206 = arith.index_cast %c5_i32 : i32 to index
    %c0_52 = arith.constant 0 : index
    %c0_53 = arith.constant 0 : index
    %207 = vector.load %arg6[%206, %c0_52, %c0_53] : memref<8x8x128xf32, #tpu.memory_space<vmem>>, vector<1x8x128xf32>
    %208 = vector.shape_cast %207 : vector<1x8x128xf32> to vector<8x128xf32>
    %209 = vector.shape_cast %205 : vector<8x128xf32> to vector<1x8x128xf32>
    tpu.vector_store %arg6[%206, %c0_52, %c0_53], %209 {strides = array<i32>} : memref<8x8x128xf32, #tpu.memory_space<vmem>>, vector<1x8x128xf32>,
    %c6_i32 = arith.constant 6 : i32
    %cst_54 = arith.constant dense<0.000000e+00> : vector<8x512xf32>
    %210 = tpu.matmul %205, %3, %cst_54 {dimension_numbers = #tpu.dot_dimension_numbers<[1], [0], [0], [1], [0, 0, 1, 1], [], []>} : vector<8x128xf32>, vector<128x512xf32>, vector<8x512xf32> -> vector<8x512xf32>
    %211 = arith.index_cast %c6_i32 : i32 to index
    %c0_55 = arith.constant 0 : index
    %c0_56 = arith.constant 0 : index
    %212 = vector.load %arg2[%211, %c0_55, %c0_56] : memref<8x8x512xf32, #tpu.memory_space<vmem>>, vector<1x8x512xf32>
    %213 = vector.shape_cast %212 : vector<1x8x512xf32> to vector<8x512xf32>
    %214 = arith.addf %210, %213 : vector<8x512xf32>
    %215 = vector.extract_strided_slice %214 {offsets = [0, 0], sizes = [8, 128], strides = [1, 1]} : vector<8x512xf32> to vector<8x128xf32>
    %216 = arith.negf %215 : vector<8x128xf32>
    %217 = math.exp %216 : vector<8x128xf32>
    %cst_57 = arith.constant 1.000000e+00 : f32
    %218 = vector.broadcast %cst_57 : f32 to vector<8x128xf32>
    %219 = arith.addf %218, %217 : vector<8x128xf32>
    %220 = arith.divf %218, %219 : vector<8x128xf32>
    %221 = vector.extract_strided_slice %214 {offsets = [0, 128], sizes = [8, 128], strides = [1, 1]} : vector<8x512xf32> to vector<8x128xf32>
    %222 = arith.negf %221 : vector<8x128xf32>
    %223 = math.exp %222 : vector<8x128xf32>
    %cst_58 = arith.constant 1.000000e+00 : f32
    %224 = vector.broadcast %cst_58 : f32 to vector<8x128xf32>
    %225 = arith.addf %224, %223 : vector<8x128xf32>
    %226 = arith.divf %224, %225 : vector<8x128xf32>
    %227 = vector.extract_strided_slice %214 {offsets = [0, 256], sizes = [8, 128], strides = [1, 1]} : vector<8x512xf32> to vector<8x128xf32>
    %228 = math.tanh %227 : vector<8x128xf32>
    %229 = vector.extract_strided_slice %214 {offsets = [0, 384], sizes = [8, 128], strides = [1, 1]} : vector<8x512xf32> to vector<8x128xf32>
    %230 = arith.negf %229 : vector<8x128xf32>
    %231 = math.exp %230 : vector<8x128xf32>
    %cst_59 = arith.constant 1.000000e+00 : f32
    %232 = vector.broadcast %cst_59 : f32 to vector<8x128xf32>
    %233 = arith.addf %232, %231 : vector<8x128xf32>
    %234 = arith.divf %232, %233 : vector<8x128xf32>
    %235 = arith.mulf %226, %203 : vector<8x128xf32>
    %236 = arith.mulf %220, %228 : vector<8x128xf32>
    %237 = arith.addf %235, %236 : vector<8x128xf32>
    %238 = math.tanh %237 : vector<8x128xf32>
    %239 = arith.mulf %234, %238 : vector<8x128xf32>
    %240 = arith.index_cast %c6_i32 : i32 to index
    %c0_60 = arith.constant 0 : index
    %c0_61 = arith.constant 0 : index
    %241 = vector.load %arg6[%240, %c0_60, %c0_61] : memref<8x8x128xf32, #tpu.memory_space<vmem>>, vector<1x8x128xf32>
    %242 = vector.shape_cast %241 : vector<1x8x128xf32> to vector<8x128xf32>
    %243 = vector.shape_cast %239 : vector<8x128xf32> to vector<1x8x128xf32>
    tpu.vector_store %arg6[%240, %c0_60, %c0_61], %243 {strides = array<i32>} : memref<8x8x128xf32, #tpu.memory_space<vmem>>, vector<1x8x128xf32>,
    %c7_i32 = arith.constant 7 : i32
    %cst_62 = arith.constant dense<0.000000e+00> : vector<8x512xf32>
    %244 = tpu.matmul %239, %3, %cst_62 {dimension_numbers = #tpu.dot_dimension_numbers<[1], [0], [0], [1], [0, 0, 1, 1], [], []>} : vector<8x128xf32>, vector<128x512xf32>, vector<8x512xf32> -> vector<8x512xf32>
    %245 = arith.index_cast %c7_i32 : i32 to index
    %c0_63 = arith.constant 0 : index
    %c0_64 = arith.constant 0 : index
    %246 = vector.load %arg2[%245, %c0_63, %c0_64] : memref<8x8x512xf32, #tpu.memory_space<vmem>>, vector<1x8x512xf32>
    %247 = vector.shape_cast %246 : vector<1x8x512xf32> to vector<8x512xf32>
    %248 = arith.addf %244, %247 : vector<8x512xf32>
    %249 = vector.extract_strided_slice %248 {offsets = [0, 0], sizes = [8, 128], strides = [1, 1]} : vector<8x512xf32> to vector<8x128xf32>
    %250 = arith.negf %249 : vector<8x128xf32>
    %251 = math.exp %250 : vector<8x128xf32>
    %cst_65 = arith.constant 1.000000e+00 : f32
    %252 = vector.broadcast %cst_65 : f32 to vector<8x128xf32>
    %253 = arith.addf %252, %251 : vector<8x128xf32>
    %254 = arith.divf %252, %253 : vector<8x128xf32>
    %255 = vector.extract_strided_slice %248 {offsets = [0, 128], sizes = [8, 128], strides = [1, 1]} : vector<8x512xf32> to vector<8x128xf32>
    %256 = arith.negf %255 : vector<8x128xf32>
    %257 = math.exp %256 : vector<8x128xf32>
    %cst_66 = arith.constant 1.000000e+00 : f32
    %258 = vector.broadcast %cst_66 : f32 to vector<8x128xf32>
    %259 = arith.addf %258, %257 : vector<8x128xf32>
    %260 = arith.divf %258, %259 : vector<8x128xf32>
    %261 = vector.extract_strided_slice %248 {offsets = [0, 256], sizes = [8, 128], strides = [1, 1]} : vector<8x512xf32> to vector<8x128xf32>
    %262 = math.tanh %261 : vector<8x128xf32>
    %263 = vector.extract_strided_slice %248 {offsets = [0, 384], sizes = [8, 128], strides = [1, 1]} : vector<8x512xf32> to vector<8x128xf32>
    %264 = arith.negf %263 : vector<8x128xf32>
    %265 = math.exp %264 : vector<8x128xf32>
    %cst_67 = arith.constant 1.000000e+00 : f32
    %266 = vector.broadcast %cst_67 : f32 to vector<8x128xf32>
    %267 = arith.addf %266, %265 : vector<8x128xf32>
    %268 = arith.divf %266, %267 : vector<8x128xf32>
    %269 = arith.mulf %260, %237 : vector<8x128xf32>
    %270 = arith.mulf %254, %262 : vector<8x128xf32>
    %271 = arith.addf %269, %270 : vector<8x128xf32>
    %272 = math.tanh %271 : vector<8x128xf32>
    %273 = arith.mulf %268, %272 : vector<8x128xf32>
    %274 = arith.index_cast %c7_i32 : i32 to index
    %c0_68 = arith.constant 0 : index
    %c0_69 = arith.constant 0 : index
    %275 = vector.load %arg6[%274, %c0_68, %c0_69] : memref<8x8x128xf32, #tpu.memory_space<vmem>>, vector<1x8x128xf32>
    %276 = vector.shape_cast %275 : vector<1x8x128xf32> to vector<8x128xf32>
    %277 = vector.shape_cast %273 : vector<8x128xf32> to vector<1x8x128xf32>
    tpu.vector_store %arg6[%274, %c0_68, %c0_69], %277 {strides = array<i32>} : memref<8x8x128xf32, #tpu.memory_space<vmem>>, vector<1x8x128xf32>,
    %c8_i32 = arith.constant 8 : i32
    %c0_70 = arith.constant 0 : index
    %c0_71 = arith.constant 0 : index
    %278 = vector.load %arg9[%c0_70, %c0_71] : memref<8x128xf32, #tpu.memory_space<vmem>>, vector<8x128xf32>
    tpu.vector_store %arg9[%c0_70, %c0_71], %273 {strides = array<i32>} : memref<8x128xf32, #tpu.memory_space<vmem>>, vector<8x128xf32>,
    %c0_72 = arith.constant 0 : index
    %c0_73 = arith.constant 0 : index
    %279 = vector.load %arg10[%c0_72, %c0_73] : memref<8x128xf32, #tpu.memory_space<vmem>>, vector<8x128xf32>
    tpu.vector_store %arg10[%c0_72, %c0_73], %271 {strides = array<i32>} : memref<8x128xf32, #tpu.memory_space<vmem>>, vector<8x128xf32>,
    %c0_i32_74 = arith.constant 0 : i32
    %280 = arith.cmpi eq, %arg1, %c0_i32_74 : i32
    %281 = arith.extui %280 : i1 to i32
    %c0_i32_75 = arith.constant 0 : i32
    %282 = arith.cmpi ne, %281, %c0_i32_75 : i32
    scf.if %282 {
      %c0_76 = arith.constant 0 : index
      %c0_77 = arith.constant 0 : index
      %283 = vector.load %arg7[%c0_76, %c0_77] : memref<8x128xf32, #tpu.memory_space<vmem>>, vector<8x128xf32>
      tpu.vector_store %arg7[%c0_76, %c0_77], %273 {strides = array<i32>} : memref<8x128xf32, #tpu.memory_space<vmem>>, vector<8x128xf32>,
      %c0_78 = arith.constant 0 : index
      %c0_79 = arith.constant 0 : index
      %284 = vector.load %arg8[%c0_78, %c0_79] : memref<8x128xf32, #tpu.memory_space<vmem>>, vector<8x128xf32>
      tpu.vector_store %arg8[%c0_78, %c0_79], %271 {strides = array<i32>} : memref<8x128xf32, #tpu.memory_space<vmem>>, vector<8x128xf32>,
    } else {
    }
    return
  }
  func.func @transform_0(%arg0: i32, %arg1: i32) -> (i32, i32, i32) {
    %c0_i32 = arith.constant 0 : i32
    %c0_i32_0 = arith.constant 0 : i32
    return %arg1, %arg0, %c0_i32 : i32, i32, i32
  }
  func.func @transform_1(%arg0: i32, %arg1: i32) -> (i32, i32) {
    %c0_i32 = arith.constant 0 : i32
    %c0_i32_0 = arith.constant 0 : i32
    %c0_i32_1 = arith.constant 0 : i32
    return %c0_i32, %c0_i32_0 : i32, i32
  }
  func.func @transform_2(%arg0: i32, %arg1: i32) -> (i32, i32) {
    %c0_i32 = arith.constant 0 : i32
    %c0_i32_0 = arith.constant 0 : i32
    return %arg0, %c0_i32 : i32, i32
  }
  func.func @transform_3(%arg0: i32, %arg1: i32) -> (i32, i32) {
    %c0_i32 = arith.constant 0 : i32
    %c0_i32_0 = arith.constant 0 : i32
    return %arg0, %c0_i32 : i32, i32
  }
  func.func @transform_4(%arg0: i32, %arg1: i32) -> (i32, i32, i32) {
    %c0_i32 = arith.constant 0 : i32
    %c0_i32_0 = arith.constant 0 : i32
    return %arg1, %arg0, %c0_i32 : i32, i32, i32
  }
  func.func @transform_5(%arg0: i32, %arg1: i32) -> (i32, i32) {
    %c0_i32 = arith.constant 0 : i32
    %c0_i32_0 = arith.constant 0 : i32
    return %arg0, %c0_i32 : i32, i32
  }
  func.func @transform_6(%arg0: i32, %arg1: i32) -> (i32, i32) {
    %c0_i32 = arith.constant 0 : i32
    %c0_i32_0 = arith.constant 0 : i32
    return %arg0, %c0_i32 : i32, i32
  }
}

module attributes {stable_mosaic.version = 11 : i64} {
  func.func @_lstm_recurrence_kernel(%arg0: i32, %arg1: i32, %arg2: memref<8x8x512xf32, #tpu.memory_space<vmem>>, %arg3: memref<128x512xf32, #tpu.memory_space<vmem>>, %arg4: memref<8x128xf32, #tpu.memory_space<vmem>>, %arg5: memref<8x128xf32, #tpu.memory_space<vmem>>, %arg6: memref<8x8x128xf32, #tpu.memory_space<vmem>>, %arg7: memref<8x128xf32, #tpu.memory_space<vmem>>, %arg8: memref<8x128xf32, #tpu.memory_space<vmem>>, %arg9: memref<8x128xf32, #tpu.memory_space<vmem>>, %arg10: memref<8x128xf32, #tpu.memory_space<vmem>>) attributes {dimension_semantics = [#tpu.dimension_semantics<parallel>, #tpu.dimension_semantics<arbitrary>], iteration_bounds = array<i64: 1, 1>, scalar_prefetch = 0 : i64, scratch_operands = 2 : i64, tpu.core_type = #tpu.core_type<tc>, window_params = [{transform_indices = @transform_0, window_bounds = array<i64: 8, 8, 512>}, {pipeline_mode = #tpu.pipeline_mode<synchronous>, transform_indices = @transform_1, window_bounds = array<i64: 128, 512>}, {transform_indices = @transform_2, window_bounds = array<i64: 8, 128>}, {transform_indices = @transform_3, window_bounds = array<i64: 8, 128>}, {transform_indices = @transform_4, window_bounds = array<i64: 8, 8, 128>}, {transform_indices = @transform_5, window_bounds = array<i64: 8, 128>}, {transform_indices = @transform_6, window_bounds = array<i64: 8, 128>}]} {
    %c0_i32 = arith.constant 0 : i32
    %0 = arith.cmpi eq, %arg1, %c0_i32 : i32
    %1 = arith.extui %0 : i1 to i32
    %c0_i32_0 = arith.constant 0 : i32
    %2 = arith.cmpi ne, %1, %c0_i32_0 : i32
    scf.if %2 {
      %c0_76 = arith.constant 0 : index
      %c0_77 = arith.constant 0 : index
      %283 = vector.load %arg4[%c0_76, %c0_77] : memref<8x128xf32, #tpu.memory_space<vmem>>, vector<8x128xf32>
      %c0_78 = arith.constant 0 : index
      %c0_79 = arith.constant 0 : index
      %284 = vector.load %arg9[%c0_78, %c0_79] : memref<8x128xf32, #tpu.memory_space<vmem>>, vector<8x128xf32>
      tpu.vector_store %arg9[%c0_78, %c0_79], %283 {strides = array<i32>} : memref<8x128xf32, #tpu.memory_space<vmem>>, vector<8x128xf32>,
      %c0_80 = arith.constant 0 : index
      %c0_81 = arith.constant 0 : index
      %285 = vector.load %arg5[%c0_80, %c0_81] : memref<8x128xf32, #tpu.memory_space<vmem>>, vector<8x128xf32>
      %c0_82 = arith.constant 0 : index
      %c0_83 = arith.constant 0 : index
      %286 = vector.load %arg10[%c0_82, %c0_83] : memref<8x128xf32, #tpu.memory_space<vmem>>, vector<8x128xf32>
      tpu.vector_store %arg10[%c0_82, %c0_83], %285 {strides = array<i32>} : memref<8x128xf32, #tpu.memory_space<vmem>>, vector<8x128xf32>,
    } else {
    }
    %c0 = arith.constant 0 : index
    %c0_1 = arith.constant 0 : index
    %3 = vector.load %arg3[%c0, %c0_1] : memref<128x512xf32, #tpu.memory_space<vmem>>, vector<128x512xf32>
    %c0_2 = arith.constant 0 : index
    %c0_3 = arith.constant 0 : index
    %4 = vector.load %arg9[%c0_2, %c0_3] : memref<8x128xf32, #tpu.memory_space<vmem>>, vector<8x128xf32>
    %c0_4 = arith.constant 0 : index
    %c0_5 = arith.constant 0 : index
    %5 = vector.load %arg10[%c0_4, %c0_5] : memref<8x128xf32, #tpu.memory_space<vmem>>, vector<8x128xf32>
    %c0_i32_6 = arith.constant 0 : i32
    %cst = arith.constant dense<0.000000e+00> : vector<8x512xf32>
    %6 = tpu.matmul %4, %3, %cst {dimension_numbers = #tpu.dot_dimension_numbers<[1], [0], [0], [1], [0, 0, 1, 1], [], []>} : vector<8x128xf32>, vector<128x512xf32>, vector<8x512xf32> -> vector<8x512xf32>
    %7 = arith.index_cast %c0_i32_6 : i32 to index
    %c0_7 = arith.constant 0 : index
    %c0_8 = arith.constant 0 : index
    %8 = vector.load %arg2[%7, %c0_7, %c0_8] : memref<8x8x512xf32, #tpu.memory_space<vmem>>, vector<1x8x512xf32>
    %9 = vector.shape_cast %8 : vector<1x8x512xf32> to vector<8x512xf32>
    %10 = arith.addf %6, %9 : vector<8x512xf32>
    %11 = vector.extract_strided_slice %10 {offsets = [0, 0], sizes = [8, 128], strides = [1, 1]} : vector<8x512xf32> to vector<8x128xf32>
    %12 = arith.negf %11 : vector<8x128xf32>
    %13 = math.exp %12 : vector<8x128xf32>
    %cst_9 = arith.constant 1.000000e+00 : f32
    %14 = vector.broadcast %cst_9 : f32 to vector<8x128xf32>
    %15 = arith.addf %14, %13 : vector<8x128xf32>
    %16 = arith.divf %14, %15 : vector<8x128xf32>
    %17 = vector.extract_strided_slice %10 {offsets = [0, 128], sizes = [8, 128], strides = [1, 1]} : vector<8x512xf32> to vector<8x128xf32>
    %18 = arith.negf %17 : vector<8x128xf32>
    %19 = math.exp %18 : vector<8x128xf32>
    %cst_10 = arith.constant 1.000000e+00 : f32
    %20 = vector.broadcast %cst_10 : f32 to vector<8x128xf32>
    %21 = arith.addf %20, %19 : vector<8x128xf32>
    %22 = arith.divf %20, %21 : vector<8x128xf32>
    %23 = vector.extract_strided_slice %10 {offsets = [0, 256], sizes = [8, 128], strides = [1, 1]} : vector<8x512xf32> to vector<8x128xf32>
    %24 = math.tanh %23 : vector<8x128xf32>
    %25 = vector.extract_strided_slice %10 {offsets = [0, 384], sizes = [8, 128], strides = [1, 1]} : vector<8x512xf32> to vector<8x128xf32>
    %26 = arith.negf %25 : vector<8x128xf32>
    %27 = math.exp %26 : vector<8x128xf32>
    %cst_11 = arith.constant 1.000000e+00 : f32
    %28 = vector.broadcast %cst_11 : f32 to vector<8x128xf32>
    %29 = arith.addf %28, %27 : vector<8x128xf32>
    %30 = arith.divf %28, %29 : vector<8x128xf32>
    %31 = arith.mulf %22, %5 : vector<8x128xf32>
    %32 = arith.mulf %16, %24 : vector<8x128xf32>
    %33 = arith.addf %31, %32 : vector<8x128xf32>
    %34 = math.tanh %33 : vector<8x128xf32>
    %35 = arith.mulf %30, %34 : vector<8x128xf32>
    %36 = arith.index_cast %c0_i32_6 : i32 to index
    %c0_12 = arith.constant 0 : index
    %c0_13 = arith.constant 0 : index
    %37 = vector.load %arg6[%36, %c0_12, %c0_13] : memref<8x8x128xf32, #tpu.memory_space<vmem>>, vector<1x8x128xf32>
    %38 = vector.shape_cast %37 : vector<1x8x128xf32> to vector<8x128xf32>
    %39 = vector.shape_cast %35 : vector<8x128xf32> to vector<1x8x128xf32>
    tpu.vector_store %arg6[%36, %c0_12, %c0_13], %39 {strides = array<i32>} : memref<8x8x128xf32, #tpu.memory_space<vmem>>, vector<1x8x128xf32>,
    %c1_i32 = arith.constant 1 : i32
    %cst_14 = arith.constant dense<0.000000e+00> : vector<8x512xf32>
    %40 = tpu.matmul %35, %3, %cst_14 {dimension_numbers = #tpu.dot_dimension_numbers<[1], [0], [0], [1], [0, 0, 1, 1], [], []>} : vector<8x128xf32>, vector<128x512xf32>, vector<8x512xf32> -> vector<8x512xf32>
    %41 = arith.index_cast %c1_i32 : i32 to index
    %c0_15 = arith.constant 0 : index
    %c0_16 = arith.constant 0 : index
    %42 = vector.load %arg2[%41, %c0_15, %c0_16] : memref<8x8x512xf32, #tpu.memory_space<vmem>>, vector<1x8x512xf32>
    %43 = vector.shape_cast %42 : vector<1x8x512xf32> to vector<8x512xf32>
    %44 = arith.addf %40, %43 : vector<8x512xf32>
    %45 = vector.extract_strided_slice %44 {offsets = [0, 0], sizes = [8, 128], strides = [1, 1]} : vector<8x512xf32> to vector<8x128xf32>
    %46 = arith.negf %45 : vector<8x128xf32>
    %47 = math.exp %46 : vector<8x128xf32>
    %cst_17 = arith.constant 1.000000e+00 : f32
    %48 = vector.broadcast %cst_17 : f32 to vector<8x128xf32>
    %49 = arith.addf %48, %47 : vector<8x128xf32>
    %50 = arith.divf %48, %49 : vector<8x128xf32>
    %51 = vector.extract_strided_slice %44 {offsets = [0, 128], sizes = [8, 128], strides = [1, 1]} : vector<8x512xf32> to vector<8x128xf32>
    %52 = arith.negf %51 : vector<8x128xf32>
    %53 = math.exp %52 : vector<8x128xf32>
    %cst_18 = arith.constant 1.000000e+00 : f32
    %54 = vector.broadcast %cst_18 : f32 to vector<8x128xf32>
    %55 = arith.addf %54, %53 : vector<8x128xf32>
    %56 = arith.divf %54, %55 : vector<8x128xf32>
    %57 = vector.extract_strided_slice %44 {offsets = [0, 256], sizes = [8, 128], strides = [1, 1]} : vector<8x512xf32> to vector<8x128xf32>
    %58 = math.tanh %57 : vector<8x128xf32>
    %59 = vector.extract_strided_slice %44 {offsets = [0, 384], sizes = [8, 128], strides = [1, 1]} : vector<8x512xf32> to vector<8x128xf32>
    %60 = arith.negf %59 : vector<8x128xf32>
    %61 = math.exp %60 : vector<8x128xf32>
    %cst_19 = arith.constant 1.000000e+00 : f32
    %62 = vector.broadcast %cst_19 : f32 to vector<8x128xf32>
    %63 = arith.addf %62, %61 : vector<8x128xf32>
    %64 = arith.divf %62, %63 : vector<8x128xf32>
    %65 = arith.mulf %56, %33 : vector<8x128xf32>
    %66 = arith.mulf %50, %58 : vector<8x128xf32>
    %67 = arith.addf %65, %66 : vector<8x128xf32>
    %68 = math.tanh %67 : vector<8x128xf32>
    %69 = arith.mulf %64, %68 : vector<8x128xf32>
    %70 = arith.index_cast %c1_i32 : i32 to index
    %c0_20 = arith.constant 0 : index
    %c0_21 = arith.constant 0 : index
    %71 = vector.load %arg6[%70, %c0_20, %c0_21] : memref<8x8x128xf32, #tpu.memory_space<vmem>>, vector<1x8x128xf32>
    %72 = vector.shape_cast %71 : vector<1x8x128xf32> to vector<8x128xf32>
    %73 = vector.shape_cast %69 : vector<8x128xf32> to vector<1x8x128xf32>
    tpu.vector_store %arg6[%70, %c0_20, %c0_21], %73 {strides = array<i32>} : memref<8x8x128xf32, #tpu.memory_space<vmem>>, vector<1x8x128xf32>,
    %c2_i32 = arith.constant 2 : i32
    %cst_22 = arith.constant dense<0.000000e+00> : vector<8x512xf32>
    %74 = tpu.matmul %69, %3, %cst_22 {dimension_numbers = #tpu.dot_dimension_numbers<[1], [0], [0], [1], [0, 0, 1, 1], [], []>} : vector<8x128xf32>, vector<128x512xf32>, vector<8x512xf32> -> vector<8x512xf32>
    %75 = arith.index_cast %c2_i32 : i32 to index
    %c0_23 = arith.constant 0 : index
    %c0_24 = arith.constant 0 : index
    %76 = vector.load %arg2[%75, %c0_23, %c0_24] : memref<8x8x512xf32, #tpu.memory_space<vmem>>, vector<1x8x512xf32>
    %77 = vector.shape_cast %76 : vector<1x8x512xf32> to vector<8x512xf32>
    %78 = arith.addf %74, %77 : vector<8x512xf32>
    %79 = vector.extract_strided_slice %78 {offsets = [0, 0], sizes = [8, 128], strides = [1, 1]} : vector<8x512xf32> to vector<8x128xf32>
    %80 = arith.negf %79 : vector<8x128xf32>
    %81 = math.exp %80 : vector<8x128xf32>
    %cst_25 = arith.constant 1.000000e+00 : f32
    %82 = vector.broadcast %cst_25 : f32 to vector<8x128xf32>
    %83 = arith.addf %82, %81 : vector<8x128xf32>
    %84 = arith.divf %82, %83 : vector<8x128xf32>
    %85 = vector.extract_strided_slice %78 {offsets = [0, 128], sizes = [8, 128], strides = [1, 1]} : vector<8x512xf32> to vector<8x128xf32>
    %86 = arith.negf %85 : vector<8x128xf32>
    %87 = math.exp %86 : vector<8x128xf32>
    %cst_26 = arith.constant 1.000000e+00 : f32
    %88 = vector.broadcast %cst_26 : f32 to vector<8x128xf32>
    %89 = arith.addf %88, %87 : vector<8x128xf32>
    %90 = arith.divf %88, %89 : vector<8x128xf32>
    %91 = vector.extract_strided_slice %78 {offsets = [0, 256], sizes = [8, 128], strides = [1, 1]} : vector<8x512xf32> to vector<8x128xf32>
    %92 = math.tanh %91 : vector<8x128xf32>
    %93 = vector.extract_strided_slice %78 {offsets = [0, 384], sizes = [8, 128], strides = [1, 1]} : vector<8x512xf32> to vector<8x128xf32>
    %94 = arith.negf %93 : vector<8x128xf32>
    %95 = math.exp %94 : vector<8x128xf32>
    %cst_27 = arith.constant 1.000000e+00 : f32
    %96 = vector.broadcast %cst_27 : f32 to vector<8x128xf32>
    %97 = arith.addf %96, %95 : vector<8x128xf32>
    %98 = arith.divf %96, %97 : vector<8x128xf32>
    %99 = arith.mulf %90, %67 : vector<8x128xf32>
    %100 = arith.mulf %84, %92 : vector<8x128xf32>
    %101 = arith.addf %99, %100 : vector<8x128xf32>
    %102 = math.tanh %101 : vector<8x128xf32>
    %103 = arith.mulf %98, %102 : vector<8x128xf32>
    %104 = arith.index_cast %c2_i32 : i32 to index
    %c0_28 = arith.constant 0 : index
    %c0_29 = arith.constant 0 : index
    %105 = vector.load %arg6[%104, %c0_28, %c0_29] : memref<8x8x128xf32, #tpu.memory_space<vmem>>, vector<1x8x128xf32>
    %106 = vector.shape_cast %105 : vector<1x8x128xf32> to vector<8x128xf32>
    %107 = vector.shape_cast %103 : vector<8x128xf32> to vector<1x8x128xf32>
    tpu.vector_store %arg6[%104, %c0_28, %c0_29], %107 {strides = array<i32>} : memref<8x8x128xf32, #tpu.memory_space<vmem>>, vector<1x8x128xf32>,
    %c3_i32 = arith.constant 3 : i32
    %cst_30 = arith.constant dense<0.000000e+00> : vector<8x512xf32>
    %108 = tpu.matmul %103, %3, %cst_30 {dimension_numbers = #tpu.dot_dimension_numbers<[1], [0], [0], [1], [0, 0, 1, 1], [], []>} : vector<8x128xf32>, vector<128x512xf32>, vector<8x512xf32> -> vector<8x512xf32>
    %109 = arith.index_cast %c3_i32 : i32 to index
    %c0_31 = arith.constant 0 : index
    %c0_32 = arith.constant 0 : index
    %110 = vector.load %arg2[%109, %c0_31, %c0_32] : memref<8x8x512xf32, #tpu.memory_space<vmem>>, vector<1x8x512xf32>
    %111 = vector.shape_cast %110 : vector<1x8x512xf32> to vector<8x512xf32>
    %112 = arith.addf %108, %111 : vector<8x512xf32>
    %113 = vector.extract_strided_slice %112 {offsets = [0, 0], sizes = [8, 128], strides = [1, 1]} : vector<8x512xf32> to vector<8x128xf32>
    %114 = arith.negf %113 : vector<8x128xf32>
    %115 = math.exp %114 : vector<8x128xf32>
    %cst_33 = arith.constant 1.000000e+00 : f32
    %116 = vector.broadcast %cst_33 : f32 to vector<8x128xf32>
    %117 = arith.addf %116, %115 : vector<8x128xf32>
    %118 = arith.divf %116, %117 : vector<8x128xf32>
    %119 = vector.extract_strided_slice %112 {offsets = [0, 128], sizes = [8, 128], strides = [1, 1]} : vector<8x512xf32> to vector<8x128xf32>
    %120 = arith.negf %119 : vector<8x128xf32>
    %121 = math.exp %120 : vector<8x128xf32>
    %cst_34 = arith.constant 1.000000e+00 : f32
    %122 = vector.broadcast %cst_34 : f32 to vector<8x128xf32>
    %123 = arith.addf %122, %121 : vector<8x128xf32>
    %124 = arith.divf %122, %123 : vector<8x128xf32>
    %125 = vector.extract_strided_slice %112 {offsets = [0, 256], sizes = [8, 128], strides = [1, 1]} : vector<8x512xf32> to vector<8x128xf32>
    %126 = math.tanh %125 : vector<8x128xf32>
    %127 = vector.extract_strided_slice %112 {offsets = [0, 384], sizes = [8, 128], strides = [1, 1]} : vector<8x512xf32> to vector<8x128xf32>
    %128 = arith.negf %127 : vector<8x128xf32>
    %129 = math.exp %128 : vector<8x128xf32>
    %cst_35 = arith.constant 1.000000e+00 : f32
    %130 = vector.broadcast %cst_35 : f32 to vector<8x128xf32>
    %131 = arith.addf %130, %129 : vector<8x128xf32>
    %132 = arith.divf %130, %131 : vector<8x128xf32>
    %133 = arith.mulf %124, %101 : vector<8x128xf32>
    %134 = arith.mulf %118, %126 : vector<8x128xf32>
    %135 = arith.addf %133, %134 : vector<8x128xf32>
    %136 = math.tanh %135 : vector<8x128xf32>
    %137 = arith.mulf %132, %136 : vector<8x128xf32>
    %138 = arith.index_cast %c3_i32 : i32 to index
    %c0_36 = arith.constant 0 : index
    %c0_37 = arith.constant 0 : index
    %139 = vector.load %arg6[%138, %c0_36, %c0_37] : memref<8x8x128xf32, #tpu.memory_space<vmem>>, vector<1x8x128xf32>
    %140 = vector.shape_cast %139 : vector<1x8x128xf32> to vector<8x128xf32>
    %141 = vector.shape_cast %137 : vector<8x128xf32> to vector<1x8x128xf32>
    tpu.vector_store %arg6[%138, %c0_36, %c0_37], %141 {strides = array<i32>} : memref<8x8x128xf32, #tpu.memory_space<vmem>>, vector<1x8x128xf32>,
    %c4_i32 = arith.constant 4 : i32
    %cst_38 = arith.constant dense<0.000000e+00> : vector<8x512xf32>
    %142 = tpu.matmul %137, %3, %cst_38 {dimension_numbers = #tpu.dot_dimension_numbers<[1], [0], [0], [1], [0, 0, 1, 1], [], []>} : vector<8x128xf32>, vector<128x512xf32>, vector<8x512xf32> -> vector<8x512xf32>
    %143 = arith.index_cast %c4_i32 : i32 to index
    %c0_39 = arith.constant 0 : index
    %c0_40 = arith.constant 0 : index
    %144 = vector.load %arg2[%143, %c0_39, %c0_40] : memref<8x8x512xf32, #tpu.memory_space<vmem>>, vector<1x8x512xf32>
    %145 = vector.shape_cast %144 : vector<1x8x512xf32> to vector<8x512xf32>
    %146 = arith.addf %142, %145 : vector<8x512xf32>
    %147 = vector.extract_strided_slice %146 {offsets = [0, 0], sizes = [8, 128], strides = [1, 1]} : vector<8x512xf32> to vector<8x128xf32>
    %148 = arith.negf %147 : vector<8x128xf32>
    %149 = math.exp %148 : vector<8x128xf32>
    %cst_41 = arith.constant 1.000000e+00 : f32
    %150 = vector.broadcast %cst_41 : f32 to vector<8x128xf32>
    %151 = arith.addf %150, %149 : vector<8x128xf32>
    %152 = arith.divf %150, %151 : vector<8x128xf32>
    %153 = vector.extract_strided_slice %146 {offsets = [0, 128], sizes = [8, 128], strides = [1, 1]} : vector<8x512xf32> to vector<8x128xf32>
    %154 = arith.negf %153 : vector<8x128xf32>
    %155 = math.exp %154 : vector<8x128xf32>
    %cst_42 = arith.constant 1.000000e+00 : f32
    %156 = vector.broadcast %cst_42 : f32 to vector<8x128xf32>
    %157 = arith.addf %156, %155 : vector<8x128xf32>
    %158 = arith.divf %156, %157 : vector<8x128xf32>
    %159 = vector.extract_strided_slice %146 {offsets = [0, 256], sizes = [8, 128], strides = [1, 1]} : vector<8x512xf32> to vector<8x128xf32>
    %160 = math.tanh %159 : vector<8x128xf32>
    %161 = vector.extract_strided_slice %146 {offsets = [0, 384], sizes = [8, 128], strides = [1, 1]} : vector<8x512xf32> to vector<8x128xf32>
    %162 = arith.negf %161 : vector<8x128xf32>
    %163 = math.exp %162 : vector<8x128xf32>
    %cst_43 = arith.constant 1.000000e+00 : f32
    %164 = vector.broadcast %cst_43 : f32 to vector<8x128xf32>
    %165 = arith.addf %164, %163 : vector<8x128xf32>
    %166 = arith.divf %164, %165 : vector<8x128xf32>
    %167 = arith.mulf %158, %135 : vector<8x128xf32>
    %168 = arith.mulf %152, %160 : vector<8x128xf32>
    %169 = arith.addf %167, %168 : vector<8x128xf32>
    %170 = math.tanh %169 : vector<8x128xf32>
    %171 = arith.mulf %166, %170 : vector<8x128xf32>
    %172 = arith.index_cast %c4_i32 : i32 to index
    %c0_44 = arith.constant 0 : index
    %c0_45 = arith.constant 0 : index
    %173 = vector.load %arg6[%172, %c0_44, %c0_45] : memref<8x8x128xf32, #tpu.memory_space<vmem>>, vector<1x8x128xf32>
    %174 = vector.shape_cast %173 : vector<1x8x128xf32> to vector<8x128xf32>
    %175 = vector.shape_cast %171 : vector<8x128xf32> to vector<1x8x128xf32>
    tpu.vector_store %arg6[%172, %c0_44, %c0_45], %175 {strides = array<i32>} : memref<8x8x128xf32, #tpu.memory_space<vmem>>, vector<1x8x128xf32>,
    %c5_i32 = arith.constant 5 : i32
    %cst_46 = arith.constant dense<0.000000e+00> : vector<8x512xf32>
    %176 = tpu.matmul %171, %3, %cst_46 {dimension_numbers = #tpu.dot_dimension_numbers<[1], [0], [0], [1], [0, 0, 1, 1], [], []>} : vector<8x128xf32>, vector<128x512xf32>, vector<8x512xf32> -> vector<8x512xf32>
    %177 = arith.index_cast %c5_i32 : i32 to index
    %c0_47 = arith.constant 0 : index
    %c0_48 = arith.constant 0 : index
    %178 = vector.load %arg2[%177, %c0_47, %c0_48] : memref<8x8x512xf32, #tpu.memory_space<vmem>>, vector<1x8x512xf32>
    %179 = vector.shape_cast %178 : vector<1x8x512xf32> to vector<8x512xf32>
    %180 = arith.addf %176, %179 : vector<8x512xf32>
    %181 = vector.extract_strided_slice %180 {offsets = [0, 0], sizes = [8, 128], strides = [1, 1]} : vector<8x512xf32> to vector<8x128xf32>
    %182 = arith.negf %181 : vector<8x128xf32>
    %183 = math.exp %182 : vector<8x128xf32>
    %cst_49 = arith.constant 1.000000e+00 : f32
    %184 = vector.broadcast %cst_49 : f32 to vector<8x128xf32>
    %185 = arith.addf %184, %183 : vector<8x128xf32>
    %186 = arith.divf %184, %185 : vector<8x128xf32>
    %187 = vector.extract_strided_slice %180 {offsets = [0, 128], sizes = [8, 128], strides = [1, 1]} : vector<8x512xf32> to vector<8x128xf32>
    %188 = arith.negf %187 : vector<8x128xf32>
    %189 = math.exp %188 : vector<8x128xf32>
    %cst_50 = arith.constant 1.000000e+00 : f32
    %190 = vector.broadcast %cst_50 : f32 to vector<8x128xf32>
    %191 = arith.addf %190, %189 : vector<8x128xf32>
    %192 = arith.divf %190, %191 : vector<8x128xf32>
    %193 = vector.extract_strided_slice %180 {offsets = [0, 256], sizes = [8, 128], strides = [1, 1]} : vector<8x512xf32> to vector<8x128xf32>
    %194 = math.tanh %193 : vector<8x128xf32>
    %195 = vector.extract_strided_slice %180 {offsets = [0, 384], sizes = [8, 128], strides = [1, 1]} : vector<8x512xf32> to vector<8x128xf32>
    %196 = arith.negf %195 : vector<8x128xf32>
    %197 = math.exp %196 : vector<8x128xf32>
    %cst_51 = arith.constant 1.000000e+00 : f32
    %198 = vector.broadcast %cst_51 : f32 to vector<8x128xf32>
    %199 = arith.addf %198, %197 : vector<8x128xf32>
    %200 = arith.divf %198, %199 : vector<8x128xf32>
    %201 = arith.mulf %192, %169 : vector<8x128xf32>
    %202 = arith.mulf %186, %194 : vector<8x128xf32>
    %203 = arith.addf %201, %202 : vector<8x128xf32>
    %204 = math.tanh %203 : vector<8x128xf32>
    %205 = arith.mulf %200, %204 : vector<8x128xf32>
    %206 = arith.index_cast %c5_i32 : i32 to index
    %c0_52 = arith.constant 0 : index
    %c0_53 = arith.constant 0 : index
    %207 = vector.load %arg6[%206, %c0_52, %c0_53] : memref<8x8x128xf32, #tpu.memory_space<vmem>>, vector<1x8x128xf32>
    %208 = vector.shape_cast %207 : vector<1x8x128xf32> to vector<8x128xf32>
    %209 = vector.shape_cast %205 : vector<8x128xf32> to vector<1x8x128xf32>
    tpu.vector_store %arg6[%206, %c0_52, %c0_53], %209 {strides = array<i32>} : memref<8x8x128xf32, #tpu.memory_space<vmem>>, vector<1x8x128xf32>,
    %c6_i32 = arith.constant 6 : i32
    %cst_54 = arith.constant dense<0.000000e+00> : vector<8x512xf32>
    %210 = tpu.matmul %205, %3, %cst_54 {dimension_numbers = #tpu.dot_dimension_numbers<[1], [0], [0], [1], [0, 0, 1, 1], [], []>} : vector<8x128xf32>, vector<128x512xf32>, vector<8x512xf32> -> vector<8x512xf32>
    %211 = arith.index_cast %c6_i32 : i32 to index
    %c0_55 = arith.constant 0 : index
    %c0_56 = arith.constant 0 : index
    %212 = vector.load %arg2[%211, %c0_55, %c0_56] : memref<8x8x512xf32, #tpu.memory_space<vmem>>, vector<1x8x512xf32>
    %213 = vector.shape_cast %212 : vector<1x8x512xf32> to vector<8x512xf32>
    %214 = arith.addf %210, %213 : vector<8x512xf32>
    %215 = vector.extract_strided_slice %214 {offsets = [0, 0], sizes = [8, 128], strides = [1, 1]} : vector<8x512xf32> to vector<8x128xf32>
    %216 = arith.negf %215 : vector<8x128xf32>
    %217 = math.exp %216 : vector<8x128xf32>
    %cst_57 = arith.constant 1.000000e+00 : f32
    %218 = vector.broadcast %cst_57 : f32 to vector<8x128xf32>
    %219 = arith.addf %218, %217 : vector<8x128xf32>
    %220 = arith.divf %218, %219 : vector<8x128xf32>
    %221 = vector.extract_strided_slice %214 {offsets = [0, 128], sizes = [8, 128], strides = [1, 1]} : vector<8x512xf32> to vector<8x128xf32>
    %222 = arith.negf %221 : vector<8x128xf32>
    %223 = math.exp %222 : vector<8x128xf32>
    %cst_58 = arith.constant 1.000000e+00 : f32
    %224 = vector.broadcast %cst_58 : f32 to vector<8x128xf32>
    %225 = arith.addf %224, %223 : vector<8x128xf32>
    %226 = arith.divf %224, %225 : vector<8x128xf32>
    %227 = vector.extract_strided_slice %214 {offsets = [0, 256], sizes = [8, 128], strides = [1, 1]} : vector<8x512xf32> to vector<8x128xf32>
    %228 = math.tanh %227 : vector<8x128xf32>
    %229 = vector.extract_strided_slice %214 {offsets = [0, 384], sizes = [8, 128], strides = [1, 1]} : vector<8x512xf32> to vector<8x128xf32>
    %230 = arith.negf %229 : vector<8x128xf32>
    %231 = math.exp %230 : vector<8x128xf32>
    %cst_59 = arith.constant 1.000000e+00 : f32
    %232 = vector.broadcast %cst_59 : f32 to vector<8x128xf32>
    %233 = arith.addf %232, %231 : vector<8x128xf32>
    %234 = arith.divf %232, %233 : vector<8x128xf32>
    %235 = arith.mulf %226, %203 : vector<8x128xf32>
    %236 = arith.mulf %220, %228 : vector<8x128xf32>
    %237 = arith.addf %235, %236 : vector<8x128xf32>
    %238 = math.tanh %237 : vector<8x128xf32>
    %239 = arith.mulf %234, %238 : vector<8x128xf32>
    %240 = arith.index_cast %c6_i32 : i32 to index
    %c0_60 = arith.constant 0 : index
    %c0_61 = arith.constant 0 : index
    %241 = vector.load %arg6[%240, %c0_60, %c0_61] : memref<8x8x128xf32, #tpu.memory_space<vmem>>, vector<1x8x128xf32>
    %242 = vector.shape_cast %241 : vector<1x8x128xf32> to vector<8x128xf32>
    %243 = vector.shape_cast %239 : vector<8x128xf32> to vector<1x8x128xf32>
    tpu.vector_store %arg6[%240, %c0_60, %c0_61], %243 {strides = array<i32>} : memref<8x8x128xf32, #tpu.memory_space<vmem>>, vector<1x8x128xf32>,
    %c7_i32 = arith.constant 7 : i32
    %cst_62 = arith.constant dense<0.000000e+00> : vector<8x512xf32>
    %244 = tpu.matmul %239, %3, %cst_62 {dimension_numbers = #tpu.dot_dimension_numbers<[1], [0], [0], [1], [0, 0, 1, 1], [], []>} : vector<8x128xf32>, vector<128x512xf32>, vector<8x512xf32> -> vector<8x512xf32>
    %245 = arith.index_cast %c7_i32 : i32 to index
    %c0_63 = arith.constant 0 : index
    %c0_64 = arith.constant 0 : index
    %246 = vector.load %arg2[%245, %c0_63, %c0_64] : memref<8x8x512xf32, #tpu.memory_space<vmem>>, vector<1x8x512xf32>
    %247 = vector.shape_cast %246 : vector<1x8x512xf32> to vector<8x512xf32>
    %248 = arith.addf %244, %247 : vector<8x512xf32>
    %249 = vector.extract_strided_slice %248 {offsets = [0, 0], sizes = [8, 128], strides = [1, 1]} : vector<8x512xf32> to vector<8x128xf32>
    %250 = arith.negf %249 : vector<8x128xf32>
    %251 = math.exp %250 : vector<8x128xf32>
    %cst_65 = arith.constant 1.000000e+00 : f32
    %252 = vector.broadcast %cst_65 : f32 to vector<8x128xf32>
    %253 = arith.addf %252, %251 : vector<8x128xf32>
    %254 = arith.divf %252, %253 : vector<8x128xf32>
    %255 = vector.extract_strided_slice %248 {offsets = [0, 128], sizes = [8, 128], strides = [1, 1]} : vector<8x512xf32> to vector<8x128xf32>
    %256 = arith.negf %255 : vector<8x128xf32>
    %257 = math.exp %256 : vector<8x128xf32>
    %cst_66 = arith.constant 1.000000e+00 : f32
    %258 = vector.broadcast %cst_66 : f32 to vector<8x128xf32>
    %259 = arith.addf %258, %257 : vector<8x128xf32>
    %260 = arith.divf %258, %259 : vector<8x128xf32>
    %261 = vector.extract_strided_slice %248 {offsets = [0, 256], sizes = [8, 128], strides = [1, 1]} : vector<8x512xf32> to vector<8x128xf32>
    %262 = math.tanh %261 : vector<8x128xf32>
    %263 = vector.extract_strided_slice %248 {offsets = [0, 384], sizes = [8, 128], strides = [1, 1]} : vector<8x512xf32> to vector<8x128xf32>
    %264 = arith.negf %263 : vector<8x128xf32>
    %265 = math.exp %264 : vector<8x128xf32>
    %cst_67 = arith.constant 1.000000e+00 : f32
    %266 = vector.broadcast %cst_67 : f32 to vector<8x128xf32>
    %267 = arith.addf %266, %265 : vector<8x128xf32>
    %268 = arith.divf %266, %267 : vector<8x128xf32>
    %269 = arith.mulf %260, %237 : vector<8x128xf32>
    %270 = arith.mulf %254, %262 : vector<8x128xf32>
    %271 = arith.addf %269, %270 : vector<8x128xf32>
    %272 = math.tanh %271 : vector<8x128xf32>
    %273 = arith.mulf %268, %272 : vector<8x128xf32>
    %274 = arith.index_cast %c7_i32 : i32 to index
    %c0_68 = arith.constant 0 : index
    %c0_69 = arith.constant 0 : index
    %275 = vector.load %arg6[%274, %c0_68, %c0_69] : memref<8x8x128xf32, #tpu.memory_space<vmem>>, vector<1x8x128xf32>
    %276 = vector.shape_cast %275 : vector<1x8x128xf32> to vector<8x128xf32>
    %277 = vector.shape_cast %273 : vector<8x128xf32> to vector<1x8x128xf32>
    tpu.vector_store %arg6[%274, %c0_68, %c0_69], %277 {strides = array<i32>} : memref<8x8x128xf32, #tpu.memory_space<vmem>>, vector<1x8x128xf32>,
    %c8_i32 = arith.constant 8 : i32
    %c0_70 = arith.constant 0 : index
    %c0_71 = arith.constant 0 : index
    %278 = vector.load %arg9[%c0_70, %c0_71] : memref<8x128xf32, #tpu.memory_space<vmem>>, vector<8x128xf32>
    tpu.vector_store %arg9[%c0_70, %c0_71], %273 {strides = array<i32>} : memref<8x128xf32, #tpu.memory_space<vmem>>, vector<8x128xf32>,
    %c0_72 = arith.constant 0 : index
    %c0_73 = arith.constant 0 : index
    %279 = vector.load %arg10[%c0_72, %c0_73] : memref<8x128xf32, #tpu.memory_space<vmem>>, vector<8x128xf32>
    tpu.vector_store %arg10[%c0_72, %c0_73], %271 {strides = array<i32>} : memref<8x128xf32, #tpu.memory_space<vmem>>, vector<8x128xf32>,
    %c0_i32_74 = arith.constant 0 : i32
    %280 = arith.cmpi eq, %arg1, %c0_i32_74 : i32
    %281 = arith.extui %280 : i1 to i32
    %c0_i32_75 = arith.constant 0 : i32
    %282 = arith.cmpi ne, %281, %c0_i32_75 : i32
    scf.if %282 {
      %c0_76 = arith.constant 0 : index
      %c0_77 = arith.constant 0 : index
      %283 = vector.load %arg7[%c0_76, %c0_77] : memref<8x128xf32, #tpu.memory_space<vmem>>, vector<8x128xf32>
      tpu.vector_store %arg7[%c0_76, %c0_77], %273 {strides = array<i32>} : memref<8x128xf32, #tpu.memory_space<vmem>>, vector<8x128xf32>,
      %c0_78 = arith.constant 0 : index
      %c0_79 = arith.constant 0 : index
      %284 = vector.load %arg8[%c0_78, %c0_79] : memref<8x128xf32, #tpu.memory_space<vmem>>, vector<8x128xf32>
      tpu.vector_store %arg8[%c0_78, %c0_79], %271 {strides = array<i32>} : memref<8x128xf32, #tpu.memory_space<vmem>>, vector<8x128xf32>,
    } else {
    }
    return
  }
  func.func @transform_0(%arg0: i32, %arg1: i32) -> (i32, i32, i32) {
    %c0_i32 = arith.constant 0 : i32
    %c0_i32_0 = arith.constant 0 : i32
    return %arg1, %arg0, %c0_i32 : i32, i32, i32
  }
  func.func @transform_1(%arg0: i32, %arg1: i32) -> (i32, i32) {
    %c0_i32 = arith.constant 0 : i32
    %c0_i32_0 = arith.constant 0 : i32
    %c0_i32_1 = arith.constant 0 : i32
    return %c0_i32, %c0_i32_0 : i32, i32
  }
  func.func @transform_2(%arg0: i32, %arg1: i32) -> (i32, i32) {
    %c0_i32 = arith.constant 0 : i32
    %c0_i32_0 = arith.constant 0 : i32
    return %arg0, %c0_i32 : i32, i32
  }
  func.func @transform_3(%arg0: i32, %arg1: i32) -> (i32, i32) {
    %c0_i32 = arith.constant 0 : i32
    %c0_i32_0 = arith.constant 0 : i32
    return %arg0, %c0_i32 : i32, i32
  }
  func.func @transform_4(%arg0: i32, %arg1: i32) -> (i32, i32, i32) {
    %c0_i32 = arith.constant 0 : i32
    %c0_i32_0 = arith.constant 0 : i32
    return %arg1, %arg0, %c0_i32 : i32, i32, i32
  }
  func.func @transform_5(%arg0: i32, %arg1: i32) -> (i32, i32) {
    %c0_i32 = arith.constant 0 : i32
    %c0_i32_0 = arith.constant 0 : i32
    return %arg0, %c0_i32 : i32, i32
  }
  func.func @transform_6(%arg0: i32, %arg1: i32) -> (i32, i32) {
    %c0_i32 = arith.constant 0 : i32
    %c0_i32_0 = arith.constant 0 : i32
    return %arg0, %c0_i32 : i32, i32
  }
}

</mosaic_0001>

<llo_original>
// kernel: tpu_custom_call.1
$region0: #{tpu_custom_call.1}
  #allocation0 [shape = 'u32[]', space=smem, size = 0x4, offset = 0x4, fixed_abs, tag = 'smem constant byte address 0x4 - core index']
  #allocation1 [shape = 'u32[144,128]{1,0:T(1,128)}', space=vmem, size = 0x12000, scoped, tag = 'internal scratch']
  #allocation2 [shape = 'f32[8,128]{1,0:T(8,128)}', space=vmem, size = 0x1000, scoped, tag = 'scratch operand']
  #allocation3 [shape = 'f32[8,128]{1,0:T(8,128)}', space=vmem, size = 0x1000, scoped, tag = 'scratch operand']
  %s0 = inlined_call_operand.hbm [shape: f32[8,8,512], index: 0, kind: input, shape index: {}]
  %s1 = inlined_call_operand.hbm [shape: f32[128,512], index: 1, kind: input, shape index: {}]
  %s2 = inlined_call_operand.hbm [shape: f32[8,128], index: 2, kind: input, shape index: {}]
  %s3 = inlined_call_operand.hbm [shape: f32[8,128], index: 3, kind: input, shape index: {}]
  %s4 = inlined_call_operand.hbm [shape: f32[8,8,128], index: 4, kind: output, shape index: {0}]
  %s5 = inlined_call_operand.hbm [shape: f32[8,128], index: 5, kind: output, shape index: {1}]
  %s6 = inlined_call_operand.hbm [shape: f32[8,128], index: 6, kind: output, shape index: {2}]
  %7 = xla_tuple %s4, %s5, %s6
  %s8 = sld [smem:[#allocation0]]
  $region66: #{tpu_custom_call.1} parent=0
    _
  %s10 = ssub.s32 1, %s8
  %s11 = scalar_select 0, %s10, %s8
  $region1: #{tpu_custom_call.1} parent=0
    #allocation4 [shape = 'u8[131072]{0}', space=vmem, size = 0x20000, scoped, tag = 'input window, operand 0, single buffered']
    #allocation5 [shape = 's32[1]{0}', space=sflag, size = 0x4, scoped, tag = 'scoped memory for tpu_custom_call.1']
    #allocation6 [shape = 's32[1]{0}', space=sflag, size = 0x4, scoped, tag = 'scoped memory for tpu_custom_call.1']
    #allocation7 [shape = 'u8[262144]{0}', space=vmem, size = 0x40000, scoped, tag = 'input window, operand 1, single buffered']
    #allocation8 [shape = 's32[1]{0}', space=sflag, size = 0x4, scoped, tag = 'scoped memory for tpu_custom_call.1']
    #allocation9 [shape = 'u8[4096]{0}', space=vmem, size = 0x1000, scoped, tag = 'input window, operand 2, single buffered']
    #allocation10 [shape = 'u8[4096]{0}', space=vmem, size = 0x1000, scoped, tag = 'input window, operand 3, single buffered']
    #allocation11 [shape = 's32[1]{0}', space=sflag, size = 0x4, scoped, tag = 'scoped memory for tpu_custom_call.1']
    #allocation12 [shape = 'u8[32768]{0}', space=vmem, size = 0x8000, scoped, tag = 'output window, operand 0, single buffered']
    #allocation13 [shape = 'u8[4096]{0}', space=vmem, size = 0x1000, scoped, tag = 'output window, operand 1, single buffered']
    #allocation14 [shape = 's32[1]{0}', space=sflag, size = 0x4, scoped, tag = 'scoped memory for tpu_custom_call.1']
    #allocation15 [shape = 'u8[4096]{0}', space=vmem, size = 0x1000, scoped, tag = 'output window, operand 2, single buffered']
    %12 = vsyncpa [#allocation5], 0
    %13 = vsyncpa [#allocation8], 0
    %14 = vsyncpa [#allocation11], 0
    %15 = vsyncpa [#allocation6], 0
    %16 = vsyncpa [#allocation14], 0
    // Predicated region
    $region2: #{tpu_custom_call.1} parent=1 // pred_check
      _
    $region3: #{tpu_custom_call.1} parent=1 // pred_check_branch
      %18 = sbr.rel (0) target = $region5
    $region4: #{tpu_custom_call.1} parent=1 // pred_region
      %s20 = ssub.s32 4096, 4096
      %21 = vsyncadd [#allocation5], %s20
      %s22 = sshll.u32 [#allocation4], 4
      %s23 = int_to_ptr.vmem [resolvable:$true] %s22
      %28 = dma.hbm_to_vmem [thread:$0]  %s0, 4096, %s23, [#allocation5], 512, 512, 32
    $region5: #{tpu_custom_call.1} parent=1 // pred_fallthru
      _
    // Predicated region
    $region6: #{tpu_custom_call.1} parent=1 // pred_check
      _
    $region7: #{tpu_custom_call.1} parent=1 // pred_check_branch
      %30 = sbr.rel (0) target = $region9
    $region8: #{tpu_custom_call.1} parent=1 // pred_region
      %s32 = ssub.s32 8192, 8192
      %33 = vsyncadd [#allocation8], %s32
      %s34 = sshll.u32 [#allocation7], 4
      %s35 = int_to_ptr.vmem [resolvable:$true] %s34
      %40 = dma.hbm_to_vmem [thread:$0]  %s1, 8192, %s35, [#allocation8], 512, 512, 32
    $region9: #{tpu_custom_call.1} parent=1 // pred_fallthru
      _
    // Predicated region
    $region10: #{tpu_custom_call.1} parent=1 // pred_check
      _
    $region11: #{tpu_custom_call.1} parent=1 // pred_check_branch
      %42 = sbr.rel (0) target = $region13
    $region12: #{tpu_custom_call.1} parent=1 // pred_region
      %s44 = ssub.s32 128, 128
      %45 = vsyncadd [#allocation8], %s44
      %s47 = sshll.u32 [#allocation9], 4
      %s48 = int_to_ptr.vmem [resolvable:$true] %s47
      %50 = dma.hbm_to_vmem [thread:$0]  %s2, 128, %s48, [#allocation8]
    $region13: #{tpu_custom_call.1} parent=1 // pred_fallthru
      _
    // Predicated region
    $region14: #{tpu_custom_call.1} parent=1 // pred_check
      _
    $region15: #{tpu_custom_call.1} parent=1 // pred_check_branch
      %52 = sbr.rel (0) target = $region17
    $region16: #{tpu_custom_call.1} parent=1 // pred_region
      %s54 = ssub.s32 128, 128
      %55 = vsyncadd [#allocation11], %s54
      %s57 = sshll.u32 [#allocation10], 4
      %s58 = int_to_ptr.vmem [resolvable:$true] %s57
      %60 = dma.hbm_to_vmem [thread:$0]  %s3, 128, %s58, [#allocation11]
    $region17: #{tpu_custom_call.1} parent=1 // pred_fallthru
      _
    // Predicated region
    $region18: #{tpu_custom_call.1} parent=1 // pred_check
      _
    $region19: #{tpu_custom_call.1} parent=1 // pred_check_branch
      %62 = sbr.rel (0) target = $region21
    $region20: #{tpu_custom_call.1} parent=1 // pred_region
      %63 = dma.done [#allocation5], 4096
    $region21: #{tpu_custom_call.1} parent=1 // pred_fallthru
      _
    // Predicated region
    $region22: #{tpu_custom_call.1} parent=1 // pred_check
      _
    $region23: #{tpu_custom_call.1} parent=1 // pred_check_branch
      %65 = sbr.rel (0) target = $region25
    $region24: #{tpu_custom_call.1} parent=1 // pred_region
      %66 = dma.done [#allocation8], 8192
    $region25: #{tpu_custom_call.1} parent=1 // pred_fallthru
      _
    // Predicated region
    $region26: #{tpu_custom_call.1} parent=1 // pred_check
      _
    $region27: #{tpu_custom_call.1} parent=1 // pred_check_branch
      %68 = sbr.rel (0) target = $region29
    $region28: #{tpu_custom_call.1} parent=1 // pred_region
      %69 = dma.done [#allocation8], 128
    $region29: #{tpu_custom_call.1} parent=1 // pred_fallthru
      _
    // Predicated region
    $region30: #{tpu_custom_call.1} parent=1 // pred_check
      _
    $region31: #{tpu_custom_call.1} parent=1 // pred_check_branch
      %71 = sbr.rel (0) target = $region33
    $region32: #{tpu_custom_call.1} parent=1 // pred_region
      %72 = dma.done [#allocation11], 128
    $region33: #{tpu_custom_call.1} parent=1 // pred_fallthru
      _
    %p73 = scmp.eq.s32.totalorder 0, 0
    // Predicated region
    $region34: #{tpu_custom_call.1} parent=1 // pred_check
      %p74 = pneg %p73
    $region35: #{tpu_custom_call.1} parent=1 // pred_check_branch
      %76 = sbr.rel (%p74) target = $region37
    $region36: #{tpu_custom_call.1} parent=1 // pred_region
      %v77 = vld [vmem:[#allocation9] sm:$0xff]
      %78 = vst [vmem:[#allocation2] sm:$0xff] %v77
      %v79 = vld [vmem:[#allocation10] sm:$0xff]
      %80 = vst [vmem:[#allocation3] sm:$0xff] %v79
    $region37: #{tpu_custom_call.1} parent=1 // pred_fallthru
      _
    %v81 = vld [vmem:[#allocation7] sm:$0xff]
    %v82 = vld [vmem:[#allocation7 + $0x8] sm:$0xff]
    %v83 = vld [vmem:[#allocation7 + $0x10] sm:$0xff]
    %v84 = vld [vmem:[#allocation7 + $0x18] sm:$0xff]
    %v85 = vld [vmem:[#allocation7 + $0x20] sm:$0xff]
    %v86 = vld [vmem:[#allocation7 + $0x28] sm:$0xff]
    %v87 = vld [vmem:[#allocation7 + $0x30] sm:$0xff]
    %v88 = vld [vmem:[#allocation7 + $0x38] sm:$0xff]
    %v89 = vld [vmem:[#allocation7 + $0x40] sm:$0xff]
    %v90 = vld [vmem:[#allocation7 + $0x48] sm:$0xff]
    %v91 = vld [vmem:[#allocation7 + $0x50] sm:$0xff]
    %v92 = vld [vmem:[#allocation7 + $0x58] sm:$0xff]
    %v93 = vld [vmem:[#allocation7 + $0x60] sm:$0xff]
    %v94 = vld [vmem:[#allocation7 + $0x68] sm:$0xff]
    %v95 = vld [vmem:[#allocation7 + $0x70] sm:$0xff]
    %v96 = vld [vmem:[#allocation7 + $0x78] sm:$0xff]
    %v97 = vld [vmem:[#allocation7 + $0x80] sm:$0xff]
    %v98 = vld [vmem:[#allocation7 + $0x88] sm:$0xff]
    %v99 = vld [vmem:[#allocation7 + $0x90] sm:$0xff]
    %v100 = vld [vmem:[#allocation7 + $0x98] sm:$0xff]
    %v101 = vld [vmem:[#allocation7 + $0xa0] sm:$0xff]
    %v102 = vld [vmem:[#allocation7 + $0xa8] sm:$0xff]
    %v103 = vld [vmem:[#allocation7 + $0xb0] sm:$0xff]
    %v104 = vld [vmem:[#allocation7 + $0xb8] sm:$0xff]
    %v105 = vld [vmem:[#allocation7 + $0xc0] sm:$0xff]
    %v106 = vld [vmem:[#allocation7 + $0xc8] sm:$0xff]
    %v107 = vld [vmem:[#allocation7 + $0xd0] sm:$0xff]
    %v108 = vld [vmem:[#allocation7 + $0xd8] sm:$0xff]
    %v109 = vld [vmem:[#allocation7 + $0xe0] sm:$0xff]
    %v110 = vld [vmem:[#allocation7 + $0xe8] sm:$0xff]
    %v111 = vld [vmem:[#allocation7 + $0xf0] sm:$0xff]
    %v112 = vld [vmem:[#allocation7 + $0xf8] sm:$0xff]
    %v113 = vld [vmem:[#allocation7 + $0x100] sm:$0xff]
    %v114 = vld [vmem:[#allocation7 + $0x108] sm:$0xff]
    %v115 = vld [vmem:[#allocation7 + $0x110] sm:$0xff]
    %v116 = vld [vmem:[#allocation7 + $0x118] sm:$0xff]
    %v117 = vld [vmem:[#allocation7 + $0x120] sm:$0xff]
    %v118 = vld [vmem:[#allocation7 + $0x128] sm:$0xff]
    %v119 = vld [vmem:[#allocation7 + $0x130] sm:$0xff]
    %v120 = vld [vmem:[#allocation7 + $0x138] sm:$0xff]
    %v121 = vld [vmem:[#allocation7 + $0x140] sm:$0xff]
    %v122 = vld [vmem:[#allocation7 + $0x148] sm:$0xff]
    %v123 = vld [vmem:[#allocation7 + $0x150] sm:$0xff]
    %v124 = vld [vmem:[#allocation7 + $0x158] sm:$0xff]
    %v125 = vld [vmem:[#allocation7 + $0x160] sm:$0xff]
    %v126 = vld [vmem:[#allocation7 + $0x168] sm:$0xff]
    %v127 = vld [vmem:[#allocation7 + $0x170] sm:$0xff]
    %v128 = vld [vmem:[#allocation7 + $0x178] sm:$0xff]
    %v129 = vld [vmem:[#allocation7 + $0x180] sm:$0xff]
    %v130 = vld [vmem:[#allocation7 + $0x188] sm:$0xff]
    %v131 = vld [vmem:[#allocation7 + $0x190] sm:$0xff]
    %v132 = vld [vmem:[#allocation7 + $0x198] sm:$0xff]
    %v133 = vld [vmem:[#allocation7 + $0x1a0] sm:$0xff]
    %v134 = vld [vmem:[#allocation7 + $0x1a8] sm:$0xff]
    %v135 = vld [vmem:[#allocation7 + $0x1b0] sm:$0xff]
    %v136 = vld [vmem:[#allocation7 + $0x1b8] sm:$0xff]
    %v137 = vld [vmem:[#allocation7 + $0x1c0] sm:$0xff]
    %v138 = vld [vmem:[#allocation7 + $0x1c8] sm:$0xff]
    %v139 = vld [vmem:[#allocation7 + $0x1d0] sm:$0xff]
    %v140 = vld [vmem:[#allocation7 + $0x1d8] sm:$0xff]
    %v141 = vld [vmem:[#allocation7 + $0x1e0] sm:$0xff]
    %v142 = vld [vmem:[#allocation7 + $0x1e8] sm:$0xff]
    %v143 = vld [vmem:[#allocation7 + $0x1f0] sm:$0xff]
    %v144 = vld [vmem:[#allocation7 + $0x1f8] sm:$0xff]
    %v145 = vld [vmem:[#allocation2] sm:$0xff]
    %v146 = vld [vmem:[#allocation3] sm:$0xff]
    %v147 = vld [vmem:[#allocation4] sm:$0xff]
    %v148 = vld [vmem:[#allocation4 + $0x8] sm:$0xff]
    %v149 = vld [vmem:[#allocation4 + $0x10] sm:$0xff]
    %v150 = vld [vmem:[#allocation4 + $0x18] sm:$0xff]
    %151 = vmatprep.subr.mxu0 %v142
    %152 = vmatpush1.msra.mxu0 %v141
    %153 = vmatprep.subr.mxu0 %v138
    %154 = vmatpush1.msra.mxu0 %v137
    %155 = vmatprep.subr.mxu0 %v134
    %156 = vmatpush1.msra.mxu0 %v133
    %157 = vmatprep.subr.mxu0 %v130
    %158 = vmatpush1.msra.mxu0 %v129
    %159 = vmatprep.subr.mxu0 %v126
    %160 = vmatpush1.msra.mxu0 %v125
    %161 = vmatprep.subr.mxu0 %v122
    %162 = vmatpush1.msra.mxu0 %v121
    %163 = vmatprep.subr.mxu0 %v118
    %164 = vmatpush1.msra.mxu0 %v117
    %165 = vmatprep.subr.mxu0 %v114
    %166 = vmatpush1.msra.mxu0 %v113
    %167 = vmatprep.subr.mxu0 %v110
    %168 = vmatpush1.msra.mxu0 %v109
    %169 = vmatprep.subr.mxu0 %v106
    %170 = vmatpush1.msra.mxu0 %v105
    %171 = vmatprep.subr.mxu0 %v102
    %172 = vmatpush1.msra.mxu0 %v101
    %173 = vmatprep.subr.mxu0 %v98
    %174 = vmatpush1.msra.mxu0 %v97
    %175 = vmatprep.subr.mxu0 %v94
    %176 = vmatpush1.msra.mxu0 %v93
    %177 = vmatprep.subr.mxu0 %v90
    %178 = vmatpush1.msra.mxu0 %v89
    %179 = vmatprep.subr.mxu0 %v86
    %180 = vmatpush1.msra.mxu0 %v85
    %181 = vmatprep.subr.mxu0 %v82
    %182 = vmatpush1.msra.mxu0 %v81
    %183 = vmatprep.subr.mxu0 0.0
    %184 = vmatpush2.msra.mxu0 0.0
    %185 = vmatprep.subr.mxu0 0.0
    %186 = vmatpush2.msra.mxu0 0.0
    %187 = vmatprep.subr.mxu0 0.0
    %188 = vmatpush2.msra.mxu0 0.0
    %189 = vmatprep.subr.mxu0 0.0
    %190 = vmatpush2.msra.mxu0 0.0
    %191 = vmatprep.subr.mxu0 0.0
    %192 = vmatpush2.msra.mxu0 0.0
    %193 = vmatprep.subr.mxu0 0.0
    %194 = vmatpush2.msra.mxu0 0.0
    %195 = vmatprep.subr.mxu0 0.0
    %196 = vmatpush2.msra.mxu0 0.0
    %197 = vmatprep.subr.mxu0 0.0
    %198 = vmatpush2.msra.mxu0 0.0
    %199 = vmatprep.subr.mxu0 0.0
    %200 = vmatpush2.msra.mxu0 0.0
    %201 = vmatprep.subr.mxu0 0.0
    %202 = vmatpush2.msra.mxu0 0.0
    %203 = vmatprep.subr.mxu0 0.0
    %204 = vmatpush2.msra.mxu0 0.0
    %205 = vmatprep.subr.mxu0 0.0
    %206 = vmatpush2.msra.mxu0 0.0
    %207 = vmatprep.subr.mxu0 0.0
    %208 = vmatpush2.msra.mxu0 0.0
    %209 = vmatprep.subr.mxu0 0.0
    %210 = vmatpush2.msra.mxu0 0.0
    %211 = vmatprep.subr.mxu0 0.0
    %212 = vmatpush2.msra.mxu0 0.0
    %213 = vmatprep.subr.mxu0 0.0
    %214 = vmatpush2.msra.mxu0 0.0
    %215 = vmatprep.mubr.f32.mxu0 0.0
    %216 = vmatmul.mubr.f32.gmra.mxu0 %v145
    %v217 = vpop.f32.mrf.mxu0
    %v218 = vadd.f32 %v147, %v217
    %v219 = vpop.f32.mrf.mxu0
    %v220 = vadd.f32 %v148, %v219
    %221 = vdwg.mxu0
    %222 = vmatprep.subr.mxu0 %v144
    %223 = vmatpush1.msra.mxu0 %v143
    %224 = vmatprep.subr.mxu0 %v140
    %225 = vmatpush1.msra.mxu0 %v139
    %226 = vmatprep.subr.mxu0 %v136
    %227 = vmatpush1.msra.mxu0 %v135
    %228 = vmatprep.subr.mxu0 %v132
    %229 = vmatpush1.msra.mxu0 %v131
    %230 = vmatprep.subr.mxu0 %v128
    %231 = vmatpush1.msra.mxu0 %v127
    %232 = vmatprep.subr.mxu0 %v124
    %233 = vmatpush1.msra.mxu0 %v123
    %234 = vmatprep.subr.mxu0 %v120
    %235 = vmatpush1.msra.mxu0 %v119
    %236 = vmatprep.subr.mxu0 %v116
    %237 = vmatpush1.msra.mxu0 %v115
    %238 = vmatprep.subr.mxu0 %v112
    %239 = vmatpush1.msra.mxu0 %v111
    %240 = vmatprep.subr.mxu0 %v108
    %241 = vmatpush1.msra.mxu0 %v107
    %242 = vmatprep.subr.mxu0 %v104
    %243 = vmatpush1.msra.mxu0 %v103
    %244 = vmatprep.subr.mxu0 %v100
    %245 = vmatpush1.msra.mxu0 %v99
    %246 = vmatprep.subr.mxu0 %v96
    %247 = vmatpush1.msra.mxu0 %v95
    %248 = vmatprep.subr.mxu0 %v92
    %249 = vmatpush1.msra.mxu0 %v91
    %250 = vmatprep.subr.mxu0 %v88
    %251 = vmatpush1.msra.mxu0 %v87
    %252 = vmatprep.subr.mxu0 %v84
    %253 = vmatpush1.msra.mxu0 %v83
    %254 = vmatprep.subr.mxu0 0.0
    %255 = vmatpush2.msra.mxu0 0.0
    %256 = vmatprep.subr.mxu0 0.0
    %257 = vmatpush2.msra.mxu0 0.0
    %258 = vmatprep.subr.mxu0 0.0
    %259 = vmatpush2.msra.mxu0 0.0
    %260 = vmatprep.subr.mxu0 0.0
    %261 = vmatpush2.msra.mxu0 0.0
    %262 = vmatprep.subr.mxu0 0.0
    %263 = vmatpush2.msra.mxu0 0.0
    %264 = vmatprep.subr.mxu0 0.0
    %265 = vmatpush2.msra.mxu0 0.0
    %266 = vmatprep.subr.mxu0 0.0
    %267 = vmatpush2.msra.mxu0 0.0
    %268 = vmatprep.subr.mxu0 0.0
    %269 = vmatpush2.msra.mxu0 0.0
    %270 = vmatprep.subr.mxu0 0.0
    %271 = vmatpush2.msra.mxu0 0.0
    %272 = vmatprep.subr.mxu0 0.0
    %273 = vmatpush2.msra.mxu0 0.0
    %274 = vmatprep.subr.mxu0 0.0
    %275 = vmatpush2.msra.mxu0 0.0
    %276 = vmatprep.subr.mxu0 0.0
    %277 = vmatpush2.msra.mxu0 0.0
    %278 = vmatprep.subr.mxu0 0.0
    %279 = vmatpush2.msra.mxu0 0.0
    %280 = vmatprep.subr.mxu0 0.0
    %281 = vmatpush2.msra.mxu0 0.0
    %282 = vmatprep.subr.mxu0 0.0
    %283 = vmatpush2.msra.mxu0 0.0
    %284 = vmatprep.subr.mxu0 0.0
    %285 = vmatpush2.msra.mxu0 0.0
    %286 = vmatprep.mubr.f32.mxu0 0.0
    %287 = vmatmul.mubr.f32.gmra.mxu0 %v145
    %v288 = vpop.f32.mrf.mxu0
    %v289 = vadd.f32 %v149, %v288
    %v290 = vpop.f32.mrf.mxu0
    %v291 = vadd.f32 %v150, %v290
    %292 = vdwg.mxu0
    %v293 = vxor.u32 %v218, 2147483648
    %v294 = vmul.f32 %v293, 1.442695
    %v295 = vpow.pop %v294
    %v296 = vadd.f32 %v295, 1.0
    %v297 = vrcp.pop %v296
    %v298 = vmul.f32 1.0, %v297
    %v299 = vxor.u32 %v220, 2147483648
    %v300 = vmul.f32 %v299, 1.442695
    %v301 = vpow.pop %v300
    %v302 = vadd.f32 %v301, 1.0
    %v303 = vrcp.pop %v302
    %v304 = vmul.f32 1.0, %v303
    %v305 = vtanh.pop %v289
    %v306 = vxor.u32 %v291, 2147483648
    %v307 = vmul.f32 %v306, 1.442695
    %v308 = vpow.pop %v307
    %v309 = vadd.f32 %v308, 1.0
    %v310 = vrcp.pop %v309
    %v311 = vmul.f32 1.0, %v310
    %v312 = vmul.f32 %v304, %v146
    %v313 = vmul.f32 %v298, %v305
    %v314 = vadd.f32 %v312, %v313
    %v315 = vtanh.pop %v314
    %v316 = vmul.f32 %v311, %v315
    %317 = vst [vmem:[#allocation12] sm:$0xff] %v316
    %s318 = scalar_lea.vmem [#allocation4], 32
    %v319 = vld [vmem:[%s318] sm:$0xff]
    %v320 = vld [vmem:[%s318 + $0x8] sm:$0xff]
    %v321 = vld [vmem:[%s318 + $0x10] sm:$0xff]
    %v322 = vld [vmem:[%s318 + $0x18] sm:$0xff]
    %323 = vmatprep.subr.mxu0 %v142
    %324 = vmatpush1.msra.mxu0 %v141
    %325 = vmatprep.subr.mxu0 %v138
    %326 = vmatpush1.msra.mxu0 %v137
    %327 = vmatprep.subr.mxu0 %v134
    %328 = vmatpush1.msra.mxu0 %v133
    %329 = vmatprep.subr.mxu0 %v130
    %330 = vmatpush1.msra.mxu0 %v129
    %331 = vmatprep.subr.mxu0 %v126
    %332 = vmatpush1.msra.mxu0 %v125
    %333 = vmatprep.subr.mxu0 %v122
    %334 = vmatpush1.msra.mxu0 %v121
    %335 = vmatprep.subr.mxu0 %v118
    %336 = vmatpush1.msra.mxu0 %v117
    %337 = vmatprep.subr.mxu0 %v114
    %338 = vmatpush1.msra.mxu0 %v113
    %339 = vmatprep.subr.mxu0 %v110
    %340 = vmatpush1.msra.mxu0 %v109
    %341 = vmatprep.subr.mxu0 %v106
    %342 = vmatpush1.msra.mxu0 %v105
    %343 = vmatprep.subr.mxu0 %v102
    %344 = vmatpush1.msra.mxu0 %v101
    %345 = vmatprep.subr.mxu0 %v98
    %346 = vmatpush1.msra.mxu0 %v97
    %347 = vmatprep.subr.mxu0 %v94
    %348 = vmatpush1.msra.mxu0 %v93
    %349 = vmatprep.subr.mxu0 %v90
    %350 = vmatpush1.msra.mxu0 %v89
    %351 = vmatprep.subr.mxu0 %v86
    %352 = vmatpush1.msra.mxu0 %v85
    %353 = vmatprep.subr.mxu0 %v82
    %354 = vmatpush1.msra.mxu0 %v81
    %355 = vmatprep.subr.mxu0 0.0
    %356 = vmatpush2.msra.mxu0 0.0
    %357 = vmatprep.subr.mxu0 0.0
    %358 = vmatpush2.msra.mxu0 0.0
    %359 = vmatprep.subr.mxu0 0.0
    %360 = vmatpush2.msra.mxu0 0.0
    %361 = vmatprep.subr.mxu0 0.0
    %362 = vmatpush2.msra.mxu0 0.0
    %363 = vmatprep.subr.mxu0 0.0
    %364 = vmatpush2.msra.mxu0 0.0
    %365 = vmatprep.subr.mxu0 0.0
    %366 = vmatpush2.msra.mxu0 0.0
    %367 = vmatprep.subr.mxu0 0.0
    %368 = vmatpush2.msra.mxu0 0.0
    %369 = vmatprep.subr.mxu0 0.0
    %370 = vmatpush2.msra.mxu0 0.0
    %371 = vmatprep.subr.mxu0 0.0
    %372 = vmatpush2.msra.mxu0 0.0
    %373 = vmatprep.subr.mxu0 0.0
    %374 = vmatpush2.msra.mxu0 0.0
    %375 = vmatprep.subr.mxu0 0.0
    %376 = vmatpush2.msra.mxu0 0.0
    %377 = vmatprep.subr.mxu0 0.0
    %378 = vmatpush2.msra.mxu0 0.0
    %379 = vmatprep.subr.mxu0 0.0
    %380 = vmatpush2.msra.mxu0 0.0
    %381 = vmatprep.subr.mxu0 0.0
    %382 = vmatpush2.msra.mxu0 0.0
    %383 = vmatprep.subr.mxu0 0.0
    %384 = vmatpush2.msra.mxu0 0.0
    %385 = vmatprep.subr.mxu0 0.0
    %386 = vmatpush2.msra.mxu0 0.0
    %387 = vmatprep.mubr.f32.mxu0 0.0
    %388 = vmatmul.mubr.f32.gmra.mxu0 %v316
    %v389 = vpop.f32.mrf.mxu0
    %v390 = vadd.f32 %v319, %v389
    %v391 = vpop.f32.mrf.mxu0
    %v392 = vadd.f32 %v320, %v391
    %393 = vdwg.mxu0
    %394 = vmatprep.subr.mxu0 %v144
    %395 = vmatpush1.msra.mxu0 %v143
    %396 = vmatprep.subr.mxu0 %v140
    %397 = vmatpush1.msra.mxu0 %v139
    %398 = vmatprep.subr.mxu0 %v136
    %399 = vmatpush1.msra.mxu0 %v135
    %400 = vmatprep.subr.mxu0 %v132
    %401 = vmatpush1.msra.mxu0 %v131
    %402 = vmatprep.subr.mxu0 %v128
    %403 = vmatpush1.msra.mxu0 %v127
    %404 = vmatprep.subr.mxu0 %v124
    %405 = vmatpush1.msra.mxu0 %v123
    %406 = vmatprep.subr.mxu0 %v120
    %407 = vmatpush1.msra.mxu0 %v119
    %408 = vmatprep.subr.mxu0 %v116
    %409 = vmatpush1.msra.mxu0 %v115
    %410 = vmatprep.subr.mxu0 %v112
    %411 = vmatpush1.msra.mxu0 %v111
    %412 = vmatprep.subr.mxu0 %v108
    %413 = vmatpush1.msra.mxu0 %v107
    %414 = vmatprep.subr.mxu0 %v104
    %415 = vmatpush1.msra.mxu0 %v103
    %416 = vmatprep.subr.mxu0 %v100
    %417 = vmatpush1.msra.mxu0 %v99
    %418 = vmatprep.subr.mxu0 %v96
    %419 = vmatpush1.msra.mxu0 %v95
    %420 = vmatprep.subr.mxu0 %v92
    %421 = vmatpush1.msra.mxu0 %v91
    %422 = vmatprep.subr.mxu0 %v88
    %423 = vmatpush1.msra.mxu0 %v87
    %424 = vmatprep.subr.mxu0 %v84
    %425 = vmatpush1.msra.mxu0 %v83
    %426 = vmatprep.subr.mxu0 0.0
    %427 = vmatpush2.msra.mxu0 0.0
    %428 = vmatprep.subr.mxu0 0.0
    %429 = vmatpush2.msra.mxu0 0.0
    %430 = vmatprep.subr.mxu0 0.0
    %431 = vmatpush2.msra.mxu0 0.0
    %432 = vmatprep.subr.mxu0 0.0
    %433 = vmatpush2.msra.mxu0 0.0
    %434 = vmatprep.subr.mxu0 0.0
    %435 = vmatpush2.msra.mxu0 0.0
    %436 = vmatprep.subr.mxu0 0.0
    %437 = vmatpush2.msra.mxu0 0.0
    %438 = vmatprep.subr.mxu0 0.0
    %439 = vmatpush2.msra.mxu0 0.0
    %440 = vmatprep.subr.mxu0 0.0
    %441 = vmatpush2.msra.mxu0 0.0
    %442 = vmatprep.subr.mxu0 0.0
    %443 = vmatpush2.msra.mxu0 0.0
    %444 = vmatprep.subr.mxu0 0.0
    %445 = vmatpush2.msra.mxu0 0.0
    %446 = vmatprep.subr.mxu0 0.0
    %447 = vmatpush2.msra.mxu0 0.0
    %448 = vmatprep.subr.mxu0 0.0
    %449 = vmatpush2.msra.mxu0 0.0
    %450 = vmatprep.subr.mxu0 0.0
    %451 = vmatpush2.msra.mxu0 0.0
    %452 = vmatprep.subr.mxu0 0.0
    %453 = vmatpush2.msra.mxu0 0.0
    %454 = vmatprep.subr.mxu0 0.0
    %455 = vmatpush2.msra.mxu0 0.0
    %456 = vmatprep.subr.mxu0 0.0
    %457 = vmatpush2.msra.mxu0 0.0
    %458 = vmatprep.mubr.f32.mxu0 0.0
    %459 = vmatmul.mubr.f32.gmra.mxu0 %v316
    %v460 = vpop.f32.mrf.mxu0
    %v461 = vadd.f32 %v321, %v460
    %v462 = vpop.f32.mrf.mxu0
    %v463 = vadd.f32 %v322, %v462
    %464 = vdwg.mxu0
    %v465 = vxor.u32 %v390, 2147483648
    %v466 = vmul.f32 %v465, 1.442695
    %v467 = vpow.pop %v466
    %v468 = vadd.f32 %v467, 1.0
    %v469 = vrcp.pop %v468
    %v470 = vmul.f32 1.0, %v469
    %v471 = vxor.u32 %v392, 2147483648
    %v472 = vmul.f32 %v471, 1.442695
    %v473 = vpow.pop %v472
    %v474 = vadd.f32 %v473, 1.0
    %v475 = vrcp.pop %v474
    %v476 = vmul.f32 1.0, %v475
    %v477 = vtanh.pop %v461
    %v478 = vxor.u32 %v463, 2147483648
    %v479 = vmul.f32 %v478, 1.442695
    %v480 = vpow.pop %v479
    %v481 = vadd.f32 %v480, 1.0
    %v482 = vrcp.pop %v481
    %v483 = vmul.f32 1.0, %v482
    %v484 = vmul.f32 %v476, %v314
    %v485 = vmul.f32 %v470, %v477
    %v486 = vadd.f32 %v484, %v485
    %v487 = vtanh.pop %v486
    %v488 = vmul.f32 %v483, %v487
    %s489 = scalar_lea.vmem [#allocation12], 8
    %490 = vst [vmem:[%s489] sm:$0xff] %v488
    %s491 = scalar_lea.vmem [#allocation4], 64
    %v492 = vld [vmem:[%s491] sm:$0xff]
    %v493 = vld [vmem:[%s491 + $0x8] sm:$0xff]
    %v494 = vld [vmem:[%s491 + $0x10] sm:$0xff]
    %v495 = vld [vmem:[%s491 + $0x18] sm:$0xff]
    %496 = vmatprep.subr.mxu0 %v142
    %497 = vmatpush1.msra.mxu0 %v141
    %498 = vmatprep.subr.mxu0 %v138
    %499 = vmatpush1.msra.mxu0 %v137
    %500 = vmatprep.subr.mxu0 %v134
    %501 = vmatpush1.msra.mxu0 %v133
    %502 = vmatprep.subr.mxu0 %v130
    %503 = vmatpush1.msra.mxu0 %v129
    %504 = vmatprep.subr.mxu0 %v126
    %505 = vmatpush1.msra.mxu0 %v125
    %506 = vmatprep.subr.mxu0 %v122
    %507 = vmatpush1.msra.mxu0 %v121
    %508 = vmatprep.subr.mxu0 %v118
    %509 = vmatpush1.msra.mxu0 %v117
    %510 = vmatprep.subr.mxu0 %v114
    %511 = vmatpush1.msra.mxu0 %v113
    %512 = vmatprep.subr.mxu0 %v110
    %513 = vmatpush1.msra.mxu0 %v109
    %514 = vmatprep.subr.mxu0 %v106
    %515 = vmatpush1.msra.mxu0 %v105
    %516 = vmatprep.subr.mxu0 %v102
    %517 = vmatpush1.msra.mxu0 %v101
    %518 = vmatprep.subr.mxu0 %v98
    %519 = vmatpush1.msra.mxu0 %v97
    %520 = vmatprep.subr.mxu0 %v94
    %521 = vmatpush1.msra.mxu0 %v93
    %522 = vmatprep.subr.mxu0 %v90
    %523 = vmatpush1.msra.mxu0 %v89
    %524 = vmatprep.subr.mxu0 %v86
    %525 = vmatpush1.msra.mxu0 %v85
    %526 = vmatprep.subr.mxu0 %v82
    %527 = vmatpush1.msra.mxu0 %v81
    %528 = vmatprep.subr.mxu0 0.0
    %529 = vmatpush2.msra.mxu0 0.0
    %530 = vmatprep.subr.mxu0 0.0
    %531 = vmatpush2.msra.mxu0 0.0
    %532 = vmatprep.subr.mxu0 0.0
    %533 = vmatpush2.msra.mxu0 0.0
    %534 = vmatprep.subr.mxu0 0.0
    %535 = vmatpush2.msra.mxu0 0.0
    %536 = vmatprep.subr.mxu0 0.0
    %537 = vmatpush2.msra.mxu0 0.0
    %538 = vmatprep.subr.mxu0 0.0
    %539 = vmatpush2.msra.mxu0 0.0
    %540 = vmatprep.subr.mxu0 0.0
    %541 = vmatpush2.msra.mxu0 0.0
    %542 = vmatprep.subr.mxu0 0.0
    %543 = vmatpush2.msra.mxu0 0.0
    %544 = vmatprep.subr.mxu0 0.0
    %545 = vmatpush2.msra.mxu0 0.0
    %546 = vmatprep.subr.mxu0 0.0
    %547 = vmatpush2.msra.mxu0 0.0
    %548 = vmatprep.subr.mxu0 0.0
    %549 = vmatpush2.msra.mxu0 0.0
    %550 = vmatprep.subr.mxu0 0.0
    %551 = vmatpush2.msra.mxu0 0.0
    %552 = vmatprep.subr.mxu0 0.0
    %553 = vmatpush2.msra.mxu0 0.0
    %554 = vmatprep.subr.mxu0 0.0
    %555 = vmatpush2.msra.mxu0 0.0
    %556 = vmatprep.subr.mxu0 0.0
    %557 = vmatpush2.msra.mxu0 0.0
    %558 = vmatprep.subr.mxu0 0.0
    %559 = vmatpush2.msra.mxu0 0.0
    %560 = vmatprep.mubr.f32.mxu0 0.0
    %561 = vmatmul.mubr.f32.gmra.mxu0 %v488
    %v562 = vpop.f32.mrf.mxu0
    %v563 = vadd.f32 %v492, %v562
    %v564 = vpop.f32.mrf.mxu0
    %v565 = vadd.f32 %v493, %v564
    %566 = vdwg.mxu0
    %567 = vmatprep.subr.mxu0 %v144
    %568 = vmatpush1.msra.mxu0 %v143
    %569 = vmatprep.subr.mxu0 %v140
    %570 = vmatpush1.msra.mxu0 %v139
    %571 = vmatprep.subr.mxu0 %v136
    %572 = vmatpush1.msra.mxu0 %v135
    %573 = vmatprep.subr.mxu0 %v132
    %574 = vmatpush1.msra.mxu0 %v131
    %575 = vmatprep.subr.mxu0 %v128
    %576 = vmatpush1.msra.mxu0 %v127
    %577 = vmatprep.subr.mxu0 %v124
    %578 = vmatpush1.msra.mxu0 %v123
    %579 = vmatprep.subr.mxu0 %v120
    %580 = vmatpush1.msra.mxu0 %v119
    %581 = vmatprep.subr.mxu0 %v116
    %582 = vmatpush1.msra.mxu0 %v115
    %583 = vmatprep.subr.mxu0 %v112
    %584 = vmatpush1.msra.mxu0 %v111
    %585 = vmatprep.subr.mxu0 %v108
    %586 = vmatpush1.msra.mxu0 %v107
    %587 = vmatprep.subr.mxu0 %v104
    %588 = vmatpush1.msra.mxu0 %v103
    %589 = vmatprep.subr.mxu0 %v100
    %590 = vmatpush1.msra.mxu0 %v99
    %591 = vmatprep.subr.mxu0 %v96
    %592 = vmatpush1.msra.mxu0 %v95
    %593 = vmatprep.subr.mxu0 %v92
    %594 = vmatpush1.msra.mxu0 %v91
    %595 = vmatprep.subr.mxu0 %v88
    %596 = vmatpush1.msra.mxu0 %v87
    %597 = vmatprep.subr.mxu0 %v84
    %598 = vmatpush1.msra.mxu0 %v83
    %599 = vmatprep.subr.mxu0 0.0
    %600 = vmatpush2.msra.mxu0 0.0
    %601 = vmatprep.subr.mxu0 0.0
    %602 = vmatpush2.msra.mxu0 0.0
    %603 = vmatprep.subr.mxu0 0.0
    %604 = vmatpush2.msra.mxu0 0.0
    %605 = vmatprep.subr.mxu0 0.0
    %606 = vmatpush2.msra.mxu0 0.0
    %607 = vmatprep.subr.mxu0 0.0
    %608 = vmatpush2.msra.mxu0 0.0
    %609 = vmatprep.subr.mxu0 0.0
    %610 = vmatpush2.msra.mxu0 0.0
    %611 = vmatprep.subr.mxu0 0.0
    %612 = vmatpush2.msra.mxu0 0.0
    %613 = vmatprep.subr.mxu0 0.0
    %614 = vmatpush2.msra.mxu0 0.0
    %615 = vmatprep.subr.mxu0 0.0
    %616 = vmatpush2.msra.mxu0 0.0
    %617 = vmatprep.subr.mxu0 0.0
    %618 = vmatpush2.msra.mxu0 0.0
    %619 = vmatprep.subr.mxu0 0.0
    %620 = vmatpush2.msra.mxu0 0.0
    %621 = vmatprep.subr.mxu0 0.0
    %622 = vmatpush2.msra.mxu0 0.0
    %623 = vmatprep.subr.mxu0 0.0
    %624 = vmatpush2.msra.mxu0 0.0
    %625 = vmatprep.subr.mxu0 0.0
    %626 = vmatpush2.msra.mxu0 0.0
    %627 = vmatprep.subr.mxu0 0.0
    %628 = vmatpush2.msra.mxu0 0.0
    %629 = vmatprep.subr.mxu0 0.0
    %630 = vmatpush2.msra.mxu0 0.0
    %631 = vmatprep.mubr.f32.mxu0 0.0
    %632 = vmatmul.mubr.f32.gmra.mxu0 %v488
    %v633 = vpop.f32.mrf.mxu0
    %v634 = vadd.f32 %v494, %v633
    %v635 = vpop.f32.mrf.mxu0
    %v636 = vadd.f32 %v495, %v635
    %637 = vdwg.mxu0
    %v638 = vxor.u32 %v563, 2147483648
    %v639 = vmul.f32 %v638, 1.442695
    %v640 = vpow.pop %v639
    %v641 = vadd.f32 %v640, 1.0
    %v642 = vrcp.pop %v641
    %v643 = vmul.f32 1.0, %v642
    %v644 = vxor.u32 %v565, 2147483648
    %v645 = vmul.f32 %v644, 1.442695
    %v646 = vpow.pop %v645
    %v647 = vadd.f32 %v646, 1.0
    %v648 = vrcp.pop %v647
    %v649 = vmul.f32 1.0, %v648
    %v650 = vtanh.pop %v634
    %v651 = vxor.u32 %v636, 2147483648
    %v652 = vmul.f32 %v651, 1.442695
    %v653 = vpow.pop %v652
    %v654 = vadd.f32 %v653, 1.0
    %v655 = vrcp.pop %v654
    %v656 = vmul.f32 1.0, %v655
    %v657 = vmul.f32 %v649, %v486
    %v658 = vmul.f32 %v643, %v650
    %v659 = vadd.f32 %v657, %v658
    %v660 = vtanh.pop %v659
    %v661 = vmul.f32 %v656, %v660
    %s662 = scalar_lea.vmem [#allocation12], 16
    %663 = vst [vmem:[%s662] sm:$0xff] %v661
    %s664 = scalar_lea.vmem [#allocation4], 96
    %v665 = vld [vmem:[%s664] sm:$0xff]
    %v666 = vld [vmem:[%s664 + $0x8] sm:$0xff]
    %v667 = vld [vmem:[%s664 + $0x10] sm:$0xff]
    %v668 = vld [vmem:[%s664 + $0x18] sm:$0xff]
    %669 = vmatprep.subr.mxu0 %v142
    %670 = vmatpush1.msra.mxu0 %v141
    %671 = vmatprep.subr.mxu0 %v138
    %672 = vmatpush1.msra.mxu0 %v137
    %673 = vmatprep.subr.mxu0 %v134
    %674 = vmatpush1.msra.mxu0 %v133
    %675 = vmatprep.subr.mxu0 %v130
    %676 = vmatpush1.msra.mxu0 %v129
    %677 = vmatprep.subr.mxu0 %v126
    %678 = vmatpush1.msra.mxu0 %v125
    %679 = vmatprep.subr.mxu0 %v122
    %680 = vmatpush1.msra.mxu0 %v121
    %681 = vmatprep.subr.mxu0 %v118
    %682 = vmatpush1.msra.mxu0 %v117
    %683 = vmatprep.subr.mxu0 %v114
    %684 = vmatpush1.msra.mxu0 %v113
    %685 = vmatprep.subr.mxu0 %v110
    %686 = vmatpush1.msra.mxu0 %v109
    %687 = vmatprep.subr.mxu0 %v106
    %688 = vmatpush1.msra.mxu0 %v105
    %689 = vmatprep.subr.mxu0 %v102
    %690 = vmatpush1.msra.mxu0 %v101
    %691 = vmatprep.subr.mxu0 %v98
    %692 = vmatpush1.msra.mxu0 %v97
    %693 = vmatprep.subr.mxu0 %v94
    %694 = vmatpush1.msra.mxu0 %v93
    %695 = vmatprep.subr.mxu0 %v90
    %696 = vmatpush1.msra.mxu0 %v89
    %697 = vmatprep.subr.mxu0 %v86
    %698 = vmatpush1.msra.mxu0 %v85
    %699 = vmatprep.subr.mxu0 %v82
    %700 = vmatpush1.msra.mxu0 %v81
    %701 = vmatprep.subr.mxu0 0.0
    %702 = vmatpush2.msra.mxu0 0.0
    %703 = vmatprep.subr.mxu0 0.0
    %704 = vmatpush2.msra.mxu0 0.0
    %705 = vmatprep.subr.mxu0 0.0
    %706 = vmatpush2.msra.mxu0 0.0
    %707 = vmatprep.subr.mxu0 0.0
    %708 = vmatpush2.msra.mxu0 0.0
    %709 = vmatprep.subr.mxu0 0.0
    %710 = vmatpush2.msra.mxu0 0.0
    %711 = vmatprep.subr.mxu0 0.0
    %712 = vmatpush2.msra.mxu0 0.0
    %713 = vmatprep.subr.mxu0 0.0
    %714 = vmatpush2.msra.mxu0 0.0
    %715 = vmatprep.subr.mxu0 0.0
    %716 = vmatpush2.msra.mxu0 0.0
    %717 = vmatprep.subr.mxu0 0.0
    %718 = vmatpush2.msra.mxu0 0.0
    %719 = vmatprep.subr.mxu0 0.0
    %720 = vmatpush2.msra.mxu0 0.0
    %721 = vmatprep.subr.mxu0 0.0
    %722 = vmatpush2.msra.mxu0 0.0
    %723 = vmatprep.subr.mxu0 0.0
    %724 = vmatpush2.msra.mxu0 0.0
    %725 = vmatprep.subr.mxu0 0.0
    %726 = vmatpush2.msra.mxu0 0.0
    %727 = vmatprep.subr.mxu0 0.0
    %728 = vmatpush2.msra.mxu0 0.0
    %729 = vmatprep.subr.mxu0 0.0
    %730 = vmatpush2.msra.mxu0 0.0
    %731 = vmatprep.subr.mxu0 0.0
    %732 = vmatpush2.msra.mxu0 0.0
    %733 = vmatprep.mubr.f32.mxu0 0.0
    %734 = vmatmul.mubr.f32.gmra.mxu0 %v661
    %v735 = vpop.f32.mrf.mxu0
    %v736 = vadd.f32 %v665, %v735
    %v737 = vpop.f32.mrf.mxu0
    %v738 = vadd.f32 %v666, %v737
    %739 = vdwg.mxu0
    %740 = vmatprep.subr.mxu0 %v144
    %741 = vmatpush1.msra.mxu0 %v143
    %742 = vmatprep.subr.mxu0 %v140
    %743 = vmatpush1.msra.mxu0 %v139
    %744 = vmatprep.subr.mxu0 %v136
    %745 = vmatpush1.msra.mxu0 %v135
    %746 = vmatprep.subr.mxu0 %v132
    %747 = vmatpush1.msra.mxu0 %v131
    %748 = vmatprep.subr.mxu0 %v128
    %749 = vmatpush1.msra.mxu0 %v127
    %750 = vmatprep.subr.mxu0 %v124
    %751 = vmatpush1.msra.mxu0 %v123
    %752 = vmatprep.subr.mxu0 %v120
    %753 = vmatpush1.msra.mxu0 %v119
    %754 = vmatprep.subr.mxu0 %v116
    %755 = vmatpush1.msra.mxu0 %v115
    %756 = vmatprep.subr.mxu0 %v112
    %757 = vmatpush1.msra.mxu0 %v111
    %758 = vmatprep.subr.mxu0 %v108
    %759 = vmatpush1.msra.mxu0 %v107
    %760 = vmatprep.subr.mxu0 %v104
    %761 = vmatpush1.msra.mxu0 %v103
    %762 = vmatprep.subr.mxu0 %v100
    %763 = vmatpush1.msra.mxu0 %v99
    %764 = vmatprep.subr.mxu0 %v96
    %765 = vmatpush1.msra.mxu0 %v95
    %766 = vmatprep.subr.mxu0 %v92
    %767 = vmatpush1.msra.mxu0 %v91
    %768 = vmatprep.subr.mxu0 %v88
    %769 = vmatpush1.msra.mxu0 %v87
    %770 = vmatprep.subr.mxu0 %v84
    %771 = vmatpush1.msra.mxu0 %v83
    %772 = vmatprep.subr.mxu0 0.0
    %773 = vmatpush2.msra.mxu0 0.0
    %774 = vmatprep.subr.mxu0 0.0
    %775 = vmatpush2.msra.mxu0 0.0
    %776 = vmatprep.subr.mxu0 0.0
    %777 = vmatpush2.msra.mxu0 0.0
    %778 = vmatprep.subr.mxu0 0.0
    %779 = vmatpush2.msra.mxu0 0.0
    %780 = vmatprep.subr.mxu0 0.0
    %781 = vmatpush2.msra.mxu0 0.0
    %782 = vmatprep.subr.mxu0 0.0
    %783 = vmatpush2.msra.mxu0 0.0
    %784 = vmatprep.subr.mxu0 0.0
    %785 = vmatpush2.msra.mxu0 0.0
    %786 = vmatprep.subr.mxu0 0.0
    %787 = vmatpush2.msra.mxu0 0.0
    %788 = vmatprep.subr.mxu0 0.0
    %789 = vmatpush2.msra.mxu0 0.0
    %790 = vmatprep.subr.mxu0 0.0
    %791 = vmatpush2.msra.mxu0 0.0
    %792 = vmatprep.subr.mxu0 0.0
    %793 = vmatpush2.msra.mxu0 0.0
    %794 = vmatprep.subr.mxu0 0.0
    %795 = vmatpush2.msra.mxu0 0.0
    %796 = vmatprep.subr.mxu0 0.0
    %797 = vmatpush2.msra.mxu0 0.0
    %798 = vmatprep.subr.mxu0 0.0
    %799 = vmatpush2.msra.mxu0 0.0
    %800 = vmatprep.subr.mxu0 0.0
    %801 = vmatpush2.msra.mxu0 0.0
    %802 = vmatprep.subr.mxu0 0.0
    %803 = vmatpush2.msra.mxu0 0.0
    %804 = vmatprep.mubr.f32.mxu0 0.0
    %805 = vmatmul.mubr.f32.gmra.mxu0 %v661
    %v806 = vpop.f32.mrf.mxu0
    %v807 = vadd.f32 %v667, %v806
    %v808 = vpop.f32.mrf.mxu0
    %v809 = vadd.f32 %v668, %v808
    %810 = vdwg.mxu0
    %v811 = vxor.u32 %v736, 2147483648
    %v812 = vmul.f32 %v811, 1.442695
    %v813 = vpow.pop %v812
    %v814 = vadd.f32 %v813, 1.0
    %v815 = vrcp.pop %v814
    %v816 = vmul.f32 1.0, %v815
    %v817 = vxor.u32 %v738, 2147483648
    %v818 = vmul.f32 %v817, 1.442695
    %v819 = vpow.pop %v818
    %v820 = vadd.f32 %v819, 1.0
    %v821 = vrcp.pop %v820
    %v822 = vmul.f32 1.0, %v821
    %v823 = vtanh.pop %v807
    %v824 = vxor.u32 %v809, 2147483648
    %v825 = vmul.f32 %v824, 1.442695
    %v826 = vpow.pop %v825
    %v827 = vadd.f32 %v826, 1.0
    %v828 = vrcp.pop %v827
    %v829 = vmul.f32 1.0, %v828
    %v830 = vmul.f32 %v822, %v659
    %v831 = vmul.f32 %v816, %v823
    %v832 = vadd.f32 %v830, %v831
    %v833 = vtanh.pop %v832
    %v834 = vmul.f32 %v829, %v833
    %s835 = scalar_lea.vmem [#allocation12], 24
    %836 = vst [vmem:[%s835] sm:$0xff] %v834
    %s837 = scalar_lea.vmem [#allocation4], 128
    %v838 = vld [vmem:[%s837] sm:$0xff]
    %v839 = vld [vmem:[%s837 + $0x8] sm:$0xff]
    %v840 = vld [vmem:[%s837 + $0x10] sm:$0xff]
    %v841 = vld [vmem:[%s837 + $0x18] sm:$0xff]
    %842 = vmatprep.subr.mxu0 %v142
    %843 = vmatpush1.msra.mxu0 %v141
    %844 = vmatprep.subr.mxu0 %v138
    %845 = vmatpush1.msra.mxu0 %v137
    %846 = vmatprep.subr.mxu0 %v134
    %847 = vmatpush1.msra.mxu0 %v133
    %848 = vmatprep.subr.mxu0 %v130
    %849 = vmatpush1.msra.mxu0 %v129
    %850 = vmatprep.subr.mxu0 %v126
    %851 = vmatpush1.msra.mxu0 %v125
    %852 = vmatprep.subr.mxu0 %v122
    %853 = vmatpush1.msra.mxu0 %v121
    %854 = vmatprep.subr.mxu0 %v118
    %855 = vmatpush1.msra.mxu0 %v117
    %856 = vmatprep.subr.mxu0 %v114
    %857 = vmatpush1.msra.mxu0 %v113
    %858 = vmatprep.subr.mxu0 %v110
    %859 = vmatpush1.msra.mxu0 %v109
    %860 = vmatprep.subr.mxu0 %v106
    %861 = vmatpush1.msra.mxu0 %v105
    %862 = vmatprep.subr.mxu0 %v102
    %863 = vmatpush1.msra.mxu0 %v101
    %864 = vmatprep.subr.mxu0 %v98
    %865 = vmatpush1.msra.mxu0 %v97
    %866 = vmatprep.subr.mxu0 %v94
    %867 = vmatpush1.msra.mxu0 %v93
    %868 = vmatprep.subr.mxu0 %v90
    %869 = vmatpush1.msra.mxu0 %v89
    %870 = vmatprep.subr.mxu0 %v86
    %871 = vmatpush1.msra.mxu0 %v85
    %872 = vmatprep.subr.mxu0 %v82
    %873 = vmatpush1.msra.mxu0 %v81
    %874 = vmatprep.subr.mxu0 0.0
    %875 = vmatpush2.msra.mxu0 0.0
    %876 = vmatprep.subr.mxu0 0.0
    %877 = vmatpush2.msra.mxu0 0.0
    %878 = vmatprep.subr.mxu0 0.0
    %879 = vmatpush2.msra.mxu0 0.0
    %880 = vmatprep.subr.mxu0 0.0
    %881 = vmatpush2.msra.mxu0 0.0
    %882 = vmatprep.subr.mxu0 0.0
    %883 = vmatpush2.msra.mxu0 0.0
    %884 = vmatprep.subr.mxu0 0.0
    %885 = vmatpush2.msra.mxu0 0.0
    %886 = vmatprep.subr.mxu0 0.0
    %887 = vmatpush2.msra.mxu0 0.0
    %888 = vmatprep.subr.mxu0 0.0
    %889 = vmatpush2.msra.mxu0 0.0
    %890 = vmatprep.subr.mxu0 0.0
    %891 = vmatpush2.msra.mxu0 0.0
    %892 = vmatprep.subr.mxu0 0.0
    %893 = vmatpush2.msra.mxu0 0.0
    %894 = vmatprep.subr.mxu0 0.0
    %895 = vmatpush2.msra.mxu0 0.0
    %896 = vmatprep.subr.mxu0 0.0
    %897 = vmatpush2.msra.mxu0 0.0
    %898 = vmatprep.subr.mxu0 0.0
    %899 = vmatpush2.msra.mxu0 0.0
    %900 = vmatprep.subr.mxu0 0.0
    %901 = vmatpush2.msra.mxu0 0.0
    %902 = vmatprep.subr.mxu0 0.0
    %903 = vmatpush2.msra.mxu0 0.0
    %904 = vmatprep.subr.mxu0 0.0
    %905 = vmatpush2.msra.mxu0 0.0
    %906 = vmatprep.mubr.f32.mxu0 0.0
    %907 = vmatmul.mubr.f32.gmra.mxu0 %v834
    %v908 = vpop.f32.mrf.mxu0
    %v909 = vadd.f32 %v838, %v908
    %v910 = vpop.f32.mrf.mxu0
    %v911 = vadd.f32 %v839, %v910
    %912 = vdwg.mxu0
    %913 = vmatprep.subr.mxu0 %v144
    %914 = vmatpush1.msra.mxu0 %v143
    %915 = vmatprep.subr.mxu0 %v140
    %916 = vmatpush1.msra.mxu0 %v139
    %917 = vmatprep.subr.mxu0 %v136
    %918 = vmatpush1.msra.mxu0 %v135
    %919 = vmatprep.subr.mxu0 %v132
    %920 = vmatpush1.msra.mxu0 %v131
    %921 = vmatprep.subr.mxu0 %v128
    %922 = vmatpush1.msra.mxu0 %v127
    %923 = vmatprep.subr.mxu0 %v124
    %924 = vmatpush1.msra.mxu0 %v123
    %925 = vmatprep.subr.mxu0 %v120
    %926 = vmatpush1.msra.mxu0 %v119
    %927 = vmatprep.subr.mxu0 %v116
    %928 = vmatpush1.msra.mxu0 %v115
    %929 = vmatprep.subr.mxu0 %v112
    %930 = vmatpush1.msra.mxu0 %v111
    %931 = vmatprep.subr.mxu0 %v108
    %932 = vmatpush1.msra.mxu0 %v107
    %933 = vmatprep.subr.mxu0 %v104
    %934 = vmatpush1.msra.mxu0 %v103
    %935 = vmatprep.subr.mxu0 %v100
    %936 = vmatpush1.msra.mxu0 %v99
    %937 = vmatprep.subr.mxu0 %v96
    %938 = vmatpush1.msra.mxu0 %v95
    %939 = vmatprep.subr.mxu0 %v92
    %940 = vmatpush1.msra.mxu0 %v91
    %941 = vmatprep.subr.mxu0 %v88
    %942 = vmatpush1.msra.mxu0 %v87
    %943 = vmatprep.subr.mxu0 %v84
    %944 = vmatpush1.msra.mxu0 %v83
    %945 = vmatprep.subr.mxu0 0.0
    %946 = vmatpush2.msra.mxu0 0.0
    %947 = vmatprep.subr.mxu0 0.0
    %948 = vmatpush2.msra.mxu0 0.0
    %949 = vmatprep.subr.mxu0 0.0
    %950 = vmatpush2.msra.mxu0 0.0
    %951 = vmatprep.subr.mxu0 0.0
    %952 = vmatpush2.msra.mxu0 0.0
    %953 = vmatprep.subr.mxu0 0.0
    %954 = vmatpush2.msra.mxu0 0.0
    %955 = vmatprep.subr.mxu0 0.0
    %956 = vmatpush2.msra.mxu0 0.0
    %957 = vmatprep.subr.mxu0 0.0
    %958 = vmatpush2.msra.mxu0 0.0
    %959 = vmatprep.subr.mxu0 0.0
    %960 = vmatpush2.msra.mxu0 0.0
    %961 = vmatprep.subr.mxu0 0.0
    %962 = vmatpush2.msra.mxu0 0.0
    %963 = vmatprep.subr.mxu0 0.0
    %964 = vmatpush2.msra.mxu0 0.0
    %965 = vmatprep.subr.mxu0 0.0
    %966 = vmatpush2.msra.mxu0 0.0
    %967 = vmatprep.subr.mxu0 0.0
    %968 = vmatpush2.msra.mxu0 0.0
    %969 = vmatprep.subr.mxu0 0.0
    %970 = vmatpush2.msra.mxu0 0.0
    %971 = vmatprep.subr.mxu0 0.0
    %972 = vmatpush2.msra.mxu0 0.0
    %973 = vmatprep.subr.mxu0 0.0
    %974 = vmatpush2.msra.mxu0 0.0
    %975 = vmatprep.subr.mxu0 0.0
    %976 = vmatpush2.msra.mxu0 0.0
    %977 = vmatprep.mubr.f32.mxu0 0.0
    %978 = vmatmul.mubr.f32.gmra.mxu0 %v834
    %v979 = vpop.f32.mrf.mxu0
    %v980 = vadd.f32 %v840, %v979
    %v981 = vpop.f32.mrf.mxu0
    %v982 = vadd.f32 %v841, %v981
    %983 = vdwg.mxu0
    %v984 = vxor.u32 %v909, 2147483648
    %v985 = vmul.f32 %v984, 1.442695
    %v986 = vpow.pop %v985
    %v987 = vadd.f32 %v986, 1.0
    %v988 = vrcp.pop %v987
    %v989 = vmul.f32 1.0, %v988
    %v990 = vxor.u32 %v911, 2147483648
    %v991 = vmul.f32 %v990, 1.442695
    %v992 = vpow.pop %v991
    %v993 = vadd.f32 %v992, 1.0
    %v994 = vrcp.pop %v993
    %v995 = vmul.f32 1.0, %v994
    %v996 = vtanh.pop %v980
    %v997 = vxor.u32 %v982, 2147483648
    %v998 = vmul.f32 %v997, 1.442695
    %v999 = vpow.pop %v998
    %v1000 = vadd.f32 %v999, 1.0
    %v1001 = vrcp.pop %v1000
    %v1002 = vmul.f32 1.0, %v1001
    %v1003 = vmul.f32 %v995, %v832
    %v1004 = vmul.f32 %v989, %v996
    %v1005 = vadd.f32 %v1003, %v1004
    %v1006 = vtanh.pop %v1005
    %v1007 = vmul.f32 %v1002, %v1006
    %s1008 = scalar_lea.vmem [#allocation12], 32
    %1009 = vst [vmem:[%s1008] sm:$0xff] %v1007
    %s1010 = scalar_lea.vmem [#allocation4], 160
    %v1011 = vld [vmem:[%s1010] sm:$0xff]
    %v1012 = vld [vmem:[%s1010 + $0x8] sm:$0xff]
    %v1013 = vld [vmem:[%s1010 + $0x10] sm:$0xff]
    %v1014 = vld [vmem:[%s1010 + $0x18] sm:$0xff]
    %1015 = vmatprep.subr.mxu0 %v142
    %1016 = vmatpush1.msra.mxu0 %v141
    %1017 = vmatprep.subr.mxu0 %v138
    %1018 = vmatpush1.msra.mxu0 %v137
    %1019 = vmatprep.subr.mxu0 %v134
    %1020 = vmatpush1.msra.mxu0 %v133
    %1021 = vmatprep.subr.mxu0 %v130
    %1022 = vmatpush1.msra.mxu0 %v129
    %1023 = vmatprep.subr.mxu0 %v126
    %1024 = vmatpush1.msra.mxu0 %v125
    %1025 = vmatprep.subr.mxu0 %v122
    %1026 = vmatpush1.msra.mxu0 %v121
    %1027 = vmatprep.subr.mxu0 %v118
    %1028 = vmatpush1.msra.mxu0 %v117
    %1029 = vmatprep.subr.mxu0 %v114
    %1030 = vmatpush1.msra.mxu0 %v113
    %1031 = vmatprep.subr.mxu0 %v110
    %1032 = vmatpush1.msra.mxu0 %v109
    %1033 = vmatprep.subr.mxu0 %v106
    %1034 = vmatpush1.msra.mxu0 %v105
    %1035 = vmatprep.subr.mxu0 %v102
    %1036 = vmatpush1.msra.mxu0 %v101
    %1037 = vmatprep.subr.mxu0 %v98
    %1038 = vmatpush1.msra.mxu0 %v97
    %1039 = vmatprep.subr.mxu0 %v94
    %1040 = vmatpush1.msra.mxu0 %v93
    %1041 = vmatprep.subr.mxu0 %v90
    %1042 = vmatpush1.msra.mxu0 %v89
    %1043 = vmatprep.subr.mxu0 %v86
    %1044 = vmatpush1.msra.mxu0 %v85
    %1045 = vmatprep.subr.mxu0 %v82
    %1046 = vmatpush1.msra.mxu0 %v81
    %1047 = vmatprep.subr.mxu0 0.0
    %1048 = vmatpush2.msra.mxu0 0.0
    %1049 = vmatprep.subr.mxu0 0.0
    %1050 = vmatpush2.msra.mxu0 0.0
    %1051 = vmatprep.subr.mxu0 0.0
    %1052 = vmatpush2.msra.mxu0 0.0
    %1053 = vmatprep.subr.mxu0 0.0
    %1054 = vmatpush2.msra.mxu0 0.0
    %1055 = vmatprep.subr.mxu0 0.0
    %1056 = vmatpush2.msra.mxu0 0.0
    %1057 = vmatprep.subr.mxu0 0.0
    %1058 = vmatpush2.msra.mxu0 0.0
    %1059 = vmatprep.subr.mxu0 0.0
    %1060 = vmatpush2.msra.mxu0 0.0
    %1061 = vmatprep.subr.mxu0 0.0
    %1062 = vmatpush2.msra.mxu0 0.0
    %1063 = vmatprep.subr.mxu0 0.0
    %1064 = vmatpush2.msra.mxu0 0.0
    %1065 = vmatprep.subr.mxu0 0.0
    %1066 = vmatpush2.msra.mxu0 0.0
    %1067 = vmatprep.subr.mxu0 0.0
    %1068 = vmatpush2.msra.mxu0 0.0
    %1069 = vmatprep.subr.mxu0 0.0
    %1070 = vmatpush2.msra.mxu0 0.0
    %1071 = vmatprep.subr.mxu0 0.0
    %1072 = vmatpush2.msra.mxu0 0.0
    %1073 = vmatprep.subr.mxu0 0.0
    %1074 = vmatpush2.msra.mxu0 0.0
    %1075 = vmatprep.subr.mxu0 0.0
    %1076 = vmatpush2.msra.mxu0 0.0
    %1077 = vmatprep.subr.mxu0 0.0
    %1078 = vmatpush2.msra.mxu0 0.0
    %1079 = vmatprep.mubr.f32.mxu0 0.0
    %1080 = vmatmul.mubr.f32.gmra.mxu0 %v1007
    %v1081 = vpop.f32.mrf.mxu0
    %v1082 = vadd.f32 %v1011, %v1081
    %v1083 = vpop.f32.mrf.mxu0
    %v1084 = vadd.f32 %v1012, %v1083
    %1085 = vdwg.mxu0
    %1086 = vmatprep.subr.mxu0 %v144
    %1087 = vmatpush1.msra.mxu0 %v143
    %1088 = vmatprep.subr.mxu0 %v140
    %1089 = vmatpush1.msra.mxu0 %v139
    %1090 = vmatprep.subr.mxu0 %v136
    %1091 = vmatpush1.msra.mxu0 %v135
    %1092 = vmatprep.subr.mxu0 %v132
    %1093 = vmatpush1.msra.mxu0 %v131
    %1094 = vmatprep.subr.mxu0 %v128
    %1095 = vmatpush1.msra.mxu0 %v127
    %1096 = vmatprep.subr.mxu0 %v124
    %1097 = vmatpush1.msra.mxu0 %v123
    %1098 = vmatprep.subr.mxu0 %v120
    %1099 = vmatpush1.msra.mxu0 %v119
    %1100 = vmatprep.subr.mxu0 %v116
    %1101 = vmatpush1.msra.mxu0 %v115
    %1102 = vmatprep.subr.mxu0 %v112
    %1103 = vmatpush1.msra.mxu0 %v111
    %1104 = vmatprep.subr.mxu0 %v108
    %1105 = vmatpush1.msra.mxu0 %v107
    %1106 = vmatprep.subr.mxu0 %v104
    %1107 = vmatpush1.msra.mxu0 %v103
    %1108 = vmatprep.subr.mxu0 %v100
    %1109 = vmatpush1.msra.mxu0 %v99
    %1110 = vmatprep.subr.mxu0 %v96
    %1111 = vmatpush1.msra.mxu0 %v95
    %1112 = vmatprep.subr.mxu0 %v92
    %1113 = vmatpush1.msra.mxu0 %v91
    %1114 = vmatprep.subr.mxu0 %v88
    %1115 = vmatpush1.msra.mxu0 %v87
    %1116 = vmatprep.subr.mxu0 %v84
    %1117 = vmatpush1.msra.mxu0 %v83
    %1118 = vmatprep.subr.mxu0 0.0
    %1119 = vmatpush2.msra.mxu0 0.0
    %1120 = vmatprep.subr.mxu0 0.0
    %1121 = vmatpush2.msra.mxu0 0.0
    %1122 = vmatprep.subr.mxu0 0.0
    %1123 = vmatpush2.msra.mxu0 0.0
    %1124 = vmatprep.subr.mxu0 0.0
    %1125 = vmatpush2.msra.mxu0 0.0
    %1126 = vmatprep.subr.mxu0 0.0
    %1127 = vmatpush2.msra.mxu0 0.0
    %1128 = vmatprep.subr.mxu0 0.0
    %1129 = vmatpush2.msra.mxu0 0.0
    %1130 = vmatprep.subr.mxu0 0.0
    %1131 = vmatpush2.msra.mxu0 0.0
    %1132 = vmatprep.subr.mxu0 0.0
    %1133 = vmatpush2.msra.mxu0 0.0
    %1134 = vmatprep.subr.mxu0 0.0
    %1135 = vmatpush2.msra.mxu0 0.0
    %1136 = vmatprep.subr.mxu0 0.0
    %1137 = vmatpush2.msra.mxu0 0.0
    %1138 = vmatprep.subr.mxu0 0.0
    %1139 = vmatpush2.msra.mxu0 0.0
    %1140 = vmatprep.subr.mxu0 0.0
    %1141 = vmatpush2.msra.mxu0 0.0
    %1142 = vmatprep.subr.mxu0 0.0
    %1143 = vmatpush2.msra.mxu0 0.0
    %1144 = vmatprep.subr.mxu0 0.0
    %1145 = vmatpush2.msra.mxu0 0.0
    %1146 = vmatprep.subr.mxu0 0.0
    %1147 = vmatpush2.msra.mxu0 0.0
    %1148 = vmatprep.subr.mxu0 0.0
    %1149 = vmatpush2.msra.mxu0 0.0
    %1150 = vmatprep.mubr.f32.mxu0 0.0
    %1151 = vmatmul.mubr.f32.gmra.mxu0 %v1007
    %v1152 = vpop.f32.mrf.mxu0
    %v1153 = vadd.f32 %v1013, %v1152
    %v1154 = vpop.f32.mrf.mxu0
    %v1155 = vadd.f32 %v1014, %v1154
    %1156 = vdwg.mxu0
    %v1157 = vxor.u32 %v1082, 2147483648
    %v1158 = vmul.f32 %v1157, 1.442695
    %v1159 = vpow.pop %v1158
    %v1160 = vadd.f32 %v1159, 1.0
    %v1161 = vrcp.pop %v1160
    %v1162 = vmul.f32 1.0, %v1161
    %v1163 = vxor.u32 %v1084, 2147483648
    %v1164 = vmul.f32 %v1163, 1.442695
    %v1165 = vpow.pop %v1164
    %v1166 = vadd.f32 %v1165, 1.0
    %v1167 = vrcp.pop %v1166
    %v1168 = vmul.f32 1.0, %v1167
    %v1169 = vtanh.pop %v1153
    %v1170 = vxor.u32 %v1155, 2147483648
    %v1171 = vmul.f32 %v1170, 1.442695
    %v1172 = vpow.pop %v1171
    %v1173 = vadd.f32 %v1172, 1.0
    %v1174 = vrcp.pop %v1173
    %v1175 = vmul.f32 1.0, %v1174
    %v1176 = vmul.f32 %v1168, %v1005
    %v1177 = vmul.f32 %v1162, %v1169
    %v1178 = vadd.f32 %v1176, %v1177
    %v1179 = vtanh.pop %v1178
    %v1180 = vmul.f32 %v1175, %v1179
    %s1181 = scalar_lea.vmem [#allocation12], 40
    %1182 = vst [vmem:[%s1181] sm:$0xff] %v1180
    %s1183 = scalar_lea.vmem [#allocation4], 192
    %v1184 = vld [vmem:[%s1183] sm:$0xff]
    %v1185 = vld [vmem:[%s1183 + $0x8] sm:$0xff]
    %v1186 = vld [vmem:[%s1183 + $0x10] sm:$0xff]
    %v1187 = vld [vmem:[%s1183 + $0x18] sm:$0xff]
    %1188 = vmatprep.subr.mxu0 %v142
    %1189 = vmatpush1.msra.mxu0 %v141
    %1190 = vmatprep.subr.mxu0 %v138
    %1191 = vmatpush1.msra.mxu0 %v137
    %1192 = vmatprep.subr.mxu0 %v134
    %1193 = vmatpush1.msra.mxu0 %v133
    %1194 = vmatprep.subr.mxu0 %v130
    %1195 = vmatpush1.msra.mxu0 %v129
    %1196 = vmatprep.subr.mxu0 %v126
    %1197 = vmatpush1.msra.mxu0 %v125
    %1198 = vmatprep.subr.mxu0 %v122
    %1199 = vmatpush1.msra.mxu0 %v121
    %1200 = vmatprep.subr.mxu0 %v118
    %1201 = vmatpush1.msra.mxu0 %v117
    %1202 = vmatprep.subr.mxu0 %v114
    %1203 = vmatpush1.msra.mxu0 %v113
    %1204 = vmatprep.subr.mxu0 %v110
    %1205 = vmatpush1.msra.mxu0 %v109
    %1206 = vmatprep.subr.mxu0 %v106
    %1207 = vmatpush1.msra.mxu0 %v105
    %1208 = vmatprep.subr.mxu0 %v102
    %1209 = vmatpush1.msra.mxu0 %v101
    %1210 = vmatprep.subr.mxu0 %v98
    %1211 = vmatpush1.msra.mxu0 %v97
    %1212 = vmatprep.subr.mxu0 %v94
    %1213 = vmatpush1.msra.mxu0 %v93
    %1214 = vmatprep.subr.mxu0 %v90
    %1215 = vmatpush1.msra.mxu0 %v89
    %1216 = vmatprep.subr.mxu0 %v86
    %1217 = vmatpush1.msra.mxu0 %v85
    %1218 = vmatprep.subr.mxu0 %v82
    %1219 = vmatpush1.msra.mxu0 %v81
    %1220 = vmatprep.subr.mxu0 0.0
    %1221 = vmatpush2.msra.mxu0 0.0
    %1222 = vmatprep.subr.mxu0 0.0
    %1223 = vmatpush2.msra.mxu0 0.0
    %1224 = vmatprep.subr.mxu0 0.0
    %1225 = vmatpush2.msra.mxu0 0.0
    %1226 = vmatprep.subr.mxu0 0.0
    %1227 = vmatpush2.msra.mxu0 0.0
    %1228 = vmatprep.subr.mxu0 0.0
    %1229 = vmatpush2.msra.mxu0 0.0
    %1230 = vmatprep.subr.mxu0 0.0
    %1231 = vmatpush2.msra.mxu0 0.0
    %1232 = vmatprep.subr.mxu0 0.0
    %1233 = vmatpush2.msra.mxu0 0.0
    %1234 = vmatprep.subr.mxu0 0.0
    %1235 = vmatpush2.msra.mxu0 0.0
    %1236 = vmatprep.subr.mxu0 0.0
    %1237 = vmatpush2.msra.mxu0 0.0
    %1238 = vmatprep.subr.mxu0 0.0
    %1239 = vmatpush2.msra.mxu0 0.0
    %1240 = vmatprep.subr.mxu0 0.0
    %1241 = vmatpush2.msra.mxu0 0.0
    %1242 = vmatprep.subr.mxu0 0.0
    %1243 = vmatpush2.msra.mxu0 0.0
    %1244 = vmatprep.subr.mxu0 0.0
    %1245 = vmatpush2.msra.mxu0 0.0
    %1246 = vmatprep.subr.mxu0 0.0
    %1247 = vmatpush2.msra.mxu0 0.0
    %1248 = vmatprep.subr.mxu0 0.0
    %1249 = vmatpush2.msra.mxu0 0.0
    %1250 = vmatprep.subr.mxu0 0.0
    %1251 = vmatpush2.msra.mxu0 0.0
    %1252 = vmatprep.mubr.f32.mxu0 0.0
    %1253 = vmatmul.mubr.f32.gmra.mxu0 %v1180
    %v1254 = vpop.f32.mrf.mxu0
    %v1255 = vadd.f32 %v1184, %v1254
    %v1256 = vpop.f32.mrf.mxu0
    %v1257 = vadd.f32 %v1185, %v1256
    %1258 = vdwg.mxu0
    %1259 = vmatprep.subr.mxu0 %v144
    %1260 = vmatpush1.msra.mxu0 %v143
    %1261 = vmatprep.subr.mxu0 %v140
    %1262 = vmatpush1.msra.mxu0 %v139
    %1263 = vmatprep.subr.mxu0 %v136
    %1264 = vmatpush1.msra.mxu0 %v135
    %1265 = vmatprep.subr.mxu0 %v132
    %1266 = vmatpush1.msra.mxu0 %v131
    %1267 = vmatprep.subr.mxu0 %v128
    %1268 = vmatpush1.msra.mxu0 %v127
    %1269 = vmatprep.subr.mxu0 %v124
    %1270 = vmatpush1.msra.mxu0 %v123
    %1271 = vmatprep.subr.mxu0 %v120
    %1272 = vmatpush1.msra.mxu0 %v119
    %1273 = vmatprep.subr.mxu0 %v116
    %1274 = vmatpush1.msra.mxu0 %v115
    %1275 = vmatprep.subr.mxu0 %v112
    %1276 = vmatpush1.msra.mxu0 %v111
    %1277 = vmatprep.subr.mxu0 %v108
    %1278 = vmatpush1.msra.mxu0 %v107
    %1279 = vmatprep.subr.mxu0 %v104
    %1280 = vmatpush1.msra.mxu0 %v103
    %1281 = vmatprep.subr.mxu0 %v100
    %1282 = vmatpush1.msra.mxu0 %v99
    %1283 = vmatprep.subr.mxu0 %v96
    %1284 = vmatpush1.msra.mxu0 %v95
    %1285 = vmatprep.subr.mxu0 %v92
    %1286 = vmatpush1.msra.mxu0 %v91
    %1287 = vmatprep.subr.mxu0 %v88
    %1288 = vmatpush1.msra.mxu0 %v87
    %1289 = vmatprep.subr.mxu0 %v84
    %1290 = vmatpush1.msra.mxu0 %v83
    %1291 = vmatprep.subr.mxu0 0.0
    %1292 = vmatpush2.msra.mxu0 0.0
    %1293 = vmatprep.subr.mxu0 0.0
    %1294 = vmatpush2.msra.mxu0 0.0
    %1295 = vmatprep.subr.mxu0 0.0
    %1296 = vmatpush2.msra.mxu0 0.0
    %1297 = vmatprep.subr.mxu0 0.0
    %1298 = vmatpush2.msra.mxu0 0.0
    %1299 = vmatprep.subr.mxu0 0.0
    %1300 = vmatpush2.msra.mxu0 0.0
    %1301 = vmatprep.subr.mxu0 0.0
    %1302 = vmatpush2.msra.mxu0 0.0
    %1303 = vmatprep.subr.mxu0 0.0
    %1304 = vmatpush2.msra.mxu0 0.0
    %1305 = vmatprep.subr.mxu0 0.0
    %1306 = vmatpush2.msra.mxu0 0.0
    %1307 = vmatprep.subr.mxu0 0.0
    %1308 = vmatpush2.msra.mxu0 0.0
    %1309 = vmatprep.subr.mxu0 0.0
    %1310 = vmatpush2.msra.mxu0 0.0
    %1311 = vmatprep.subr.mxu0 0.0
    %1312 = vmatpush2.msra.mxu0 0.0
    %1313 = vmatprep.subr.mxu0 0.0
    %1314 = vmatpush2.msra.mxu0 0.0
    %1315 = vmatprep.subr.mxu0 0.0
    %1316 = vmatpush2.msra.mxu0 0.0
    %1317 = vmatprep.subr.mxu0 0.0
    %1318 = vmatpush2.msra.mxu0 0.0
    %1319 = vmatprep.subr.mxu0 0.0
    %1320 = vmatpush2.msra.mxu0 0.0
    %1321 = vmatprep.subr.mxu0 0.0
    %1322 = vmatpush2.msra.mxu0 0.0
    %1323 = vmatprep.mubr.f32.mxu0 0.0
    %1324 = vmatmul.mubr.f32.gmra.mxu0 %v1180
    %v1325 = vpop.f32.mrf.mxu0
    %v1326 = vadd.f32 %v1186, %v1325
    %v1327 = vpop.f32.mrf.mxu0
    %v1328 = vadd.f32 %v1187, %v1327
    %1329 = vdwg.mxu0
    %v1330 = vxor.u32 %v1255, 2147483648
    %v1331 = vmul.f32 %v1330, 1.442695
    %v1332 = vpow.pop %v1331
    %v1333 = vadd.f32 %v1332, 1.0
    %v1334 = vrcp.pop %v1333
    %v1335 = vmul.f32 1.0, %v1334
    %v1336 = vxor.u32 %v1257, 2147483648
    %v1337 = vmul.f32 %v1336, 1.442695
    %v1338 = vpow.pop %v1337
    %v1339 = vadd.f32 %v1338, 1.0
    %v1340 = vrcp.pop %v1339
    %v1341 = vmul.f32 1.0, %v1340
    %v1342 = vtanh.pop %v1326
    %v1343 = vxor.u32 %v1328, 2147483648
    %v1344 = vmul.f32 %v1343, 1.442695
    %v1345 = vpow.pop %v1344
    %v1346 = vadd.f32 %v1345, 1.0
    %v1347 = vrcp.pop %v1346
    %v1348 = vmul.f32 1.0, %v1347
    %v1349 = vmul.f32 %v1341, %v1178
    %v1350 = vmul.f32 %v1335, %v1342
    %v1351 = vadd.f32 %v1349, %v1350
    %v1352 = vtanh.pop %v1351
    %v1353 = vmul.f32 %v1348, %v1352
    %s1354 = scalar_lea.vmem [#allocation12], 48
    %1355 = vst [vmem:[%s1354] sm:$0xff] %v1353
    %s1356 = scalar_lea.vmem [#allocation4], 224
    %v1357 = vld [vmem:[%s1356] sm:$0xff]
    %v1358 = vld [vmem:[%s1356 + $0x8] sm:$0xff]
    %v1359 = vld [vmem:[%s1356 + $0x10] sm:$0xff]
    %v1360 = vld [vmem:[%s1356 + $0x18] sm:$0xff]
    %1361 = vmatprep.subr.mxu0 %v142
    %1362 = vmatpush1.msra.mxu0 %v141
    %1363 = vmatprep.subr.mxu0 %v138
    %1364 = vmatpush1.msra.mxu0 %v137
    %1365 = vmatprep.subr.mxu0 %v134
    %1366 = vmatpush1.msra.mxu0 %v133
    %1367 = vmatprep.subr.mxu0 %v130
    %1368 = vmatpush1.msra.mxu0 %v129
    %1369 = vmatprep.subr.mxu0 %v126
    %1370 = vmatpush1.msra.mxu0 %v125
    %1371 = vmatprep.subr.mxu0 %v122
    %1372 = vmatpush1.msra.mxu0 %v121
    %1373 = vmatprep.subr.mxu0 %v118
    %1374 = vmatpush1.msra.mxu0 %v117
    %1375 = vmatprep.subr.mxu0 %v114
    %1376 = vmatpush1.msra.mxu0 %v113
    %1377 = vmatprep.subr.mxu0 %v110
    %1378 = vmatpush1.msra.mxu0 %v109
    %1379 = vmatprep.subr.mxu0 %v106
    %1380 = vmatpush1.msra.mxu0 %v105
    %1381 = vmatprep.subr.mxu0 %v102
    %1382 = vmatpush1.msra.mxu0 %v101
    %1383 = vmatprep.subr.mxu0 %v98
    %1384 = vmatpush1.msra.mxu0 %v97
    %1385 = vmatprep.subr.mxu0 %v94
    %1386 = vmatpush1.msra.mxu0 %v93
    %1387 = vmatprep.subr.mxu0 %v90
    %1388 = vmatpush1.msra.mxu0 %v89
    %1389 = vmatprep.subr.mxu0 %v86
    %1390 = vmatpush1.msra.mxu0 %v85
    %1391 = vmatprep.subr.mxu0 %v82
    %1392 = vmatpush1.msra.mxu0 %v81
    %1393 = vmatprep.subr.mxu0 0.0
    %1394 = vmatpush2.msra.mxu0 0.0
    %1395 = vmatprep.subr.mxu0 0.0
    %1396 = vmatpush2.msra.mxu0 0.0
    %1397 = vmatprep.subr.mxu0 0.0
    %1398 = vmatpush2.msra.mxu0 0.0
    %1399 = vmatprep.subr.mxu0 0.0
    %1400 = vmatpush2.msra.mxu0 0.0
    %1401 = vmatprep.subr.mxu0 0.0
    %1402 = vmatpush2.msra.mxu0 0.0
    %1403 = vmatprep.subr.mxu0 0.0
    %1404 = vmatpush2.msra.mxu0 0.0
    %1405 = vmatprep.subr.mxu0 0.0
    %1406 = vmatpush2.msra.mxu0 0.0
    %1407 = vmatprep.subr.mxu0 0.0
    %1408 = vmatpush2.msra.mxu0 0.0
    %1409 = vmatprep.subr.mxu0 0.0
    %1410 = vmatpush2.msra.mxu0 0.0
    %1411 = vmatprep.subr.mxu0 0.0
    %1412 = vmatpush2.msra.mxu0 0.0
    %1413 = vmatprep.subr.mxu0 0.0
    %1414 = vmatpush2.msra.mxu0 0.0
    %1415 = vmatprep.subr.mxu0 0.0
    %1416 = vmatpush2.msra.mxu0 0.0
    %1417 = vmatprep.subr.mxu0 0.0
    %1418 = vmatpush2.msra.mxu0 0.0
    %1419 = vmatprep.subr.mxu0 0.0
    %1420 = vmatpush2.msra.mxu0 0.0
    %1421 = vmatprep.subr.mxu0 0.0
    %1422 = vmatpush2.msra.mxu0 0.0
    %1423 = vmatprep.subr.mxu0 0.0
    %1424 = vmatpush2.msra.mxu0 0.0
    %1425 = vmatprep.mubr.f32.mxu0 0.0
    %1426 = vmatmul.mubr.f32.gmra.mxu0 %v1353
    %v1427 = vpop.f32.mrf.mxu0
    %v1428 = vadd.f32 %v1357, %v1427
    %v1429 = vpop.f32.mrf.mxu0
    %v1430 = vadd.f32 %v1358, %v1429
    %1431 = vdwg.mxu0
    %1432 = vmatprep.subr.mxu0 %v144
    %1433 = vmatpush1.msra.mxu0 %v143
    %1434 = vmatprep.subr.mxu0 %v140
    %1435 = vmatpush1.msra.mxu0 %v139
    %1436 = vmatprep.subr.mxu0 %v136
    %1437 = vmatpush1.msra.mxu0 %v135
    %1438 = vmatprep.subr.mxu0 %v132
    %1439 = vmatpush1.msra.mxu0 %v131
    %1440 = vmatprep.subr.mxu0 %v128
    %1441 = vmatpush1.msra.mxu0 %v127
    %1442 = vmatprep.subr.mxu0 %v124
    %1443 = vmatpush1.msra.mxu0 %v123
    %1444 = vmatprep.subr.mxu0 %v120
    %1445 = vmatpush1.msra.mxu0 %v119
    %1446 = vmatprep.subr.mxu0 %v116
    %1447 = vmatpush1.msra.mxu0 %v115
    %1448 = vmatprep.subr.mxu0 %v112
    %1449 = vmatpush1.msra.mxu0 %v111
    %1450 = vmatprep.subr.mxu0 %v108
    %1451 = vmatpush1.msra.mxu0 %v107
    %1452 = vmatprep.subr.mxu0 %v104
    %1453 = vmatpush1.msra.mxu0 %v103
    %1454 = vmatprep.subr.mxu0 %v100
    %1455 = vmatpush1.msra.mxu0 %v99
    %1456 = vmatprep.subr.mxu0 %v96
    %1457 = vmatpush1.msra.mxu0 %v95
    %1458 = vmatprep.subr.mxu0 %v92
    %1459 = vmatpush1.msra.mxu0 %v91
    %1460 = vmatprep.subr.mxu0 %v88
    %1461 = vmatpush1.msra.mxu0 %v87
    %1462 = vmatprep.subr.mxu0 %v84
    %1463 = vmatpush1.msra.mxu0 %v83
    %1464 = vmatprep.subr.mxu0 0.0
    %1465 = vmatpush2.msra.mxu0 0.0
    %1466 = vmatprep.subr.mxu0 0.0
    %1467 = vmatpush2.msra.mxu0 0.0
    %1468 = vmatprep.subr.mxu0 0.0
    %1469 = vmatpush2.msra.mxu0 0.0
    %1470 = vmatprep.subr.mxu0 0.0
    %1471 = vmatpush2.msra.mxu0 0.0
    %1472 = vmatprep.subr.mxu0 0.0
    %1473 = vmatpush2.msra.mxu0 0.0
    %1474 = vmatprep.subr.mxu0 0.0
    %1475 = vmatpush2.msra.mxu0 0.0
    %1476 = vmatprep.subr.mxu0 0.0
    %1477 = vmatpush2.msra.mxu0 0.0
    %1478 = vmatprep.subr.mxu0 0.0
    %1479 = vmatpush2.msra.mxu0 0.0
    %1480 = vmatprep.subr.mxu0 0.0
    %1481 = vmatpush2.msra.mxu0 0.0
    %1482 = vmatprep.subr.mxu0 0.0
    %1483 = vmatpush2.msra.mxu0 0.0
    %1484 = vmatprep.subr.mxu0 0.0
    %1485 = vmatpush2.msra.mxu0 0.0
    %1486 = vmatprep.subr.mxu0 0.0
    %1487 = vmatpush2.msra.mxu0 0.0
    %1488 = vmatprep.subr.mxu0 0.0
    %1489 = vmatpush2.msra.mxu0 0.0
    %1490 = vmatprep.subr.mxu0 0.0
    %1491 = vmatpush2.msra.mxu0 0.0
    %1492 = vmatprep.subr.mxu0 0.0
    %1493 = vmatpush2.msra.mxu0 0.0
    %1494 = vmatprep.subr.mxu0 0.0
    %1495 = vmatpush2.msra.mxu0 0.0
    %1496 = vmatprep.mubr.f32.mxu0 0.0
    %1497 = vmatmul.mubr.f32.gmra.mxu0 %v1353
    %v1498 = vpop.f32.mrf.mxu0
    %v1499 = vadd.f32 %v1359, %v1498
    %v1500 = vpop.f32.mrf.mxu0
    %v1501 = vadd.f32 %v1360, %v1500
    %1502 = vdwg.mxu0
    %v1503 = vxor.u32 %v1428, 2147483648
    %v1504 = vmul.f32 %v1503, 1.442695
    %v1505 = vpow.pop %v1504
    %v1506 = vadd.f32 %v1505, 1.0
    %v1507 = vrcp.pop %v1506
    %v1508 = vmul.f32 1.0, %v1507
    %v1509 = vxor.u32 %v1430, 2147483648
    %v1510 = vmul.f32 %v1509, 1.442695
    %v1511 = vpow.pop %v1510
    %v1512 = vadd.f32 %v1511, 1.0
    %v1513 = vrcp.pop %v1512
    %v1514 = vmul.f32 1.0, %v1513
    %v1515 = vtanh.pop %v1499
    %v1516 = vxor.u32 %v1501, 2147483648
    %v1517 = vmul.f32 %v1516, 1.442695
    %v1518 = vpow.pop %v1517
    %v1519 = vadd.f32 %v1518, 1.0
    %v1520 = vrcp.pop %v1519
    %v1521 = vmul.f32 1.0, %v1520
    %v1522 = vmul.f32 %v1514, %v1351
    %v1523 = vmul.f32 %v1508, %v1515
    %v1524 = vadd.f32 %v1522, %v1523
    %v1525 = vtanh.pop %v1524
    %v1526 = vmul.f32 %v1521, %v1525
    %s1527 = scalar_lea.vmem [#allocation12], 56
    %1528 = vst [vmem:[%s1527] sm:$0xff] %v1526
    %1529 = vst [vmem:[#allocation2] sm:$0xff] %v1526
    %1530 = vst [vmem:[#allocation3] sm:$0xff] %v1524
    // Predicated region
    $region38: #{tpu_custom_call.1} parent=1 // pred_check
      %p1531 = pneg %p73
    $region39: #{tpu_custom_call.1} parent=1 // pred_check_branch
      %1533 = sbr.rel (%p1531) target = $region41
    $region40: #{tpu_custom_call.1} parent=1 // pred_region
      %1534 = vst [vmem:[#allocation13] sm:$0xff] %v1526
      %1535 = vst [vmem:[#allocation15] sm:$0xff] %v1524
    $region41: #{tpu_custom_call.1} parent=1 // pred_fallthru
      _
    // Predicated region
    $region42: #{tpu_custom_call.1} parent=1 // pred_check
      _
    $region43: #{tpu_custom_call.1} parent=1 // pred_check_branch
      %1537 = sbr.rel (0) target = $region45
    $region44: #{tpu_custom_call.1} parent=1 // pred_region
      %s1539 = ssub.s32 1024, 1024
      %1540 = vsyncadd [#allocation6], %s1539
      %s1541 = sshll.u32 [#allocation12], 4
      %s1542 = int_to_ptr.vmem [resolvable:$true] %s1541
      %1547 = dma.vmem_to_hbm [thread:$0]  %s1542, 1024, %s4, [#allocation6], 128, 128, 8
    $region45: #{tpu_custom_call.1} parent=1 // pred_fallthru
      _
    // Predicated region
    $region46: #{tpu_custom_call.1} parent=1 // pred_check
      _
    $region47: #{tpu_custom_call.1} parent=1 // pred_check_branch
      %1549 = sbr.rel (0) target = $region49
    $region48: #{tpu_custom_call.1} parent=1 // pred_region
      %s1551 = ssub.s32 128, 128
      %1552 = vsyncadd [#allocation14], %s1551
      %s1554 = sshll.u32 [#allocation13], 4
      %s1555 = int_to_ptr.vmem [resolvable:$true] %s1554
      %1557 = dma.vmem_to_hbm [thread:$0]  %s1555, 128, %s5, [#allocation14]
    $region49: #{tpu_custom_call.1} parent=1 // pred_fallthru
      _
    // Predicated region
    $region50: #{tpu_custom_call.1} parent=1 // pred_check
      _
    $region51: #{tpu_custom_call.1} parent=1 // pred_check_branch
      %1559 = sbr.rel (0) target = $region53
    $region52: #{tpu_custom_call.1} parent=1 // pred_region
      %s1561 = ssub.s32 128, 128
      %1562 = vsyncadd [#allocation14], %s1561
      %s1564 = sshll.u32 [#allocation15], 4
      %s1565 = int_to_ptr.vmem [resolvable:$true] %s1564
      %1567 = dma.vmem_to_hbm [thread:$0]  %s1565, 128, %s6, [#allocation14]
    $region53: #{tpu_custom_call.1} parent=1 // pred_fallthru
      _
    // Predicated region
    $region54: #{tpu_custom_call.1} parent=1 // pred_check
      _
    $region55: #{tpu_custom_call.1} parent=1 // pred_check_branch
      %1569 = sbr.rel (0) target = $region57
    $region56: #{tpu_custom_call.1} parent=1 // pred_region
      %1570 = dma.done [#allocation6], 1024
    $region57: #{tpu_custom_call.1} parent=1 // pred_fallthru
      _
    // Predicated region
    $region58: #{tpu_custom_call.1} parent=1 // pred_check
      _
    $region59: #{tpu_custom_call.1} parent=1 // pred_check_branch
      %1572 = sbr.rel (0) target = $region61
    $region60: #{tpu_custom_call.1} parent=1 // pred_region
      %1573 = dma.done [#allocation14], 128
    $region61: #{tpu_custom_call.1} parent=1 // pred_fallthru
      _
    // Predicated region
    $region62: #{tpu_custom_call.1} parent=1 // pred_check
      _
    $region63: #{tpu_custom_call.1} parent=1 // pred_check_branch
      %1575 = sbr.rel (0) target = $region65
    $region64: #{tpu_custom_call.1} parent=1 // pred_region
      %1576 = dma.done [#allocation14], 128
    $region65: #{tpu_custom_call.1} parent=1 // pred_fallthru
      _
    %1577 = vsyncpa [#allocation5], 1
    %1578 = vsyncpa [#allocation8], 1
    %1579 = vsyncpa [#allocation11], 1
    %1580 = vsyncpa [#allocation6], 1
    %1581 = vsyncpa [#allocation14], 1

// kernel: tpu_custom_call.1
$region0: #{tpu_custom_call.1}
  #allocation0 [shape = 'u32[]', space=smem, size = 0x4, offset = 0x4, fixed_abs, tag = 'smem constant byte address 0x4 - core index']
  #allocation1 [shape = 'u32[144,128]{1,0:T(1,128)}', space=vmem, size = 0x12000, scoped, tag = 'internal scratch']
  #allocation2 [shape = 'f32[8,128]{1,0:T(8,128)}', space=vmem, size = 0x1000, scoped, tag = 'scratch operand']
  #allocation3 [shape = 'f32[8,128]{1,0:T(8,128)}', space=vmem, size = 0x1000, scoped, tag = 'scratch operand']
  %s0 = inlined_call_operand.hbm [shape: f32[8,8,512], index: 0, kind: input, shape index: {}]
  %s1 = inlined_call_operand.hbm [shape: f32[128,512], index: 1, kind: input, shape index: {}]
  %s2 = inlined_call_operand.hbm [shape: f32[8,128], index: 2, kind: input, shape index: {}]
  %s3 = inlined_call_operand.hbm [shape: f32[8,128], index: 3, kind: input, shape index: {}]
  %s4 = inlined_call_operand.hbm [shape: f32[8,8,128], index: 4, kind: output, shape index: {0}]
  %s5 = inlined_call_operand.hbm [shape: f32[8,128], index: 5, kind: output, shape index: {1}]
  %s6 = inlined_call_operand.hbm [shape: f32[8,128], index: 6, kind: output, shape index: {2}]
  %7 = xla_tuple %s4, %s5, %s6
  %s8 = sld [smem:[#allocation0]]
  $region66: #{tpu_custom_call.1} parent=0
    _
  %s10 = ssub.s32 1, %s8
  %s11 = scalar_select 0, %s10, %s8
  $region1: #{tpu_custom_call.1} parent=0
    #allocation4 [shape = 'u8[131072]{0}', space=vmem, size = 0x20000, scoped, tag = 'input window, operand 0, single buffered']
    #allocation5 [shape = 's32[1]{0}', space=sflag, size = 0x4, scoped, tag = 'scoped memory for tpu_custom_call.1']
    #allocation6 [shape = 's32[1]{0}', space=sflag, size = 0x4, scoped, tag = 'scoped memory for tpu_custom_call.1']
    #allocation7 [shape = 'u8[262144]{0}', space=vmem, size = 0x40000, scoped, tag = 'input window, operand 1, single buffered']
    #allocation8 [shape = 's32[1]{0}', space=sflag, size = 0x4, scoped, tag = 'scoped memory for tpu_custom_call.1']
    #allocation9 [shape = 'u8[4096]{0}', space=vmem, size = 0x1000, scoped, tag = 'input window, operand 2, single buffered']
    #allocation10 [shape = 'u8[4096]{0}', space=vmem, size = 0x1000, scoped, tag = 'input window, operand 3, single buffered']
    #allocation11 [shape = 's32[1]{0}', space=sflag, size = 0x4, scoped, tag = 'scoped memory for tpu_custom_call.1']
    #allocation12 [shape = 'u8[32768]{0}', space=vmem, size = 0x8000, scoped, tag = 'output window, operand 0, single buffered']
    #allocation13 [shape = 'u8[4096]{0}', space=vmem, size = 0x1000, scoped, tag = 'output window, operand 1, single buffered']
    #allocation14 [shape = 's32[1]{0}', space=sflag, size = 0x4, scoped, tag = 'scoped memory for tpu_custom_call.1']
    #allocation15 [shape = 'u8[4096]{0}', space=vmem, size = 0x1000, scoped, tag = 'output window, operand 2, single buffered']
    %12 = vsyncpa [#allocation5], 0
    %13 = vsyncpa [#allocation8], 0
    %14 = vsyncpa [#allocation11], 0
    %15 = vsyncpa [#allocation6], 0
    %16 = vsyncpa [#allocation14], 0
    // Predicated region
    $region2: #{tpu_custom_call.1} parent=1 // pred_check
      _
    $region3: #{tpu_custom_call.1} parent=1 // pred_check_branch
      %18 = sbr.rel (0) target = $region5
    $region4: #{tpu_custom_call.1} parent=1 // pred_region
      %s20 = ssub.s32 4096, 4096
      %21 = vsyncadd [#allocation5], %s20
      %s22 = sshll.u32 [#allocation4], 4
      %s23 = int_to_ptr.vmem [resolvable:$true] %s22
      %28 = dma.hbm_to_vmem [thread:$0]  %s0, 4096, %s23, [#allocation5], 512, 512, 32
    $region5: #{tpu_custom_call.1} parent=1 // pred_fallthru
      _
    // Predicated region
    $region6: #{tpu_custom_call.1} parent=1 // pred_check
      _
    $region7: #{tpu_custom_call.1} parent=1 // pred_check_branch
      %30 = sbr.rel (0) target = $region9
    $region8: #{tpu_custom_call.1} parent=1 // pred_region
      %s32 = ssub.s32 8192, 8192
      %33 = vsyncadd [#allocation8], %s32
      %s34 = sshll.u32 [#allocation7], 4
      %s35 = int_to_ptr.vmem [resolvable:$true] %s34
      %40 = dma.hbm_to_vmem [thread:$0]  %s1, 8192, %s35, [#allocation8], 512, 512, 32
    $region9: #{tpu_custom_call.1} parent=1 // pred_fallthru
      _
    // Predicated region
    $region10: #{tpu_custom_call.1} parent=1 // pred_check
      _
    $region11: #{tpu_custom_call.1} parent=1 // pred_check_branch
      %42 = sbr.rel (0) target = $region13
    $region12: #{tpu_custom_call.1} parent=1 // pred_region
      %s44 = ssub.s32 128, 128
      %45 = vsyncadd [#allocation8], %s44
      %s47 = sshll.u32 [#allocation9], 4
      %s48 = int_to_ptr.vmem [resolvable:$true] %s47
      %50 = dma.hbm_to_vmem [thread:$0]  %s2, 128, %s48, [#allocation8]
    $region13: #{tpu_custom_call.1} parent=1 // pred_fallthru
      _
    // Predicated region
    $region14: #{tpu_custom_call.1} parent=1 // pred_check
      _
    $region15: #{tpu_custom_call.1} parent=1 // pred_check_branch
      %52 = sbr.rel (0) target = $region17
    $region16: #{tpu_custom_call.1} parent=1 // pred_region
      %s54 = ssub.s32 128, 128
      %55 = vsyncadd [#allocation11], %s54
      %s57 = sshll.u32 [#allocation10], 4
      %s58 = int_to_ptr.vmem [resolvable:$true] %s57
      %60 = dma.hbm_to_vmem [thread:$0]  %s3, 128, %s58, [#allocation11]
    $region17: #{tpu_custom_call.1} parent=1 // pred_fallthru
      _
    // Predicated region
    $region18: #{tpu_custom_call.1} parent=1 // pred_check
      _
    $region19: #{tpu_custom_call.1} parent=1 // pred_check_branch
      %62 = sbr.rel (0) target = $region21
    $region20: #{tpu_custom_call.1} parent=1 // pred_region
      %63 = dma.done [#allocation5], 4096
    $region21: #{tpu_custom_call.1} parent=1 // pred_fallthru
      _
    // Predicated region
    $region22: #{tpu_custom_call.1} parent=1 // pred_check
      _
    $region23: #{tpu_custom_call.1} parent=1 // pred_check_branch
      %65 = sbr.rel (0) target = $region25
    $region24: #{tpu_custom_call.1} parent=1 // pred_region
      %66 = dma.done [#allocation8], 8192
    $region25: #{tpu_custom_call.1} parent=1 // pred_fallthru
      _
    // Predicated region
    $region26: #{tpu_custom_call.1} parent=1 // pred_check
      _
    $region27: #{tpu_custom_call.1} parent=1 // pred_check_branch
      %68 = sbr.rel (0) target = $region29
    $region28: #{tpu_custom_call.1} parent=1 // pred_region
      %69 = dma.done [#allocation8], 128
    $region29: #{tpu_custom_call.1} parent=1 // pred_fallthru
      _
    // Predicated region
    $region30: #{tpu_custom_call.1} parent=1 // pred_check
      _
    $region31: #{tpu_custom_call.1} parent=1 // pred_check_branch
      %71 = sbr.rel (0) target = $region33
    $region32: #{tpu_custom_call.1} parent=1 // pred_region
      %72 = dma.done [#allocation11], 128
    $region33: #{tpu_custom_call.1} parent=1 // pred_fallthru
      _
    %p73 = scmp.eq.s32.totalorder 0, 0
    // Predicated region
    $region34: #{tpu_custom_call.1} parent=1 // pred_check
      %p74 = pneg %p73
    $region35: #{tpu_custom_call.1} parent=1 // pred_check_branch
      %76 = sbr.rel (%p74) target = $region37
    $region36: #{tpu_custom_call.1} parent=1 // pred_region
      %v77 = vld [vmem:[#allocation9] sm:$0xff]
      %78 = vst [vmem:[#allocation2] sm:$0xff] %v77
      %v79 = vld [vmem:[#allocation10] sm:$0xff]
      %80 = vst [vmem:[#allocation3] sm:$0xff] %v79
    $region37: #{tpu_custom_call.1} parent=1 // pred_fallthru
      _
    %v81 = vld [vmem:[#allocation7] sm:$0xff]
    %v82 = vld [vmem:[#allocation7 + $0x8] sm:$0xff]
    %v83 = vld [vmem:[#allocation7 + $0x10] sm:$0xff]
    %v84 = vld [vmem:[#allocation7 + $0x18] sm:$0xff]
    %v85 = vld [vmem:[#allocation7 + $0x20] sm:$0xff]
    %v86 = vld [vmem:[#allocation7 + $0x28] sm:$0xff]
    %v87 = vld [vmem:[#allocation7 + $0x30] sm:$0xff]
    %v88 = vld [vmem:[#allocation7 + $0x38] sm:$0xff]
    %v89 = vld [vmem:[#allocation7 + $0x40] sm:$0xff]
    %v90 = vld [vmem:[#allocation7 + $0x48] sm:$0xff]
    %v91 = vld [vmem:[#allocation7 + $0x50] sm:$0xff]
    %v92 = vld [vmem:[#allocation7 + $0x58] sm:$0xff]
    %v93 = vld [vmem:[#allocation7 + $0x60] sm:$0xff]
    %v94 = vld [vmem:[#allocation7 + $0x68] sm:$0xff]
    %v95 = vld [vmem:[#allocation7 + $0x70] sm:$0xff]
    %v96 = vld [vmem:[#allocation7 + $0x78] sm:$0xff]
    %v97 = vld [vmem:[#allocation7 + $0x80] sm:$0xff]
    %v98 = vld [vmem:[#allocation7 + $0x88] sm:$0xff]
    %v99 = vld [vmem:[#allocation7 + $0x90] sm:$0xff]
    %v100 = vld [vmem:[#allocation7 + $0x98] sm:$0xff]
    %v101 = vld [vmem:[#allocation7 + $0xa0] sm:$0xff]
    %v102 = vld [vmem:[#allocation7 + $0xa8] sm:$0xff]
    %v103 = vld [vmem:[#allocation7 + $0xb0] sm:$0xff]
    %v104 = vld [vmem:[#allocation7 + $0xb8] sm:$0xff]
    %v105 = vld [vmem:[#allocation7 + $0xc0] sm:$0xff]
    %v106 = vld [vmem:[#allocation7 + $0xc8] sm:$0xff]
    %v107 = vld [vmem:[#allocation7 + $0xd0] sm:$0xff]
    %v108 = vld [vmem:[#allocation7 + $0xd8] sm:$0xff]
    %v109 = vld [vmem:[#allocation7 + $0xe0] sm:$0xff]
    %v110 = vld [vmem:[#allocation7 + $0xe8] sm:$0xff]
    %v111 = vld [vmem:[#allocation7 + $0xf0] sm:$0xff]
    %v112 = vld [vmem:[#allocation7 + $0xf8] sm:$0xff]
    %v113 = vld [vmem:[#allocation7 + $0x100] sm:$0xff]
    %v114 = vld [vmem:[#allocation7 + $0x108] sm:$0xff]
    %v115 = vld [vmem:[#allocation7 + $0x110] sm:$0xff]
    %v116 = vld [vmem:[#allocation7 + $0x118] sm:$0xff]
    %v117 = vld [vmem:[#allocation7 + $0x120] sm:$0xff]
    %v118 = vld [vmem:[#allocation7 + $0x128] sm:$0xff]
    %v119 = vld [vmem:[#allocation7 + $0x130] sm:$0xff]
    %v120 = vld [vmem:[#allocation7 + $0x138] sm:$0xff]
    %v121 = vld [vmem:[#allocation7 + $0x140] sm:$0xff]
    %v122 = vld [vmem:[#allocation7 + $0x148] sm:$0xff]
    %v123 = vld [vmem:[#allocation7 + $0x150] sm:$0xff]
    %v124 = vld [vmem:[#allocation7 + $0x158] sm:$0xff]
    %v125 = vld [vmem:[#allocation7 + $0x160] sm:$0xff]
    %v126 = vld [vmem:[#allocation7 + $0x168] sm:$0xff]
    %v127 = vld [vmem:[#allocation7 + $0x170] sm:$0xff]
    %v128 = vld [vmem:[#allocation7 + $0x178] sm:$0xff]
    %v129 = vld [vmem:[#allocation7 + $0x180] sm:$0xff]
    %v130 = vld [vmem:[#allocation7 + $0x188] sm:$0xff]
    %v131 = vld [vmem:[#allocation7 + $0x190] sm:$0xff]
    %v132 = vld [vmem:[#allocation7 + $0x198] sm:$0xff]
    %v133 = vld [vmem:[#allocation7 + $0x1a0] sm:$0xff]
    %v134 = vld [vmem:[#allocation7 + $0x1a8] sm:$0xff]
    %v135 = vld [vmem:[#allocation7 + $0x1b0] sm:$0xff]
    %v136 = vld [vmem:[#allocation7 + $0x1b8] sm:$0xff]
    %v137 = vld [vmem:[#allocation7 + $0x1c0] sm:$0xff]
    %v138 = vld [vmem:[#allocation7 + $0x1c8] sm:$0xff]
    %v139 = vld [vmem:[#allocation7 + $0x1d0] sm:$0xff]
    %v140 = vld [vmem:[#allocation7 + $0x1d8] sm:$0xff]
    %v141 = vld [vmem:[#allocation7 + $0x1e0] sm:$0xff]
    %v142 = vld [vmem:[#allocation7 + $0x1e8] sm:$0xff]
    %v143 = vld [vmem:[#allocation7 + $0x1f0] sm:$0xff]
    %v144 = vld [vmem:[#allocation7 + $0x1f8] sm:$0xff]
    %v145 = vld [vmem:[#allocation2] sm:$0xff]
    %v146 = vld [vmem:[#allocation3] sm:$0xff]
    %v147 = vld [vmem:[#allocation4] sm:$0xff]
    %v148 = vld [vmem:[#allocation4 + $0x8] sm:$0xff]
    %v149 = vld [vmem:[#allocation4 + $0x10] sm:$0xff]
    %v150 = vld [vmem:[#allocation4 + $0x18] sm:$0xff]
    %151 = vmatprep.subr.mxu0 %v142
    %152 = vmatpush1.msra.mxu0 %v141
    %153 = vmatprep.subr.mxu0 %v138
    %154 = vmatpush1.msra.mxu0 %v137
    %155 = vmatprep.subr.mxu0 %v134
    %156 = vmatpush1.msra.mxu0 %v133
    %157 = vmatprep.subr.mxu0 %v130
    %158 = vmatpush1.msra.mxu0 %v129
    %159 = vmatprep.subr.mxu0 %v126
    %160 = vmatpush1.msra.mxu0 %v125
    %161 = vmatprep.subr.mxu0 %v122
    %162 = vmatpush1.msra.mxu0 %v121
    %163 = vmatprep.subr.mxu0 %v118
    %164 = vmatpush1.msra.mxu0 %v117
    %165 = vmatprep.subr.mxu0 %v114
    %166 = vmatpush1.msra.mxu0 %v113
    %167 = vmatprep.subr.mxu0 %v110
    %168 = vmatpush1.msra.mxu0 %v109
    %169 = vmatprep.subr.mxu0 %v106
    %170 = vmatpush1.msra.mxu0 %v105
    %171 = vmatprep.subr.mxu0 %v102
    %172 = vmatpush1.msra.mxu0 %v101
    %173 = vmatprep.subr.mxu0 %v98
    %174 = vmatpush1.msra.mxu0 %v97
    %175 = vmatprep.subr.mxu0 %v94
    %176 = vmatpush1.msra.mxu0 %v93
    %177 = vmatprep.subr.mxu0 %v90
    %178 = vmatpush1.msra.mxu0 %v89
    %179 = vmatprep.subr.mxu0 %v86
    %180 = vmatpush1.msra.mxu0 %v85
    %181 = vmatprep.subr.mxu0 %v82
    %182 = vmatpush1.msra.mxu0 %v81
    %183 = vmatprep.subr.mxu0 0.0
    %184 = vmatpush2.msra.mxu0 0.0
    %185 = vmatprep.subr.mxu0 0.0
    %186 = vmatpush2.msra.mxu0 0.0
    %187 = vmatprep.subr.mxu0 0.0
    %188 = vmatpush2.msra.mxu0 0.0
    %189 = vmatprep.subr.mxu0 0.0
    %190 = vmatpush2.msra.mxu0 0.0
    %191 = vmatprep.subr.mxu0 0.0
    %192 = vmatpush2.msra.mxu0 0.0
    %193 = vmatprep.subr.mxu0 0.0
    %194 = vmatpush2.msra.mxu0 0.0
    %195 = vmatprep.subr.mxu0 0.0
    %196 = vmatpush2.msra.mxu0 0.0
    %197 = vmatprep.subr.mxu0 0.0
    %198 = vmatpush2.msra.mxu0 0.0
    %199 = vmatprep.subr.mxu0 0.0
    %200 = vmatpush2.msra.mxu0 0.0
    %201 = vmatprep.subr.mxu0 0.0
    %202 = vmatpush2.msra.mxu0 0.0
    %203 = vmatprep.subr.mxu0 0.0
    %204 = vmatpush2.msra.mxu0 0.0
    %205 = vmatprep.subr.mxu0 0.0
    %206 = vmatpush2.msra.mxu0 0.0
    %207 = vmatprep.subr.mxu0 0.0
    %208 = vmatpush2.msra.mxu0 0.0
    %209 = vmatprep.subr.mxu0 0.0
    %210 = vmatpush2.msra.mxu0 0.0
    %211 = vmatprep.subr.mxu0 0.0
    %212 = vmatpush2.msra.mxu0 0.0
    %213 = vmatprep.subr.mxu0 0.0
    %214 = vmatpush2.msra.mxu0 0.0
    %215 = vmatprep.mubr.f32.mxu0 0.0
    %216 = vmatmul.mubr.f32.gmra.mxu0 %v145
    %v217 = vpop.f32.mrf.mxu0
    %v218 = vadd.f32 %v147, %v217
    %v219 = vpop.f32.mrf.mxu0
    %v220 = vadd.f32 %v148, %v219
    %221 = vdwg.mxu0
    %222 = vmatprep.subr.mxu0 %v144
    %223 = vmatpush1.msra.mxu0 %v143
    %224 = vmatprep.subr.mxu0 %v140
    %225 = vmatpush1.msra.mxu0 %v139
    %226 = vmatprep.subr.mxu0 %v136
    %227 = vmatpush1.msra.mxu0 %v135
    %228 = vmatprep.subr.mxu0 %v132
    %229 = vmatpush1.msra.mxu0 %v131
    %230 = vmatprep.subr.mxu0 %v128
    %231 = vmatpush1.msra.mxu0 %v127
    %232 = vmatprep.subr.mxu0 %v124
    %233 = vmatpush1.msra.mxu0 %v123
    %234 = vmatprep.subr.mxu0 %v120
    %235 = vmatpush1.msra.mxu0 %v119
    %236 = vmatprep.subr.mxu0 %v116
    %237 = vmatpush1.msra.mxu0 %v115
    %238 = vmatprep.subr.mxu0 %v112
    %239 = vmatpush1.msra.mxu0 %v111
    %240 = vmatprep.subr.mxu0 %v108
    %241 = vmatpush1.msra.mxu0 %v107
    %242 = vmatprep.subr.mxu0 %v104
    %243 = vmatpush1.msra.mxu0 %v103
    %244 = vmatprep.subr.mxu0 %v100
    %245 = vmatpush1.msra.mxu0 %v99
    %246 = vmatprep.subr.mxu0 %v96
    %247 = vmatpush1.msra.mxu0 %v95
    %248 = vmatprep.subr.mxu0 %v92
    %249 = vmatpush1.msra.mxu0 %v91
    %250 = vmatprep.subr.mxu0 %v88
    %251 = vmatpush1.msra.mxu0 %v87
    %252 = vmatprep.subr.mxu0 %v84
    %253 = vmatpush1.msra.mxu0 %v83
    %254 = vmatprep.subr.mxu0 0.0
    %255 = vmatpush2.msra.mxu0 0.0
    %256 = vmatprep.subr.mxu0 0.0
    %257 = vmatpush2.msra.mxu0 0.0
    %258 = vmatprep.subr.mxu0 0.0
    %259 = vmatpush2.msra.mxu0 0.0
    %260 = vmatprep.subr.mxu0 0.0
    %261 = vmatpush2.msra.mxu0 0.0
    %262 = vmatprep.subr.mxu0 0.0
    %263 = vmatpush2.msra.mxu0 0.0
    %264 = vmatprep.subr.mxu0 0.0
    %265 = vmatpush2.msra.mxu0 0.0
    %266 = vmatprep.subr.mxu0 0.0
    %267 = vmatpush2.msra.mxu0 0.0
    %268 = vmatprep.subr.mxu0 0.0
    %269 = vmatpush2.msra.mxu0 0.0
    %270 = vmatprep.subr.mxu0 0.0
    %271 = vmatpush2.msra.mxu0 0.0
    %272 = vmatprep.subr.mxu0 0.0
    %273 = vmatpush2.msra.mxu0 0.0
    %274 = vmatprep.subr.mxu0 0.0
    %275 = vmatpush2.msra.mxu0 0.0
    %276 = vmatprep.subr.mxu0 0.0
    %277 = vmatpush2.msra.mxu0 0.0
    %278 = vmatprep.subr.mxu0 0.0
    %279 = vmatpush2.msra.mxu0 0.0
    %280 = vmatprep.subr.mxu0 0.0
    %281 = vmatpush2.msra.mxu0 0.0
    %282 = vmatprep.subr.mxu0 0.0
    %283 = vmatpush2.msra.mxu0 0.0
    %284 = vmatprep.subr.mxu0 0.0
    %285 = vmatpush2.msra.mxu0 0.0
    %286 = vmatprep.mubr.f32.mxu0 0.0
    %287 = vmatmul.mubr.f32.gmra.mxu0 %v145
    %v288 = vpop.f32.mrf.mxu0
    %v289 = vadd.f32 %v149, %v288
    %v290 = vpop.f32.mrf.mxu0
    %v291 = vadd.f32 %v150, %v290
    %292 = vdwg.mxu0
    %v293 = vxor.u32 %v218, 2147483648
    %v294 = vmul.f32 %v293, 1.442695
    %v295 = vpow.pop %v294
    %v296 = vadd.f32 %v295, 1.0
    %v297 = vrcp.pop %v296
    %v298 = vmul.f32 1.0, %v297
    %v299 = vxor.u32 %v220, 2147483648
    %v300 = vmul.f32 %v299, 1.442695
    %v301 = vpow.pop %v300
    %v302 = vadd.f32 %v301, 1.0
    %v303 = vrcp.pop %v302
    %v304 = vmul.f32 1.0, %v303
    %v305 = vtanh.pop %v289
    %v306 = vxor.u32 %v291, 2147483648
    %v307 = vmul.f32 %v306, 1.442695
    %v308 = vpow.pop %v307
    %v309 = vadd.f32 %v308, 1.0
    %v310 = vrcp.pop %v309
    %v311 = vmul.f32 1.0, %v310
    %v312 = vmul.f32 %v304, %v146
    %v313 = vmul.f32 %v298, %v305
    %v314 = vadd.f32 %v312, %v313
    %v315 = vtanh.pop %v314
    %v316 = vmul.f32 %v311, %v315
    %317 = vst [vmem:[#allocation12] sm:$0xff] %v316
    %s318 = scalar_lea.vmem [#allocation4], 32
    %v319 = vld [vmem:[%s318] sm:$0xff]
    %v320 = vld [vmem:[%s318 + $0x8] sm:$0xff]
    %v321 = vld [vmem:[%s318 + $0x10] sm:$0xff]
    %v322 = vld [vmem:[%s318 + $0x18] sm:$0xff]
    %323 = vmatprep.subr.mxu0 %v142
    %324 = vmatpush1.msra.mxu0 %v141
    %325 = vmatprep.subr.mxu0 %v138
    %326 = vmatpush1.msra.mxu0 %v137
    %327 = vmatprep.subr.mxu0 %v134
    %328 = vmatpush1.msra.mxu0 %v133
    %329 = vmatprep.subr.mxu0 %v130
    %330 = vmatpush1.msra.mxu0 %v129
    %331 = vmatprep.subr.mxu0 %v126
    %332 = vmatpush1.msra.mxu0 %v125
    %333 = vmatprep.subr.mxu0 %v122
    %334 = vmatpush1.msra.mxu0 %v121
    %335 = vmatprep.subr.mxu0 %v118
    %336 = vmatpush1.msra.mxu0 %v117
    %337 = vmatprep.subr.mxu0 %v114
    %338 = vmatpush1.msra.mxu0 %v113
    %339 = vmatprep.subr.mxu0 %v110
    %340 = vmatpush1.msra.mxu0 %v109
    %341 = vmatprep.subr.mxu0 %v106
    %342 = vmatpush1.msra.mxu0 %v105
    %343 = vmatprep.subr.mxu0 %v102
    %344 = vmatpush1.msra.mxu0 %v101
    %345 = vmatprep.subr.mxu0 %v98
    %346 = vmatpush1.msra.mxu0 %v97
    %347 = vmatprep.subr.mxu0 %v94
    %348 = vmatpush1.msra.mxu0 %v93
    %349 = vmatprep.subr.mxu0 %v90
    %350 = vmatpush1.msra.mxu0 %v89
    %351 = vmatprep.subr.mxu0 %v86
    %352 = vmatpush1.msra.mxu0 %v85
    %353 = vmatprep.subr.mxu0 %v82
    %354 = vmatpush1.msra.mxu0 %v81
    %355 = vmatprep.subr.mxu0 0.0
    %356 = vmatpush2.msra.mxu0 0.0
    %357 = vmatprep.subr.mxu0 0.0
    %358 = vmatpush2.msra.mxu0 0.0
    %359 = vmatprep.subr.mxu0 0.0
    %360 = vmatpush2.msra.mxu0 0.0
    %361 = vmatprep.subr.mxu0 0.0
    %362 = vmatpush2.msra.mxu0 0.0
    %363 = vmatprep.subr.mxu0 0.0
    %364 = vmatpush2.msra.mxu0 0.0
    %365 = vmatprep.subr.mxu0 0.0
    %366 = vmatpush2.msra.mxu0 0.0
    %367 = vmatprep.subr.mxu0 0.0
    %368 = vmatpush2.msra.mxu0 0.0
    %369 = vmatprep.subr.mxu0 0.0
    %370 = vmatpush2.msra.mxu0 0.0
    %371 = vmatprep.subr.mxu0 0.0
    %372 = vmatpush2.msra.mxu0 0.0
    %373 = vmatprep.subr.mxu0 0.0
    %374 = vmatpush2.msra.mxu0 0.0
    %375 = vmatprep.subr.mxu0 0.0
    %376 = vmatpush2.msra.mxu0 0.0
    %377 = vmatprep.subr.mxu0 0.0
    %378 = vmatpush2.msra.mxu0 0.0
    %379 = vmatprep.subr.mxu0 0.0
    %380 = vmatpush2.msra.mxu0 0.0
    %381 = vmatprep.subr.mxu0 0.0
    %382 = vmatpush2.msra.mxu0 0.0
    %383 = vmatprep.subr.mxu0 0.0
    %384 = vmatpush2.msra.mxu0 0.0
    %385 = vmatprep.subr.mxu0 0.0
    %386 = vmatpush2.msra.mxu0 0.0
    %387 = vmatprep.mubr.f32.mxu0 0.0
    %388 = vmatmul.mubr.f32.gmra.mxu0 %v316
    %v389 = vpop.f32.mrf.mxu0
    %v390 = vadd.f32 %v319, %v389
    %v391 = vpop.f32.mrf.mxu0
    %v392 = vadd.f32 %v320, %v391
    %393 = vdwg.mxu0
    %394 = vmatprep.subr.mxu0 %v144
    %395 = vmatpush1.msra.mxu0 %v143
    %396 = vmatprep.subr.mxu0 %v140
    %397 = vmatpush1.msra.mxu0 %v139
    %398 = vmatprep.subr.mxu0 %v136
    %399 = vmatpush1.msra.mxu0 %v135
    %400 = vmatprep.subr.mxu0 %v132
    %401 = vmatpush1.msra.mxu0 %v131
    %402 = vmatprep.subr.mxu0 %v128
    %403 = vmatpush1.msra.mxu0 %v127
    %404 = vmatprep.subr.mxu0 %v124
    %405 = vmatpush1.msra.mxu0 %v123
    %406 = vmatprep.subr.mxu0 %v120
    %407 = vmatpush1.msra.mxu0 %v119
    %408 = vmatprep.subr.mxu0 %v116
    %409 = vmatpush1.msra.mxu0 %v115
    %410 = vmatprep.subr.mxu0 %v112
    %411 = vmatpush1.msra.mxu0 %v111
    %412 = vmatprep.subr.mxu0 %v108
    %413 = vmatpush1.msra.mxu0 %v107
    %414 = vmatprep.subr.mxu0 %v104
    %415 = vmatpush1.msra.mxu0 %v103
    %416 = vmatprep.subr.mxu0 %v100
    %417 = vmatpush1.msra.mxu0 %v99
    %418 = vmatprep.subr.mxu0 %v96
    %419 = vmatpush1.msra.mxu0 %v95
    %420 = vmatprep.subr.mxu0 %v92
    %421 = vmatpush1.msra.mxu0 %v91
    %422 = vmatprep.subr.mxu0 %v88
    %423 = vmatpush1.msra.mxu0 %v87
    %424 = vmatprep.subr.mxu0 %v84
    %425 = vmatpush1.msra.mxu0 %v83
    %426 = vmatprep.subr.mxu0 0.0
    %427 = vmatpush2.msra.mxu0 0.0
    %428 = vmatprep.subr.mxu0 0.0
    %429 = vmatpush2.msra.mxu0 0.0
    %430 = vmatprep.subr.mxu0 0.0
    %431 = vmatpush2.msra.mxu0 0.0
    %432 = vmatprep.subr.mxu0 0.0
    %433 = vmatpush2.msra.mxu0 0.0
    %434 = vmatprep.subr.mxu0 0.0
    %435 = vmatpush2.msra.mxu0 0.0
    %436 = vmatprep.subr.mxu0 0.0
    %437 = vmatpush2.msra.mxu0 0.0
    %438 = vmatprep.subr.mxu0 0.0
    %439 = vmatpush2.msra.mxu0 0.0
    %440 = vmatprep.subr.mxu0 0.0
    %441 = vmatpush2.msra.mxu0 0.0
    %442 = vmatprep.subr.mxu0 0.0
    %443 = vmatpush2.msra.mxu0 0.0
    %444 = vmatprep.subr.mxu0 0.0
    %445 = vmatpush2.msra.mxu0 0.0
    %446 = vmatprep.subr.mxu0 0.0
    %447 = vmatpush2.msra.mxu0 0.0
    %448 = vmatprep.subr.mxu0 0.0
    %449 = vmatpush2.msra.mxu0 0.0
    %450 = vmatprep.subr.mxu0 0.0
    %451 = vmatpush2.msra.mxu0 0.0
    %452 = vmatprep.subr.mxu0 0.0
    %453 = vmatpush2.msra.mxu0 0.0
    %454 = vmatprep.subr.mxu0 0.0
    %455 = vmatpush2.msra.mxu0 0.0
    %456 = vmatprep.subr.mxu0 0.0
    %457 = vmatpush2.msra.mxu0 0.0
    %458 = vmatprep.mubr.f32.mxu0 0.0
    %459 = vmatmul.mubr.f32.gmra.mxu0 %v316
    %v460 = vpop.f32.mrf.mxu0
    %v461 = vadd.f32 %v321, %v460
    %v462 = vpop.f32.mrf.mxu0
    %v463 = vadd.f32 %v322, %v462
    %464 = vdwg.mxu0
    %v465 = vxor.u32 %v390, 2147483648
    %v466 = vmul.f32 %v465, 1.442695
    %v467 = vpow.pop %v466
    %v468 = vadd.f32 %v467, 1.0
    %v469 = vrcp.pop %v468
    %v470 = vmul.f32 1.0, %v469
    %v471 = vxor.u32 %v392, 2147483648
    %v472 = vmul.f32 %v471, 1.442695
    %v473 = vpow.pop %v472
    %v474 = vadd.f32 %v473, 1.0
    %v475 = vrcp.pop %v474
    %v476 = vmul.f32 1.0, %v475
    %v477 = vtanh.pop %v461
    %v478 = vxor.u32 %v463, 2147483648
    %v479 = vmul.f32 %v478, 1.442695
    %v480 = vpow.pop %v479
    %v481 = vadd.f32 %v480, 1.0
    %v482 = vrcp.pop %v481
    %v483 = vmul.f32 1.0, %v482
    %v484 = vmul.f32 %v476, %v314
    %v485 = vmul.f32 %v470, %v477
    %v486 = vadd.f32 %v484, %v485
    %v487 = vtanh.pop %v486
    %v488 = vmul.f32 %v483, %v487
    %s489 = scalar_lea.vmem [#allocation12], 8
    %490 = vst [vmem:[%s489] sm:$0xff] %v488
    %s491 = scalar_lea.vmem [#allocation4], 64
    %v492 = vld [vmem:[%s491] sm:$0xff]
    %v493 = vld [vmem:[%s491 + $0x8] sm:$0xff]
    %v494 = vld [vmem:[%s491 + $0x10] sm:$0xff]
    %v495 = vld [vmem:[%s491 + $0x18] sm:$0xff]
    %496 = vmatprep.subr.mxu0 %v142
    %497 = vmatpush1.msra.mxu0 %v141
    %498 = vmatprep.subr.mxu0 %v138
    %499 = vmatpush1.msra.mxu0 %v137
    %500 = vmatprep.subr.mxu0 %v134
    %501 = vmatpush1.msra.mxu0 %v133
    %502 = vmatprep.subr.mxu0 %v130
    %503 = vmatpush1.msra.mxu0 %v129
    %504 = vmatprep.subr.mxu0 %v126
    %505 = vmatpush1.msra.mxu0 %v125
    %506 = vmatprep.subr.mxu0 %v122
    %507 = vmatpush1.msra.mxu0 %v121
    %508 = vmatprep.subr.mxu0 %v118
    %509 = vmatpush1.msra.mxu0 %v117
    %510 = vmatprep.subr.mxu0 %v114
    %511 = vmatpush1.msra.mxu0 %v113
    %512 = vmatprep.subr.mxu0 %v110
    %513 = vmatpush1.msra.mxu0 %v109
    %514 = vmatprep.subr.mxu0 %v106
    %515 = vmatpush1.msra.mxu0 %v105
    %516 = vmatprep.subr.mxu0 %v102
    %517 = vmatpush1.msra.mxu0 %v101
    %518 = vmatprep.subr.mxu0 %v98
    %519 = vmatpush1.msra.mxu0 %v97
    %520 = vmatprep.subr.mxu0 %v94
    %521 = vmatpush1.msra.mxu0 %v93
    %522 = vmatprep.subr.mxu0 %v90
    %523 = vmatpush1.msra.mxu0 %v89
    %524 = vmatprep.subr.mxu0 %v86
    %525 = vmatpush1.msra.mxu0 %v85
    %526 = vmatprep.subr.mxu0 %v82
    %527 = vmatpush1.msra.mxu0 %v81
    %528 = vmatprep.subr.mxu0 0.0
    %529 = vmatpush2.msra.mxu0 0.0
    %530 = vmatprep.subr.mxu0 0.0
    %531 = vmatpush2.msra.mxu0 0.0
    %532 = vmatprep.subr.mxu0 0.0
    %533 = vmatpush2.msra.mxu0 0.0
    %534 = vmatprep.subr.mxu0 0.0
    %535 = vmatpush2.msra.mxu0 0.0
    %536 = vmatprep.subr.mxu0 0.0
    %537 = vmatpush2.msra.mxu0 0.0
    %538 = vmatprep.subr.mxu0 0.0
    %539 = vmatpush2.msra.mxu0 0.0
    %540 = vmatprep.subr.mxu0 0.0
    %541 = vmatpush2.msra.mxu0 0.0
    %542 = vmatprep.subr.mxu0 0.0
    %543 = vmatpush2.msra.mxu0 0.0
    %544 = vmatprep.subr.mxu0 0.0
    %545 = vmatpush2.msra.mxu0 0.0
    %546 = vmatprep.subr.mxu0 0.0
    %547 = vmatpush2.msra.mxu0 0.0
    %548 = vmatprep.subr.mxu0 0.0
    %549 = vmatpush2.msra.mxu0 0.0
    %550 = vmatprep.subr.mxu0 0.0
    %551 = vmatpush2.msra.mxu0 0.0
    %552 = vmatprep.subr.mxu0 0.0
    %553 = vmatpush2.msra.mxu0 0.0
    %554 = vmatprep.subr.mxu0 0.0
    %555 = vmatpush2.msra.mxu0 0.0
    %556 = vmatprep.subr.mxu0 0.0
    %557 = vmatpush2.msra.mxu0 0.0
    %558 = vmatprep.subr.mxu0 0.0
    %559 = vmatpush2.msra.mxu0 0.0
    %560 = vmatprep.mubr.f32.mxu0 0.0
    %561 = vmatmul.mubr.f32.gmra.mxu0 %v488
    %v562 = vpop.f32.mrf.mxu0
    %v563 = vadd.f32 %v492, %v562
    %v564 = vpop.f32.mrf.mxu0
    %v565 = vadd.f32 %v493, %v564
    %566 = vdwg.mxu0
    %567 = vmatprep.subr.mxu0 %v144
    %568 = vmatpush1.msra.mxu0 %v143
    %569 = vmatprep.subr.mxu0 %v140
    %570 = vmatpush1.msra.mxu0 %v139
    %571 = vmatprep.subr.mxu0 %v136
    %572 = vmatpush1.msra.mxu0 %v135
    %573 = vmatprep.subr.mxu0 %v132
    %574 = vmatpush1.msra.mxu0 %v131
    %575 = vmatprep.subr.mxu0 %v128
    %576 = vmatpush1.msra.mxu0 %v127
    %577 = vmatprep.subr.mxu0 %v124
    %578 = vmatpush1.msra.mxu0 %v123
    %579 = vmatprep.subr.mxu0 %v120
    %580 = vmatpush1.msra.mxu0 %v119
    %581 = vmatprep.subr.mxu0 %v116
    %582 = vmatpush1.msra.mxu0 %v115
    %583 = vmatprep.subr.mxu0 %v112
    %584 = vmatpush1.msra.mxu0 %v111
    %585 = vmatprep.subr.mxu0 %v108
    %586 = vmatpush1.msra.mxu0 %v107
    %587 = vmatprep.subr.mxu0 %v104
    %588 = vmatpush1.msra.mxu0 %v103
    %589 = vmatprep.subr.mxu0 %v100
    %590 = vmatpush1.msra.mxu0 %v99
    %591 = vmatprep.subr.mxu0 %v96
    %592 = vmatpush1.msra.mxu0 %v95
    %593 = vmatprep.subr.mxu0 %v92
    %594 = vmatpush1.msra.mxu0 %v91
    %595 = vmatprep.subr.mxu0 %v88
    %596 = vmatpush1.msra.mxu0 %v87
    %597 = vmatprep.subr.mxu0 %v84
    %598 = vmatpush1.msra.mxu0 %v83
    %599 = vmatprep.subr.mxu0 0.0
    %600 = vmatpush2.msra.mxu0 0.0
    %601 = vmatprep.subr.mxu0 0.0
    %602 = vmatpush2.msra.mxu0 0.0
    %603 = vmatprep.subr.mxu0 0.0
    %604 = vmatpush2.msra.mxu0 0.0
    %605 = vmatprep.subr.mxu0 0.0
    %606 = vmatpush2.msra.mxu0 0.0
    %607 = vmatprep.subr.mxu0 0.0
    %608 = vmatpush2.msra.mxu0 0.0
    %609 = vmatprep.subr.mxu0 0.0
    %610 = vmatpush2.msra.mxu0 0.0
    %611 = vmatprep.subr.mxu0 0.0
    %612 = vmatpush2.msra.mxu0 0.0
    %613 = vmatprep.subr.mxu0 0.0
    %614 = vmatpush2.msra.mxu0 0.0
    %615 = vmatprep.subr.mxu0 0.0
    %616 = vmatpush2.msra.mxu0 0.0
    %617 = vmatprep.subr.mxu0 0.0
    %618 = vmatpush2.msra.mxu0 0.0
    %619 = vmatprep.subr.mxu0 0.0
    %620 = vmatpush2.msra.mxu0 0.0
    %621 = vmatprep.subr.mxu0 0.0
    %622 = vmatpush2.msra.mxu0 0.0
    %623 = vmatprep.subr.mxu0 0.0
    %624 = vmatpush2.msra.mxu0 0.0
    %625 = vmatprep.subr.mxu0 0.0
    %626 = vmatpush2.msra.mxu0 0.0
    %627 = vmatprep.subr.mxu0 0.0
    %628 = vmatpush2.msra.mxu0 0.0
    %629 = vmatprep.subr.mxu0 0.0
    %630 = vmatpush2.msra.mxu0 0.0
    %631 = vmatprep.mubr.f32.mxu0 0.0
    %632 = vmatmul.mubr.f32.gmra.mxu0 %v488
    %v633 = vpop.f32.mrf.mxu0
    %v634 = vadd.f32 %v494, %v633
    %v635 = vpop.f32.mrf.mxu0
    %v636 = vadd.f32 %v495, %v635
    %637 = vdwg.mxu0
    %v638 = vxor.u32 %v563, 2147483648
    %v639 = vmul.f32 %v638, 1.442695
    %v640 = vpow.pop %v639
    %v641 = vadd.f32 %v640, 1.0
    %v642 = vrcp.pop %v641
    %v643 = vmul.f32 1.0, %v642
    %v644 = vxor.u32 %v565, 2147483648
    %v645 = vmul.f32 %v644, 1.442695
    %v646 = vpow.pop %v645
    %v647 = vadd.f32 %v646, 1.0
    %v648 = vrcp.pop %v647
    %v649 = vmul.f32 1.0, %v648
    %v650 = vtanh.pop %v634
    %v651 = vxor.u32 %v636, 2147483648
    %v652 = vmul.f32 %v651, 1.442695
    %v653 = vpow.pop %v652
    %v654 = vadd.f32 %v653, 1.0
    %v655 = vrcp.pop %v654
    %v656 = vmul.f32 1.0, %v655
    %v657 = vmul.f32 %v649, %v486
    %v658 = vmul.f32 %v643, %v650
    %v659 = vadd.f32 %v657, %v658
    %v660 = vtanh.pop %v659
    %v661 = vmul.f32 %v656, %v660
    %s662 = scalar_lea.vmem [#allocation12], 16
    %663 = vst [vmem:[%s662] sm:$0xff] %v661
    %s664 = scalar_lea.vmem [#allocation4], 96
    %v665 = vld [vmem:[%s664] sm:$0xff]
    %v666 = vld [vmem:[%s664 + $0x8] sm:$0xff]
    %v667 = vld [vmem:[%s664 + $0x10] sm:$0xff]
    %v668 = vld [vmem:[%s664 + $0x18] sm:$0xff]
    %669 = vmatprep.subr.mxu0 %v142
    %670 = vmatpush1.msra.mxu0 %v141
    %671 = vmatprep.subr.mxu0 %v138
    %672 = vmatpush1.msra.mxu0 %v137
    %673 = vmatprep.subr.mxu0 %v134
    %674 = vmatpush1.msra.mxu0 %v133
    %675 = vmatprep.subr.mxu0 %v130
    %676 = vmatpush1.msra.mxu0 %v129
    %677 = vmatprep.subr.mxu0 %v126
    %678 = vmatpush1.msra.mxu0 %v125
    %679 = vmatprep.subr.mxu0 %v122
    %680 = vmatpush1.msra.mxu0 %v121
    %681 = vmatprep.subr.mxu0 %v118
    %682 = vmatpush1.msra.mxu0 %v117
    %683 = vmatprep.subr.mxu0 %v114
    %684 = vmatpush1.msra.mxu0 %v113
    %685 = vmatprep.subr.mxu0 %v110
    %686 = vmatpush1.msra.mxu0 %v109
    %687 = vmatprep.subr.mxu0 %v106
    %688 = vmatpush1.msra.mxu0 %v105
    %689 = vmatprep.subr.mxu0 %v102
    %690 = vmatpush1.msra.mxu0 %v101
    %691 = vmatprep.subr.mxu0 %v98
    %692 = vmatpush1.msra.mxu0 %v97
    %693 = vmatprep.subr.mxu0 %v94
    %694 = vmatpush1.msra.mxu0 %v93
    %695 = vmatprep.subr.mxu0 %v90
    %696 = vmatpush1.msra.mxu0 %v89
    %697 = vmatprep.subr.mxu0 %v86
    %698 = vmatpush1.msra.mxu0 %v85
    %699 = vmatprep.subr.mxu0 %v82
    %700 = vmatpush1.msra.mxu0 %v81
    %701 = vmatprep.subr.mxu0 0.0
    %702 = vmatpush2.msra.mxu0 0.0
    %703 = vmatprep.subr.mxu0 0.0
    %704 = vmatpush2.msra.mxu0 0.0
    %705 = vmatprep.subr.mxu0 0.0
    %706 = vmatpush2.msra.mxu0 0.0
    %707 = vmatprep.subr.mxu0 0.0
    %708 = vmatpush2.msra.mxu0 0.0
    %709 = vmatprep.subr.mxu0 0.0
    %710 = vmatpush2.msra.mxu0 0.0
    %711 = vmatprep.subr.mxu0 0.0
    %712 = vmatpush2.msra.mxu0 0.0
    %713 = vmatprep.subr.mxu0 0.0
    %714 = vmatpush2.msra.mxu0 0.0
    %715 = vmatprep.subr.mxu0 0.0
    %716 = vmatpush2.msra.mxu0 0.0
    %717 = vmatprep.subr.mxu0 0.0
    %718 = vmatpush2.msra.mxu0 0.0
    %719 = vmatprep.subr.mxu0 0.0
    %720 = vmatpush2.msra.mxu0 0.0
    %721 = vmatprep.subr.mxu0 0.0
    %722 = vmatpush2.msra.mxu0 0.0
    %723 = vmatprep.subr.mxu0 0.0
    %724 = vmatpush2.msra.mxu0 0.0
    %725 = vmatprep.subr.mxu0 0.0
    %726 = vmatpush2.msra.mxu0 0.0
    %727 = vmatprep.subr.mxu0 0.0
    %728 = vmatpush2.msra.mxu0 0.0
    %729 = vmatprep.subr.mxu0 0.0
    %730 = vmatpush2.msra.mxu0 0.0
    %731 = vmatprep.subr.mxu0 0.0
    %732 = vmatpush2.msra.mxu0 0.0
    %733 = vmatprep.mubr.f32.mxu0 0.0
    %734 = vmatmul.mubr.f32.gmra.mxu0 %v661
    %v735 = vpop.f32.mrf.mxu0
    %v736 = vadd.f32 %v665, %v735
    %v737 = vpop.f32.mrf.mxu0
    %v738 = vadd.f32 %v666, %v737
    %739 = vdwg.mxu0
    %740 = vmatprep.subr.mxu0 %v144
    %741 = vmatpush1.msra.mxu0 %v143
    %742 = vmatprep.subr.mxu0 %v140
    %743 = vmatpush1.msra.mxu0 %v139
    %744 = vmatprep.subr.mxu0 %v136
    %745 = vmatpush1.msra.mxu0 %v135
    %746 = vmatprep.subr.mxu0 %v132
    %747 = vmatpush1.msra.mxu0 %v131
    %748 = vmatprep.subr.mxu0 %v128
    %749 = vmatpush1.msra.mxu0 %v127
    %750 = vmatprep.subr.mxu0 %v124
    %751 = vmatpush1.msra.mxu0 %v123
    %752 = vmatprep.subr.mxu0 %v120
    %753 = vmatpush1.msra.mxu0 %v119
    %754 = vmatprep.subr.mxu0 %v116
    %755 = vmatpush1.msra.mxu0 %v115
    %756 = vmatprep.subr.mxu0 %v112
    %757 = vmatpush1.msra.mxu0 %v111
    %758 = vmatprep.subr.mxu0 %v108
    %759 = vmatpush1.msra.mxu0 %v107
    %760 = vmatprep.subr.mxu0 %v104
    %761 = vmatpush1.msra.mxu0 %v103
    %762 = vmatprep.subr.mxu0 %v100
    %763 = vmatpush1.msra.mxu0 %v99
    %764 = vmatprep.subr.mxu0 %v96
    %765 = vmatpush1.msra.mxu0 %v95
    %766 = vmatprep.subr.mxu0 %v92
    %767 = vmatpush1.msra.mxu0 %v91
    %768 = vmatprep.subr.mxu0 %v88
    %769 = vmatpush1.msra.mxu0 %v87
    %770 = vmatprep.subr.mxu0 %v84
    %771 = vmatpush1.msra.mxu0 %v83
    %772 = vmatprep.subr.mxu0 0.0
    %773 = vmatpush2.msra.mxu0 0.0
    %774 = vmatprep.subr.mxu0 0.0
    %775 = vmatpush2.msra.mxu0 0.0
    %776 = vmatprep.subr.mxu0 0.0
    %777 = vmatpush2.msra.mxu0 0.0
    %778 = vmatprep.subr.mxu0 0.0
    %779 = vmatpush2.msra.mxu0 0.0
    %780 = vmatprep.subr.mxu0 0.0
    %781 = vmatpush2.msra.mxu0 0.0
    %782 = vmatprep.subr.mxu0 0.0
    %783 = vmatpush2.msra.mxu0 0.0
    %784 = vmatprep.subr.mxu0 0.0
    %785 = vmatpush2.msra.mxu0 0.0
    %786 = vmatprep.subr.mxu0 0.0
    %787 = vmatpush2.msra.mxu0 0.0
    %788 = vmatprep.subr.mxu0 0.0
    %789 = vmatpush2.msra.mxu0 0.0
    %790 = vmatprep.subr.mxu0 0.0
    %791 = vmatpush2.msra.mxu0 0.0
    %792 = vmatprep.subr.mxu0 0.0
    %793 = vmatpush2.msra.mxu0 0.0
    %794 = vmatprep.subr.mxu0 0.0
    %795 = vmatpush2.msra.mxu0 0.0
    %796 = vmatprep.subr.mxu0 0.0
    %797 = vmatpush2.msra.mxu0 0.0
    %798 = vmatprep.subr.mxu0 0.0
    %799 = vmatpush2.msra.mxu0 0.0
    %800 = vmatprep.subr.mxu0 0.0
    %801 = vmatpush2.msra.mxu0 0.0
    %802 = vmatprep.subr.mxu0 0.0
    %803 = vmatpush2.msra.mxu0 0.0
    %804 = vmatprep.mubr.f32.mxu0 0.0
    %805 = vmatmul.mubr.f32.gmra.mxu0 %v661
    %v806 = vpop.f32.mrf.mxu0
    %v807 = vadd.f32 %v667, %v806
    %v808 = vpop.f32.mrf.mxu0
    %v809 = vadd.f32 %v668, %v808
    %810 = vdwg.mxu0
    %v811 = vxor.u32 %v736, 2147483648
    %v812 = vmul.f32 %v811, 1.442695
    %v813 = vpow.pop %v812
    %v814 = vadd.f32 %v813, 1.0
    %v815 = vrcp.pop %v814
    %v816 = vmul.f32 1.0, %v815
    %v817 = vxor.u32 %v738, 2147483648
    %v818 = vmul.f32 %v817, 1.442695
    %v819 = vpow.pop %v818
    %v820 = vadd.f32 %v819, 1.0
    %v821 = vrcp.pop %v820
    %v822 = vmul.f32 1.0, %v821
    %v823 = vtanh.pop %v807
    %v824 = vxor.u32 %v809, 2147483648
    %v825 = vmul.f32 %v824, 1.442695
    %v826 = vpow.pop %v825
    %v827 = vadd.f32 %v826, 1.0
    %v828 = vrcp.pop %v827
    %v829 = vmul.f32 1.0, %v828
    %v830 = vmul.f32 %v822, %v659
    %v831 = vmul.f32 %v816, %v823
    %v832 = vadd.f32 %v830, %v831
    %v833 = vtanh.pop %v832
    %v834 = vmul.f32 %v829, %v833
    %s835 = scalar_lea.vmem [#allocation12], 24
    %836 = vst [vmem:[%s835] sm:$0xff] %v834
    %s837 = scalar_lea.vmem [#allocation4], 128
    %v838 = vld [vmem:[%s837] sm:$0xff]
    %v839 = vld [vmem:[%s837 + $0x8] sm:$0xff]
    %v840 = vld [vmem:[%s837 + $0x10] sm:$0xff]
    %v841 = vld [vmem:[%s837 + $0x18] sm:$0xff]
    %842 = vmatprep.subr.mxu0 %v142
    %843 = vmatpush1.msra.mxu0 %v141
    %844 = vmatprep.subr.mxu0 %v138
    %845 = vmatpush1.msra.mxu0 %v137
    %846 = vmatprep.subr.mxu0 %v134
    %847 = vmatpush1.msra.mxu0 %v133
    %848 = vmatprep.subr.mxu0 %v130
    %849 = vmatpush1.msra.mxu0 %v129
    %850 = vmatprep.subr.mxu0 %v126
    %851 = vmatpush1.msra.mxu0 %v125
    %852 = vmatprep.subr.mxu0 %v122
    %853 = vmatpush1.msra.mxu0 %v121
    %854 = vmatprep.subr.mxu0 %v118
    %855 = vmatpush1.msra.mxu0 %v117
    %856 = vmatprep.subr.mxu0 %v114
    %857 = vmatpush1.msra.mxu0 %v113
    %858 = vmatprep.subr.mxu0 %v110
    %859 = vmatpush1.msra.mxu0 %v109
    %860 = vmatprep.subr.mxu0 %v106
    %861 = vmatpush1.msra.mxu0 %v105
    %862 = vmatprep.subr.mxu0 %v102
    %863 = vmatpush1.msra.mxu0 %v101
    %864 = vmatprep.subr.mxu0 %v98
    %865 = vmatpush1.msra.mxu0 %v97
    %866 = vmatprep.subr.mxu0 %v94
    %867 = vmatpush1.msra.mxu0 %v93
    %868 = vmatprep.subr.mxu0 %v90
    %869 = vmatpush1.msra.mxu0 %v89
    %870 = vmatprep.subr.mxu0 %v86
    %871 = vmatpush1.msra.mxu0 %v85
    %872 = vmatprep.subr.mxu0 %v82
    %873 = vmatpush1.msra.mxu0 %v81
    %874 = vmatprep.subr.mxu0 0.0
    %875 = vmatpush2.msra.mxu0 0.0
    %876 = vmatprep.subr.mxu0 0.0
    %877 = vmatpush2.msra.mxu0 0.0
    %878 = vmatprep.subr.mxu0 0.0
    %879 = vmatpush2.msra.mxu0 0.0
    %880 = vmatprep.subr.mxu0 0.0
    %881 = vmatpush2.msra.mxu0 0.0
    %882 = vmatprep.subr.mxu0 0.0
    %883 = vmatpush2.msra.mxu0 0.0
    %884 = vmatprep.subr.mxu0 0.0
    %885 = vmatpush2.msra.mxu0 0.0
    %886 = vmatprep.subr.mxu0 0.0
    %887 = vmatpush2.msra.mxu0 0.0
    %888 = vmatprep.subr.mxu0 0.0
    %889 = vmatpush2.msra.mxu0 0.0
    %890 = vmatprep.subr.mxu0 0.0
    %891 = vmatpush2.msra.mxu0 0.0
    %892 = vmatprep.subr.mxu0 0.0
    %893 = vmatpush2.msra.mxu0 0.0
    %894 = vmatprep.subr.mxu0 0.0
    %895 = vmatpush2.msra.mxu0 0.0
    %896 = vmatprep.subr.mxu0 0.0
    %897 = vmatpush2.msra.mxu0 0.0
    %898 = vmatprep.subr.mxu0 0.0
    %899 = vmatpush2.msra.mxu0 0.0
    %900 = vmatprep.subr.mxu0 0.0
    %901 = vmatpush2.msra.mxu0 0.0
    %902 = vmatprep.subr.mxu0 0.0
    %903 = vmatpush2.msra.mxu0 0.0
    %904 = vmatprep.subr.mxu0 0.0
    %905 = vmatpush2.msra.mxu0 0.0
    %906 = vmatprep.mubr.f32.mxu0 0.0
    %907 = vmatmul.mubr.f32.gmra.mxu0 %v834
    %v908 = vpop.f32.mrf.mxu0
    %v909 = vadd.f32 %v838, %v908
    %v910 = vpop.f32.mrf.mxu0
    %v911 = vadd.f32 %v839, %v910
    %912 = vdwg.mxu0
    %913 = vmatprep.subr.mxu0 %v144
    %914 = vmatpush1.msra.mxu0 %v143
    %915 = vmatprep.subr.mxu0 %v140
    %916 = vmatpush1.msra.mxu0 %v139
    %917 = vmatprep.subr.mxu0 %v136
    %918 = vmatpush1.msra.mxu0 %v135
    %919 = vmatprep.subr.mxu0 %v132
    %920 = vmatpush1.msra.mxu0 %v131
    %921 = vmatprep.subr.mxu0 %v128
    %922 = vmatpush1.msra.mxu0 %v127
    %923 = vmatprep.subr.mxu0 %v124
    %924 = vmatpush1.msra.mxu0 %v123
    %925 = vmatprep.subr.mxu0 %v120
    %926 = vmatpush1.msra.mxu0 %v119
    %927 = vmatprep.subr.mxu0 %v116
    %928 = vmatpush1.msra.mxu0 %v115
    %929 = vmatprep.subr.mxu0 %v112
    %930 = vmatpush1.msra.mxu0 %v111
    %931 = vmatprep.subr.mxu0 %v108
    %932 = vmatpush1.msra.mxu0 %v107
    %933 = vmatprep.subr.mxu0 %v104
    %934 = vmatpush1.msra.mxu0 %v103
    %935 = vmatprep.subr.mxu0 %v100
    %936 = vmatpush1.msra.mxu0 %v99
    %937 = vmatprep.subr.mxu0 %v96
    %938 = vmatpush1.msra.mxu0 %v95
    %939 = vmatprep.subr.mxu0 %v92
    %940 = vmatpush1.msra.mxu0 %v91
    %941 = vmatprep.subr.mxu0 %v88
    %942 = vmatpush1.msra.mxu0 %v87
    %943 = vmatprep.subr.mxu0 %v84
    %944 = vmatpush1.msra.mxu0 %v83
    %945 = vmatprep.subr.mxu0 0.0
    %946 = vmatpush2.msra.mxu0 0.0
    %947 = vmatprep.subr.mxu0 0.0
    %948 = vmatpush2.msra.mxu0 0.0
    %949 = vmatprep.subr.mxu0 0.0
    %950 = vmatpush2.msra.mxu0 0.0
    %951 = vmatprep.subr.mxu0 0.0
    %952 = vmatpush2.msra.mxu0 0.0
    %953 = vmatprep.subr.mxu0 0.0
    %954 = vmatpush2.msra.mxu0 0.0
    %955 = vmatprep.subr.mxu0 0.0
    %956 = vmatpush2.msra.mxu0 0.0
    %957 = vmatprep.subr.mxu0 0.0
    %958 = vmatpush2.msra.mxu0 0.0
    %959 = vmatprep.subr.mxu0 0.0
    %960 = vmatpush2.msra.mxu0 0.0
    %961 = vmatprep.subr.mxu0 0.0
    %962 = vmatpush2.msra.mxu0 0.0
    %963 = vmatprep.subr.mxu0 0.0
    %964 = vmatpush2.msra.mxu0 0.0
    %965 = vmatprep.subr.mxu0 0.0
    %966 = vmatpush2.msra.mxu0 0.0
    %967 = vmatprep.subr.mxu0 0.0
    %968 = vmatpush2.msra.mxu0 0.0
    %969 = vmatprep.subr.mxu0 0.0
    %970 = vmatpush2.msra.mxu0 0.0
    %971 = vmatprep.subr.mxu0 0.0
    %972 = vmatpush2.msra.mxu0 0.0
    %973 = vmatprep.subr.mxu0 0.0
    %974 = vmatpush2.msra.mxu0 0.0
    %975 = vmatprep.subr.mxu0 0.0
    %976 = vmatpush2.msra.mxu0 0.0
    %977 = vmatprep.mubr.f32.mxu0 0.0
    %978 = vmatmul.mubr.f32.gmra.mxu0 %v834
    %v979 = vpop.f32.mrf.mxu0
    %v980 = vadd.f32 %v840, %v979
    %v981 = vpop.f32.mrf.mxu0
    %v982 = vadd.f32 %v841, %v981
    %983 = vdwg.mxu0
    %v984 = vxor.u32 %v909, 2147483648
    %v985 = vmul.f32 %v984, 1.442695
    %v986 = vpow.pop %v985
    %v987 = vadd.f32 %v986, 1.0
    %v988 = vrcp.pop %v987
    %v989 = vmul.f32 1.0, %v988
    %v990 = vxor.u32 %v911, 2147483648
    %v991 = vmul.f32 %v990, 1.442695
    %v992 = vpow.pop %v991
    %v993 = vadd.f32 %v992, 1.0
    %v994 = vrcp.pop %v993
    %v995 = vmul.f32 1.0, %v994
    %v996 = vtanh.pop %v980
    %v997 = vxor.u32 %v982, 2147483648
    %v998 = vmul.f32 %v997, 1.442695
    %v999 = vpow.pop %v998
    %v1000 = vadd.f32 %v999, 1.0
    %v1001 = vrcp.pop %v1000
    %v1002 = vmul.f32 1.0, %v1001
    %v1003 = vmul.f32 %v995, %v832
    %v1004 = vmul.f32 %v989, %v996
    %v1005 = vadd.f32 %v1003, %v1004
    %v1006 = vtanh.pop %v1005
    %v1007 = vmul.f32 %v1002, %v1006
    %s1008 = scalar_lea.vmem [#allocation12], 32
    %1009 = vst [vmem:[%s1008] sm:$0xff] %v1007
    %s1010 = scalar_lea.vmem [#allocation4], 160
    %v1011 = vld [vmem:[%s1010] sm:$0xff]
    %v1012 = vld [vmem:[%s1010 + $0x8] sm:$0xff]
    %v1013 = vld [vmem:[%s1010 + $0x10] sm:$0xff]
    %v1014 = vld [vmem:[%s1010 + $0x18] sm:$0xff]
    %1015 = vmatprep.subr.mxu0 %v142
    %1016 = vmatpush1.msra.mxu0 %v141
    %1017 = vmatprep.subr.mxu0 %v138
    %1018 = vmatpush1.msra.mxu0 %v137
    %1019 = vmatprep.subr.mxu0 %v134
    %1020 = vmatpush1.msra.mxu0 %v133
    %1021 = vmatprep.subr.mxu0 %v130
    %1022 = vmatpush1.msra.mxu0 %v129
    %1023 = vmatprep.subr.mxu0 %v126
    %1024 = vmatpush1.msra.mxu0 %v125
    %1025 = vmatprep.subr.mxu0 %v122
    %1026 = vmatpush1.msra.mxu0 %v121
    %1027 = vmatprep.subr.mxu0 %v118
    %1028 = vmatpush1.msra.mxu0 %v117
    %1029 = vmatprep.subr.mxu0 %v114
    %1030 = vmatpush1.msra.mxu0 %v113
    %1031 = vmatprep.subr.mxu0 %v110
    %1032 = vmatpush1.msra.mxu0 %v109
    %1033 = vmatprep.subr.mxu0 %v106
    %1034 = vmatpush1.msra.mxu0 %v105
    %1035 = vmatprep.subr.mxu0 %v102
    %1036 = vmatpush1.msra.mxu0 %v101
    %1037 = vmatprep.subr.mxu0 %v98
    %1038 = vmatpush1.msra.mxu0 %v97
    %1039 = vmatprep.subr.mxu0 %v94
    %1040 = vmatpush1.msra.mxu0 %v93
    %1041 = vmatprep.subr.mxu0 %v90
    %1042 = vmatpush1.msra.mxu0 %v89
    %1043 = vmatprep.subr.mxu0 %v86
    %1044 = vmatpush1.msra.mxu0 %v85
    %1045 = vmatprep.subr.mxu0 %v82
    %1046 = vmatpush1.msra.mxu0 %v81
    %1047 = vmatprep.subr.mxu0 0.0
    %1048 = vmatpush2.msra.mxu0 0.0
    %1049 = vmatprep.subr.mxu0 0.0
    %1050 = vmatpush2.msra.mxu0 0.0
    %1051 = vmatprep.subr.mxu0 0.0
    %1052 = vmatpush2.msra.mxu0 0.0
    %1053 = vmatprep.subr.mxu0 0.0
    %1054 = vmatpush2.msra.mxu0 0.0
    %1055 = vmatprep.subr.mxu0 0.0
    %1056 = vmatpush2.msra.mxu0 0.0
    %1057 = vmatprep.subr.mxu0 0.0
    %1058 = vmatpush2.msra.mxu0 0.0
    %1059 = vmatprep.subr.mxu0 0.0
    %1060 = vmatpush2.msra.mxu0 0.0
    %1061 = vmatprep.subr.mxu0 0.0
    %1062 = vmatpush2.msra.mxu0 0.0
    %1063 = vmatprep.subr.mxu0 0.0
    %1064 = vmatpush2.msra.mxu0 0.0
    %1065 = vmatprep.subr.mxu0 0.0
    %1066 = vmatpush2.msra.mxu0 0.0
    %1067 = vmatprep.subr.mxu0 0.0
    %1068 = vmatpush2.msra.mxu0 0.0
    %1069 = vmatprep.subr.mxu0 0.0
    %1070 = vmatpush2.msra.mxu0 0.0
    %1071 = vmatprep.subr.mxu0 0.0
    %1072 = vmatpush2.msra.mxu0 0.0
    %1073 = vmatprep.subr.mxu0 0.0
    %1074 = vmatpush2.msra.mxu0 0.0
    %1075 = vmatprep.subr.mxu0 0.0
    %1076 = vmatpush2.msra.mxu0 0.0
    %1077 = vmatprep.subr.mxu0 0.0
    %1078 = vmatpush2.msra.mxu0 0.0
    %1079 = vmatprep.mubr.f32.mxu0 0.0
    %1080 = vmatmul.mubr.f32.gmra.mxu0 %v1007
    %v1081 = vpop.f32.mrf.mxu0
    %v1082 = vadd.f32 %v1011, %v1081
    %v1083 = vpop.f32.mrf.mxu0
    %v1084 = vadd.f32 %v1012, %v1083
    %1085 = vdwg.mxu0
    %1086 = vmatprep.subr.mxu0 %v144
    %1087 = vmatpush1.msra.mxu0 %v143
    %1088 = vmatprep.subr.mxu0 %v140
    %1089 = vmatpush1.msra.mxu0 %v139
    %1090 = vmatprep.subr.mxu0 %v136
    %1091 = vmatpush1.msra.mxu0 %v135
    %1092 = vmatprep.subr.mxu0 %v132
    %1093 = vmatpush1.msra.mxu0 %v131
    %1094 = vmatprep.subr.mxu0 %v128
    %1095 = vmatpush1.msra.mxu0 %v127
    %1096 = vmatprep.subr.mxu0 %v124
    %1097 = vmatpush1.msra.mxu0 %v123
    %1098 = vmatprep.subr.mxu0 %v120
    %1099 = vmatpush1.msra.mxu0 %v119
    %1100 = vmatprep.subr.mxu0 %v116
    %1101 = vmatpush1.msra.mxu0 %v115
    %1102 = vmatprep.subr.mxu0 %v112
    %1103 = vmatpush1.msra.mxu0 %v111
    %1104 = vmatprep.subr.mxu0 %v108
    %1105 = vmatpush1.msra.mxu0 %v107
    %1106 = vmatprep.subr.mxu0 %v104
    %1107 = vmatpush1.msra.mxu0 %v103
    %1108 = vmatprep.subr.mxu0 %v100
    %1109 = vmatpush1.msra.mxu0 %v99
    %1110 = vmatprep.subr.mxu0 %v96
    %1111 = vmatpush1.msra.mxu0 %v95
    %1112 = vmatprep.subr.mxu0 %v92
    %1113 = vmatpush1.msra.mxu0 %v91
    %1114 = vmatprep.subr.mxu0 %v88
    %1115 = vmatpush1.msra.mxu0 %v87
    %1116 = vmatprep.subr.mxu0 %v84
    %1117 = vmatpush1.msra.mxu0 %v83
    %1118 = vmatprep.subr.mxu0 0.0
    %1119 = vmatpush2.msra.mxu0 0.0
    %1120 = vmatprep.subr.mxu0 0.0
    %1121 = vmatpush2.msra.mxu0 0.0
    %1122 = vmatprep.subr.mxu0 0.0
    %1123 = vmatpush2.msra.mxu0 0.0
    %1124 = vmatprep.subr.mxu0 0.0
    %1125 = vmatpush2.msra.mxu0 0.0
    %1126 = vmatprep.subr.mxu0 0.0
    %1127 = vmatpush2.msra.mxu0 0.0
    %1128 = vmatprep.subr.mxu0 0.0
    %1129 = vmatpush2.msra.mxu0 0.0
    %1130 = vmatprep.subr.mxu0 0.0
    %1131 = vmatpush2.msra.mxu0 0.0
    %1132 = vmatprep.subr.mxu0 0.0
    %1133 = vmatpush2.msra.mxu0 0.0
    %1134 = vmatprep.subr.mxu0 0.0
    %1135 = vmatpush2.msra.mxu0 0.0
    %1136 = vmatprep.subr.mxu0 0.0
    %1137 = vmatpush2.msra.mxu0 0.0
    %1138 = vmatprep.subr.mxu0 0.0
    %1139 = vmatpush2.msra.mxu0 0.0
    %1140 = vmatprep.subr.mxu0 0.0
    %1141 = vmatpush2.msra.mxu0 0.0
    %1142 = vmatprep.subr.mxu0 0.0
    %1143 = vmatpush2.msra.mxu0 0.0
    %1144 = vmatprep.subr.mxu0 0.0
    %1145 = vmatpush2.msra.mxu0 0.0
    %1146 = vmatprep.subr.mxu0 0.0
    %1147 = vmatpush2.msra.mxu0 0.0
    %1148 = vmatprep.subr.mxu0 0.0
    %1149 = vmatpush2.msra.mxu0 0.0
    %1150 = vmatprep.mubr.f32.mxu0 0.0
    %1151 = vmatmul.mubr.f32.gmra.mxu0 %v1007
    %v1152 = vpop.f32.mrf.mxu0
    %v1153 = vadd.f32 %v1013, %v1152
    %v1154 = vpop.f32.mrf.mxu0
    %v1155 = vadd.f32 %v1014, %v1154
    %1156 = vdwg.mxu0
    %v1157 = vxor.u32 %v1082, 2147483648
    %v1158 = vmul.f32 %v1157, 1.442695
    %v1159 = vpow.pop %v1158
    %v1160 = vadd.f32 %v1159, 1.0
    %v1161 = vrcp.pop %v1160
    %v1162 = vmul.f32 1.0, %v1161
    %v1163 = vxor.u32 %v1084, 2147483648
    %v1164 = vmul.f32 %v1163, 1.442695
    %v1165 = vpow.pop %v1164
    %v1166 = vadd.f32 %v1165, 1.0
    %v1167 = vrcp.pop %v1166
    %v1168 = vmul.f32 1.0, %v1167
    %v1169 = vtanh.pop %v1153
    %v1170 = vxor.u32 %v1155, 2147483648
    %v1171 = vmul.f32 %v1170, 1.442695
    %v1172 = vpow.pop %v1171
    %v1173 = vadd.f32 %v1172, 1.0
    %v1174 = vrcp.pop %v1173
    %v1175 = vmul.f32 1.0, %v1174
    %v1176 = vmul.f32 %v1168, %v1005
    %v1177 = vmul.f32 %v1162, %v1169
    %v1178 = vadd.f32 %v1176, %v1177
    %v1179 = vtanh.pop %v1178
    %v1180 = vmul.f32 %v1175, %v1179
    %s1181 = scalar_lea.vmem [#allocation12], 40
    %1182 = vst [vmem:[%s1181] sm:$0xff] %v1180
    %s1183 = scalar_lea.vmem [#allocation4], 192
    %v1184 = vld [vmem:[%s1183] sm:$0xff]
    %v1185 = vld [vmem:[%s1183 + $0x8] sm:$0xff]
    %v1186 = vld [vmem:[%s1183 + $0x10] sm:$0xff]
    %v1187 = vld [vmem:[%s1183 + $0x18] sm:$0xff]
    %1188 = vmatprep.subr.mxu0 %v142
    %1189 = vmatpush1.msra.mxu0 %v141
    %1190 = vmatprep.subr.mxu0 %v138
    %1191 = vmatpush1.msra.mxu0 %v137
    %1192 = vmatprep.subr.mxu0 %v134
    %1193 = vmatpush1.msra.mxu0 %v133
    %1194 = vmatprep.subr.mxu0 %v130
    %1195 = vmatpush1.msra.mxu0 %v129
    %1196 = vmatprep.subr.mxu0 %v126
    %1197 = vmatpush1.msra.mxu0 %v125
    %1198 = vmatprep.subr.mxu0 %v122
    %1199 = vmatpush1.msra.mxu0 %v121
    %1200 = vmatprep.subr.mxu0 %v118
    %1201 = vmatpush1.msra.mxu0 %v117
    %1202 = vmatprep.subr.mxu0 %v114
    %1203 = vmatpush1.msra.mxu0 %v113
    %1204 = vmatprep.subr.mxu0 %v110
    %1205 = vmatpush1.msra.mxu0 %v109
    %1206 = vmatprep.subr.mxu0 %v106
    %1207 = vmatpush1.msra.mxu0 %v105
    %1208 = vmatprep.subr.mxu0 %v102
    %1209 = vmatpush1.msra.mxu0 %v101
    %1210 = vmatprep.subr.mxu0 %v98
    %1211 = vmatpush1.msra.mxu0 %v97
    %1212 = vmatprep.subr.mxu0 %v94
    %1213 = vmatpush1.msra.mxu0 %v93
    %1214 = vmatprep.subr.mxu0 %v90
    %1215 = vmatpush1.msra.mxu0 %v89
    %1216 = vmatprep.subr.mxu0 %v86
    %1217 = vmatpush1.msra.mxu0 %v85
    %1218 = vmatprep.subr.mxu0 %v82
    %1219 = vmatpush1.msra.mxu0 %v81
    %1220 = vmatprep.subr.mxu0 0.0
    %1221 = vmatpush2.msra.mxu0 0.0
    %1222 = vmatprep.subr.mxu0 0.0
    %1223 = vmatpush2.msra.mxu0 0.0
    %1224 = vmatprep.subr.mxu0 0.0
    %1225 = vmatpush2.msra.mxu0 0.0
    %1226 = vmatprep.subr.mxu0 0.0
    %1227 = vmatpush2.msra.mxu0 0.0
    %1228 = vmatprep.subr.mxu0 0.0
    %1229 = vmatpush2.msra.mxu0 0.0
    %1230 = vmatprep.subr.mxu0 0.0
    %1231 = vmatpush2.msra.mxu0 0.0
    %1232 = vmatprep.subr.mxu0 0.0
    %1233 = vmatpush2.msra.mxu0 0.0
    %1234 = vmatprep.subr.mxu0 0.0
    %1235 = vmatpush2.msra.mxu0 0.0
    %1236 = vmatprep.subr.mxu0 0.0
    %1237 = vmatpush2.msra.mxu0 0.0
    %1238 = vmatprep.subr.mxu0 0.0
    %1239 = vmatpush2.msra.mxu0 0.0
    %1240 = vmatprep.subr.mxu0 0.0
    %1241 = vmatpush2.msra.mxu0 0.0
    %1242 = vmatprep.subr.mxu0 0.0
    %1243 = vmatpush2.msra.mxu0 0.0
    %1244 = vmatprep.subr.mxu0 0.0
    %1245 = vmatpush2.msra.mxu0 0.0
    %1246 = vmatprep.subr.mxu0 0.0
    %1247 = vmatpush2.msra.mxu0 0.0
    %1248 = vmatprep.subr.mxu0 0.0
    %1249 = vmatpush2.msra.mxu0 0.0
    %1250 = vmatprep.subr.mxu0 0.0
    %1251 = vmatpush2.msra.mxu0 0.0
    %1252 = vmatprep.mubr.f32.mxu0 0.0
    %1253 = vmatmul.mubr.f32.gmra.mxu0 %v1180
    %v1254 = vpop.f32.mrf.mxu0
    %v1255 = vadd.f32 %v1184, %v1254
    %v1256 = vpop.f32.mrf.mxu0
    %v1257 = vadd.f32 %v1185, %v1256
    %1258 = vdwg.mxu0
    %1259 = vmatprep.subr.mxu0 %v144
    %1260 = vmatpush1.msra.mxu0 %v143
    %1261 = vmatprep.subr.mxu0 %v140
    %1262 = vmatpush1.msra.mxu0 %v139
    %1263 = vmatprep.subr.mxu0 %v136
    %1264 = vmatpush1.msra.mxu0 %v135
    %1265 = vmatprep.subr.mxu0 %v132
    %1266 = vmatpush1.msra.mxu0 %v131
    %1267 = vmatprep.subr.mxu0 %v128
    %1268 = vmatpush1.msra.mxu0 %v127
    %1269 = vmatprep.subr.mxu0 %v124
    %1270 = vmatpush1.msra.mxu0 %v123
    %1271 = vmatprep.subr.mxu0 %v120
    %1272 = vmatpush1.msra.mxu0 %v119
    %1273 = vmatprep.subr.mxu0 %v116
    %1274 = vmatpush1.msra.mxu0 %v115
    %1275 = vmatprep.subr.mxu0 %v112
    %1276 = vmatpush1.msra.mxu0 %v111
    %1277 = vmatprep.subr.mxu0 %v108
    %1278 = vmatpush1.msra.mxu0 %v107
    %1279 = vmatprep.subr.mxu0 %v104
    %1280 = vmatpush1.msra.mxu0 %v103
    %1281 = vmatprep.subr.mxu0 %v100
    %1282 = vmatpush1.msra.mxu0 %v99
    %1283 = vmatprep.subr.mxu0 %v96
    %1284 = vmatpush1.msra.mxu0 %v95
    %1285 = vmatprep.subr.mxu0 %v92
    %1286 = vmatpush1.msra.mxu0 %v91
    %1287 = vmatprep.subr.mxu0 %v88
    %1288 = vmatpush1.msra.mxu0 %v87
    %1289 = vmatprep.subr.mxu0 %v84
    %1290 = vmatpush1.msra.mxu0 %v83
    %1291 = vmatprep.subr.mxu0 0.0
    %1292 = vmatpush2.msra.mxu0 0.0
    %1293 = vmatprep.subr.mxu0 0.0
    %1294 = vmatpush2.msra.mxu0 0.0
    %1295 = vmatprep.subr.mxu0 0.0
    %1296 = vmatpush2.msra.mxu0 0.0
    %1297 = vmatprep.subr.mxu0 0.0
    %1298 = vmatpush2.msra.mxu0 0.0
    %1299 = vmatprep.subr.mxu0 0.0
    %1300 = vmatpush2.msra.mxu0 0.0
    %1301 = vmatprep.subr.mxu0 0.0
    %1302 = vmatpush2.msra.mxu0 0.0
    %1303 = vmatprep.subr.mxu0 0.0
    %1304 = vmatpush2.msra.mxu0 0.0
    %1305 = vmatprep.subr.mxu0 0.0
    %1306 = vmatpush2.msra.mxu0 0.0
    %1307 = vmatprep.subr.mxu0 0.0
    %1308 = vmatpush2.msra.mxu0 0.0
    %1309 = vmatprep.subr.mxu0 0.0
    %1310 = vmatpush2.msra.mxu0 0.0
    %1311 = vmatprep.subr.mxu0 0.0
    %1312 = vmatpush2.msra.mxu0 0.0
    %1313 = vmatprep.subr.mxu0 0.0
    %1314 = vmatpush2.msra.mxu0 0.0
    %1315 = vmatprep.subr.mxu0 0.0
    %1316 = vmatpush2.msra.mxu0 0.0
    %1317 = vmatprep.subr.mxu0 0.0
    %1318 = vmatpush2.msra.mxu0 0.0
    %1319 = vmatprep.subr.mxu0 0.0
    %1320 = vmatpush2.msra.mxu0 0.0
    %1321 = vmatprep.subr.mxu0 0.0
    %1322 = vmatpush2.msra.mxu0 0.0
    %1323 = vmatprep.mubr.f32.mxu0 0.0
    %1324 = vmatmul.mubr.f32.gmra.mxu0 %v1180
    %v1325 = vpop.f32.mrf.mxu0
    %v1326 = vadd.f32 %v1186, %v1325
    %v1327 = vpop.f32.mrf.mxu0
    %v1328 = vadd.f32 %v1187, %v1327
    %1329 = vdwg.mxu0
    %v1330 = vxor.u32 %v1255, 2147483648
    %v1331 = vmul.f32 %v1330, 1.442695
    %v1332 = vpow.pop %v1331
    %v1333 = vadd.f32 %v1332, 1.0
    %v1334 = vrcp.pop %v1333
    %v1335 = vmul.f32 1.0, %v1334
    %v1336 = vxor.u32 %v1257, 2147483648
    %v1337 = vmul.f32 %v1336, 1.442695
    %v1338 = vpow.pop %v1337
    %v1339 = vadd.f32 %v1338, 1.0
    %v1340 = vrcp.pop %v1339
    %v1341 = vmul.f32 1.0, %v1340
    %v1342 = vtanh.pop %v1326
    %v1343 = vxor.u32 %v1328, 2147483648
    %v1344 = vmul.f32 %v1343, 1.442695
    %v1345 = vpow.pop %v1344
    %v1346 = vadd.f32 %v1345, 1.0
    %v1347 = vrcp.pop %v1346
    %v1348 = vmul.f32 1.0, %v1347
    %v1349 = vmul.f32 %v1341, %v1178
    %v1350 = vmul.f32 %v1335, %v1342
    %v1351 = vadd.f32 %v1349, %v1350
    %v1352 = vtanh.pop %v1351
    %v1353 = vmul.f32 %v1348, %v1352
    %s1354 = scalar_lea.vmem [#allocation12], 48
    %1355 = vst [vmem:[%s1354] sm:$0xff] %v1353
    %s1356 = scalar_lea.vmem [#allocation4], 224
    %v1357 = vld [vmem:[%s1356] sm:$0xff]
    %v1358 = vld [vmem:[%s1356 + $0x8] sm:$0xff]
    %v1359 = vld [vmem:[%s1356 + $0x10] sm:$0xff]
    %v1360 = vld [vmem:[%s1356 + $0x18] sm:$0xff]
    %1361 = vmatprep.subr.mxu0 %v142
    %1362 = vmatpush1.msra.mxu0 %v141
    %1363 = vmatprep.subr.mxu0 %v138
    %1364 = vmatpush1.msra.mxu0 %v137
    %1365 = vmatprep.subr.mxu0 %v134
    %1366 = vmatpush1.msra.mxu0 %v133
    %1367 = vmatprep.subr.mxu0 %v130
    %1368 = vmatpush1.msra.mxu0 %v129
    %1369 = vmatprep.subr.mxu0 %v126
    %1370 = vmatpush1.msra.mxu0 %v125
    %1371 = vmatprep.subr.mxu0 %v122
    %1372 = vmatpush1.msra.mxu0 %v121
    %1373 = vmatprep.subr.mxu0 %v118
    %1374 = vmatpush1.msra.mxu0 %v117
    %1375 = vmatprep.subr.mxu0 %v114
    %1376 = vmatpush1.msra.mxu0 %v113
    %1377 = vmatprep.subr.mxu0 %v110
    %1378 = vmatpush1.msra.mxu0 %v109
    %1379 = vmatprep.subr.mxu0 %v106
    %1380 = vmatpush1.msra.mxu0 %v105
    %1381 = vmatprep.subr.mxu0 %v102
    %1382 = vmatpush1.msra.mxu0 %v101
    %1383 = vmatprep.subr.mxu0 %v98
    %1384 = vmatpush1.msra.mxu0 %v97
    %1385 = vmatprep.subr.mxu0 %v94
    %1386 = vmatpush1.msra.mxu0 %v93
    %1387 = vmatprep.subr.mxu0 %v90
    %1388 = vmatpush1.msra.mxu0 %v89
    %1389 = vmatprep.subr.mxu0 %v86
    %1390 = vmatpush1.msra.mxu0 %v85
    %1391 = vmatprep.subr.mxu0 %v82
    %1392 = vmatpush1.msra.mxu0 %v81
    %1393 = vmatprep.subr.mxu0 0.0
    %1394 = vmatpush2.msra.mxu0 0.0
    %1395 = vmatprep.subr.mxu0 0.0
    %1396 = vmatpush2.msra.mxu0 0.0
    %1397 = vmatprep.subr.mxu0 0.0
    %1398 = vmatpush2.msra.mxu0 0.0
    %1399 = vmatprep.subr.mxu0 0.0
    %1400 = vmatpush2.msra.mxu0 0.0
    %1401 = vmatprep.subr.mxu0 0.0
    %1402 = vmatpush2.msra.mxu0 0.0
    %1403 = vmatprep.subr.mxu0 0.0
    %1404 = vmatpush2.msra.mxu0 0.0
    %1405 = vmatprep.subr.mxu0 0.0
    %1406 = vmatpush2.msra.mxu0 0.0
    %1407 = vmatprep.subr.mxu0 0.0
    %1408 = vmatpush2.msra.mxu0 0.0
    %1409 = vmatprep.subr.mxu0 0.0
    %1410 = vmatpush2.msra.mxu0 0.0
    %1411 = vmatprep.subr.mxu0 0.0
    %1412 = vmatpush2.msra.mxu0 0.0
    %1413 = vmatprep.subr.mxu0 0.0
    %1414 = vmatpush2.msra.mxu0 0.0
    %1415 = vmatprep.subr.mxu0 0.0
    %1416 = vmatpush2.msra.mxu0 0.0
    %1417 = vmatprep.subr.mxu0 0.0
    %1418 = vmatpush2.msra.mxu0 0.0
    %1419 = vmatprep.subr.mxu0 0.0
    %1420 = vmatpush2.msra.mxu0 0.0
    %1421 = vmatprep.subr.mxu0 0.0
    %1422 = vmatpush2.msra.mxu0 0.0
    %1423 = vmatprep.subr.mxu0 0.0
    %1424 = vmatpush2.msra.mxu0 0.0
    %1425 = vmatprep.mubr.f32.mxu0 0.0
    %1426 = vmatmul.mubr.f32.gmra.mxu0 %v1353
    %v1427 = vpop.f32.mrf.mxu0
    %v1428 = vadd.f32 %v1357, %v1427
    %v1429 = vpop.f32.mrf.mxu0
    %v1430 = vadd.f32 %v1358, %v1429
    %1431 = vdwg.mxu0
    %1432 = vmatprep.subr.mxu0 %v144
    %1433 = vmatpush1.msra.mxu0 %v143
    %1434 = vmatprep.subr.mxu0 %v140
    %1435 = vmatpush1.msra.mxu0 %v139
    %1436 = vmatprep.subr.mxu0 %v136
    %1437 = vmatpush1.msra.mxu0 %v135
    %1438 = vmatprep.subr.mxu0 %v132
    %1439 = vmatpush1.msra.mxu0 %v131
    %1440 = vmatprep.subr.mxu0 %v128
    %1441 = vmatpush1.msra.mxu0 %v127
    %1442 = vmatprep.subr.mxu0 %v124
    %1443 = vmatpush1.msra.mxu0 %v123
    %1444 = vmatprep.subr.mxu0 %v120
    %1445 = vmatpush1.msra.mxu0 %v119
    %1446 = vmatprep.subr.mxu0 %v116
    %1447 = vmatpush1.msra.mxu0 %v115
    %1448 = vmatprep.subr.mxu0 %v112
    %1449 = vmatpush1.msra.mxu0 %v111
    %1450 = vmatprep.subr.mxu0 %v108
    %1451 = vmatpush1.msra.mxu0 %v107
    %1452 = vmatprep.subr.mxu0 %v104
    %1453 = vmatpush1.msra.mxu0 %v103
    %1454 = vmatprep.subr.mxu0 %v100
    %1455 = vmatpush1.msra.mxu0 %v99
    %1456 = vmatprep.subr.mxu0 %v96
    %1457 = vmatpush1.msra.mxu0 %v95
    %1458 = vmatprep.subr.mxu0 %v92
    %1459 = vmatpush1.msra.mxu0 %v91
    %1460 = vmatprep.subr.mxu0 %v88
    %1461 = vmatpush1.msra.mxu0 %v87
    %1462 = vmatprep.subr.mxu0 %v84
    %1463 = vmatpush1.msra.mxu0 %v83
    %1464 = vmatprep.subr.mxu0 0.0
    %1465 = vmatpush2.msra.mxu0 0.0
    %1466 = vmatprep.subr.mxu0 0.0
    %1467 = vmatpush2.msra.mxu0 0.0
    %1468 = vmatprep.subr.mxu0 0.0
    %1469 = vmatpush2.msra.mxu0 0.0
    %1470 = vmatprep.subr.mxu0 0.0
    %1471 = vmatpush2.msra.mxu0 0.0
    %1472 = vmatprep.subr.mxu0 0.0
    %1473 = vmatpush2.msra.mxu0 0.0
    %1474 = vmatprep.subr.mxu0 0.0
    %1475 = vmatpush2.msra.mxu0 0.0
    %1476 = vmatprep.subr.mxu0 0.0
    %1477 = vmatpush2.msra.mxu0 0.0
    %1478 = vmatprep.subr.mxu0 0.0
    %1479 = vmatpush2.msra.mxu0 0.0
    %1480 = vmatprep.subr.mxu0 0.0
    %1481 = vmatpush2.msra.mxu0 0.0
    %1482 = vmatprep.subr.mxu0 0.0
    %1483 = vmatpush2.msra.mxu0 0.0
    %1484 = vmatprep.subr.mxu0 0.0
    %1485 = vmatpush2.msra.mxu0 0.0
    %1486 = vmatprep.subr.mxu0 0.0
    %1487 = vmatpush2.msra.mxu0 0.0
    %1488 = vmatprep.subr.mxu0 0.0
    %1489 = vmatpush2.msra.mxu0 0.0
    %1490 = vmatprep.subr.mxu0 0.0
    %1491 = vmatpush2.msra.mxu0 0.0
    %1492 = vmatprep.subr.mxu0 0.0
    %1493 = vmatpush2.msra.mxu0 0.0
    %1494 = vmatprep.subr.mxu0 0.0
    %1495 = vmatpush2.msra.mxu0 0.0
    %1496 = vmatprep.mubr.f32.mxu0 0.0
    %1497 = vmatmul.mubr.f32.gmra.mxu0 %v1353
    %v1498 = vpop.f32.mrf.mxu0
    %v1499 = vadd.f32 %v1359, %v1498
    %v1500 = vpop.f32.mrf.mxu0
    %v1501 = vadd.f32 %v1360, %v1500
    %1502 = vdwg.mxu0
    %v1503 = vxor.u32 %v1428, 2147483648
    %v1504 = vmul.f32 %v1503, 1.442695
    %v1505 = vpow.pop %v1504
    %v1506 = vadd.f32 %v1505, 1.0
    %v1507 = vrcp.pop %v1506
    %v1508 = vmul.f32 1.0, %v1507
    %v1509 = vxor.u32 %v1430, 2147483648
    %v1510 = vmul.f32 %v1509, 1.442695
    %v1511 = vpow.pop %v1510
    %v1512 = vadd.f32 %v1511, 1.0
    %v1513 = vrcp.pop %v1512
    %v1514 = vmul.f32 1.0, %v1513
    %v1515 = vtanh.pop %v1499
    %v1516 = vxor.u32 %v1501, 2147483648
    %v1517 = vmul.f32 %v1516, 1.442695
    %v1518 = vpow.pop %v1517
    %v1519 = vadd.f32 %v1518, 1.0
    %v1520 = vrcp.pop %v1519
    %v1521 = vmul.f32 1.0, %v1520
    %v1522 = vmul.f32 %v1514, %v1351
    %v1523 = vmul.f32 %v1508, %v1515
    %v1524 = vadd.f32 %v1522, %v1523
    %v1525 = vtanh.pop %v1524
    %v1526 = vmul.f32 %v1521, %v1525
    %s1527 = scalar_lea.vmem [#allocation12], 56
    %1528 = vst [vmem:[%s1527] sm:$0xff] %v1526
    %1529 = vst [vmem:[#allocation2] sm:$0xff] %v1526
    %1530 = vst [vmem:[#allocation3] sm:$0xff] %v1524
    // Predicated region
    $region38: #{tpu_custom_call.1} parent=1 // pred_check
      %p1531 = pneg %p73
    $region39: #{tpu_custom_call.1} parent=1 // pred_check_branch
      %1533 = sbr.rel (%p1531) target = $region41
    $region40: #{tpu_custom_call.1} parent=1 // pred_region
      %1534 = vst [vmem:[#allocation13] sm:$0xff] %v1526
      %1535 = vst [vmem:[#allocation15] sm:$0xff] %v1524
    $region41: #{tpu_custom_call.1} parent=1 // pred_fallthru
      _
    // Predicated region
    $region42: #{tpu_custom_call.1} parent=1 // pred_check
      _
    $region43: #{tpu_custom_call.1} parent=1 // pred_check_branch
      %1537 = sbr.rel (0) target = $region45
    $region44: #{tpu_custom_call.1} parent=1 // pred_region
      %s1539 = ssub.s32 1024, 1024
      %1540 = vsyncadd [#allocation6], %s1539
      %s1541 = sshll.u32 [#allocation12], 4
      %s1542 = int_to_ptr.vmem [resolvable:$true] %s1541
      %1547 = dma.vmem_to_hbm [thread:$0]  %s1542, 1024, %s4, [#allocation6], 128, 128, 8
    $region45: #{tpu_custom_call.1} parent=1 // pred_fallthru
      _
    // Predicated region
    $region46: #{tpu_custom_call.1} parent=1 // pred_check
      _
    $region47: #{tpu_custom_call.1} parent=1 // pred_check_branch
      %1549 = sbr.rel (0) target = $region49
    $region48: #{tpu_custom_call.1} parent=1 // pred_region
      %s1551 = ssub.s32 128, 128
      %1552 = vsyncadd [#allocation14], %s1551
      %s1554 = sshll.u32 [#allocation13], 4
      %s1555 = int_to_ptr.vmem [resolvable:$true] %s1554
      %1557 = dma.vmem_to_hbm [thread:$0]  %s1555, 128, %s5, [#allocation14]
    $region49: #{tpu_custom_call.1} parent=1 // pred_fallthru
      _
    // Predicated region
    $region50: #{tpu_custom_call.1} parent=1 // pred_check
      _
    $region51: #{tpu_custom_call.1} parent=1 // pred_check_branch
      %1559 = sbr.rel (0) target = $region53
    $region52: #{tpu_custom_call.1} parent=1 // pred_region
      %s1561 = ssub.s32 128, 128
      %1562 = vsyncadd [#allocation14], %s1561
      %s1564 = sshll.u32 [#allocation15], 4
      %s1565 = int_to_ptr.vmem [resolvable:$true] %s1564
      %1567 = dma.vmem_to_hbm [thread:$0]  %s1565, 128, %s6, [#allocation14]
    $region53: #{tpu_custom_call.1} parent=1 // pred_fallthru
      _
    // Predicated region
    $region54: #{tpu_custom_call.1} parent=1 // pred_check
      _
    $region55: #{tpu_custom_call.1} parent=1 // pred_check_branch
      %1569 = sbr.rel (0) target = $region57
    $region56: #{tpu_custom_call.1} parent=1 // pred_region
      %1570 = dma.done [#allocation6], 1024
    $region57: #{tpu_custom_call.1} parent=1 // pred_fallthru
      _
    // Predicated region
    $region58: #{tpu_custom_call.1} parent=1 // pred_check
      _
    $region59: #{tpu_custom_call.1} parent=1 // pred_check_branch
      %1572 = sbr.rel (0) target = $region61
    $region60: #{tpu_custom_call.1} parent=1 // pred_region
      %1573 = dma.done [#allocation14], 128
    $region61: #{tpu_custom_call.1} parent=1 // pred_fallthru
      _
    // Predicated region
    $region62: #{tpu_custom_call.1} parent=1 // pred_check
      _
    $region63: #{tpu_custom_call.1} parent=1 // pred_check_branch
      %1575 = sbr.rel (0) target = $region65
    $region64: #{tpu_custom_call.1} parent=1 // pred_region
      %1576 = dma.done [#allocation14], 128
    $region65: #{tpu_custom_call.1} parent=1 // pred_fallthru
      _
    %1577 = vsyncpa [#allocation5], 1
    %1578 = vsyncpa [#allocation8], 1
    %1579 = vsyncpa [#allocation11], 1
    %1580 = vsyncpa [#allocation6], 1
    %1581 = vsyncpa [#allocation14], 1

</llo_original>
